<compile_context>
chip_gen: v7x
topology: tpu7x:2x2x1
jax: 0.10.0
libtpu: 0.0.40
codegen_flags: <defaults>
</compile_context>

<pallas_src>
import jax
import jax.numpy as jnp
from jax.experimental import pallas as pl
from jax.experimental.pallas import tpu as pltpu

DIMS = [1024, 512, 256, 64, 256, 512, 1024]          # fc1..fc6 in/out chain
_N_LAYERS = 6
_PARAM_FLOPS = 2 * sum(DIMS[i] * DIMS[i + 1] for i in range(_N_LAYERS))
_WEIGHT_BYTES_BF16 = sum(DIMS[i] * DIMS[i + 1] for i in range(_N_LAYERS)) * 2


# ----------------------------------------------------------------------------
# Per-generation configuration
# ----------------------------------------------------------------------------
def _tpu_config():
    kind = ""
    try:
        kind = (getattr(jax.devices()[0], "device_kind", "") or "").lower()
    except Exception:
        pass
    is_v7 = "v7" in kind
    is_v6 = "v6" in kind
    if is_v7:
        # 64 MiB VMEM per TC, 2 TCs share the parallel grid axis.
        return dict(tile_candidates=(512, 256, 128), prefer_even_steps=True,
                    vmem_cap=40 << 20, epilogue_dtype=jnp.bfloat16)
    if is_v6:
        # 128 MiB VMEM, bf16-native VPU -> larger tiles + bf16 epilogue.
        return dict(tile_candidates=(1024, 512, 256, 128), prefer_even_steps=False,
                    vmem_cap=64 << 20, epilogue_dtype=jnp.bfloat16)
    # v5e / v5p / v4 / unknown: 128 MiB VMEM, no bf16 VPU -> f32 epilogue.
    return dict(tile_candidates=(1024, 512, 256, 128), prefer_even_steps=False,
                vmem_cap=64 << 20, epilogue_dtype=jnp.float32)


def _auto_batch_tile(B, candidates, prefer_even_steps):
    def pick(require_even):
        for tb in candidates:
            if B % tb == 0:
                steps = B // tb
                if steps >= 2 and (not require_even or steps % 2 == 0):
                    return tb
        return None
    tb = pick(prefer_even_steps)
    if tb is None:
        tb = pick(False)
    return tb if tb is not None else B


def _vmem_limit_bytes(tb, ep_bytes, vmem_cap):
    # Explicit scoped-VMEM budget from the actual live set (not 3*sum(DIMS)).
    biases = sum(DIMS[1:_N_LAYERS]) * ep_bytes + DIMS[-1] * 4
    io = 2 * (tb * DIMS[0] * 4) * 2                    # x + out, double-buffered f32
    live = (tb * DIMS[0] * (4 + 2)                     # x0 f32 + x0 bf16
            + tb * DIMS[1] * max(ep_bytes, 2)          # resident skip (relu(fc1))
            + tb * DIMS[0] * 4                         # f32 accumulator / fc6 epilogue
            + tb * DIMS[0] * 2)                        # widest bf16 intermediate
    budget = _WEIGHT_BYTES_BF16 + biases + io + live
    return int(min(max(int(budget * 1.5), 32 << 20), vmem_cap))


# ----------------------------------------------------------------------------
# Kernel
# ----------------------------------------------------------------------------
def _make_mlp_kernel(epilogue_dtype, half_rows):
    """half_rows=None -> one chain per tile; int -> two independent half-tile chains."""
    ep = epilogue_dtype
    bf16 = jnp.bfloat16

    def chain(x0, w_refs, b_refs):
        w1, w2, w3, w4, w5, w6 = w_refs
        b1, b2, b3, b4, b5, b6 = b_refs

        def lin(h_bf, w_ref, b_ref):
            # bf16 matmul inputs, f32 MXU accumulation, epilogue in `ep`.
            acc = jnp.dot(h_bf, w_ref[...], preferred_element_type=jnp.float32)
            return acc.astype(ep) + b_ref[...]

        def relu_bf(v):
            return jnp.maximum(v, 0).astype(bf16)

        x0_bf = x0.astype(bf16)
        h1 = relu_bf(lin(x0_bf, w1, b1))                 # relu(fc1)  -> skip source
        h = relu_bf(lin(h1, w2, b2))                     # relu(fc2)
        # `x_residual1 = x + x_residual1` in PyTorch is dead code -> omitted.
        h = relu_bf(lin(h, w3, b3))                      # relu(fc3)
        h = relu_bf(lin(h, w4, b4))                      # relu(fc4)
        h = relu_bf(lin(h, w5, b5))                      # relu(fc5)
        h = (h.astype(ep) + h1.astype(ep)).astype(bf16)  # x = x + x_residual
        acc6 = jnp.dot(h, w6[...], preferred_element_type=jnp.float32)
        return acc6 + b6[...] + x0                       # fc6 + b6 + x1  (all f32)

    def kernel(x_ref,
               w1, b1, w2, b2, w3, b3, w4, b4, w5, b5, w6, b6,
               o_ref):
        w_refs = (w1, w2, w3, w4, w5, w6)
        b_refs = (b1, b2, b3, b4, b5, b6)
        if half_rows is None:
            o_ref[...] = chain(x_ref[...], w_refs, b_refs).astype(o_ref.dtype)
        else:
            # Two independent dependency chains: MXU pushes of one half overlap
            # the bias/ReLU/cast VPU epilogue of the other half.
            o_ref[:half_rows, :] = chain(
                x_ref[:half_rows, :], w_refs, b_refs).astype(o_ref.dtype)
            o_ref[half_rows:, :] = chain(
                x_ref[half_rows:, :], w_refs, b_refs).astype(o_ref.dtype)

    return kernel


# ----------------------------------------------------------------------------
# Wrapper
# ----------------------------------------------------------------------------
def custom_network_forward(x, params, *, batch_tile=None, epilogue_dtype=None):
    """x: (B, 1024) float32.  params: w1..w6 stored (in,out) f32, b1..b6 (out,) f32."""
    B, D = x.shape
    assert D == DIMS[0], f"expected last dim {DIMS[0]}, got {D}"
    cfg = _tpu_config()
    ep = cfg["epilogue_dtype"] if epilogue_dtype is None else epilogue_dtype
    tb = batch_tile if batch_tile is not None else _auto_batch_tile(
        B, cfg["tile_candidates"], cfg["prefer_even_steps"])
    assert B % tb == 0, f"batch {B} must be divisible by batch_tile {tb}"
    # (8,128) rule: a partial batch tile must be a multiple of 8 sublanes (f32).
    assert tb == B or tb % 8 == 0, "batch_tile must equal B or be a multiple of 8"
    grid_steps = B // tb
    # Split a tile into two independent half-chains when both halves stay
    # sublane-aligned (multiples of 8 rows).
    half_rows = (tb // 2) if (tb >= 16 and tb % 16 == 0) else None
    ep_bytes = jnp.dtype(ep).itemsize

    # Weights resident in VMEM as bf16; biases in the epilogue dtype except the
    # last bias (added in f32 together with the final `+ x1` skip).
    weight_args = []
    in_specs = [pl.BlockSpec((tb, DIMS[0]), lambda i: (i, 0))]
    for li in range(1, _N_LAYERS + 1):
        w = params[f"w{li}"].astype(jnp.bfloat16)
        b_dtype = jnp.float32 if li == _N_LAYERS else ep
        b = params[f"b{li}"].astype(b_dtype).reshape(1, -1)      # 2D for TPU
        weight_args += [w, b]
        in_specs += [
            pl.BlockSpec(w.shape, lambda i: (0, 0), pipeline_mode=pl.Buffered(1)),
            pl.BlockSpec(b.shape, lambda i: (0, 0), pipeline_mode=pl.Buffered(1)),
        ]
    out_spec = pl.BlockSpec((tb, DIMS[-1]), lambda i: (i, 0))

    cost = pl.CostEstimate(
        flops=_PARAM_FLOPS * B,
        transcendentals=0,
        bytes_accessed=(B * DIMS[0] * 4 + B * DIMS[-1] * 4
                        + _WEIGHT_BYTES_BF16 + sum(DIMS[1:]) * 4),
    )

    return pl.pallas_call(
        _make_mlp_kernel(ep, half_rows),
        out_shape=jax.ShapeDtypeStruct((B, DIMS[-1]), x.dtype),
        grid_spec=pltpu.PrefetchScalarGridSpec(
            num_scalar_prefetch=0,
            grid=(grid_steps,),
            in_specs=in_specs,
            out_specs=out_spec,
        ),
        compiler_params=pltpu.CompilerParams(
            dimension_semantics=("parallel",),
            vmem_limit_bytes=_vmem_limit_bytes(tb, ep_bytes, cfg["vmem_cap"]),
        ),
        cost_estimate=cost,
    )(x, *weight_args)


# ----------------------------------------------------------------------------
# Params + references
# ----------------------------------------------------------------------------
def init_params(key):
    """Deterministic synthetic init (shapes match the PyTorch module)."""
    params = {}
    for li in range(1, _N_LAYERS + 1):
        fan_in, fan_out = DIMS[li - 1], DIMS[li]
        kw, kb, key = jax.random.split(key, 3)
        bound = 1.0 / jnp.sqrt(fan_in)
        # stored as (in, out) == transpose of torch.nn.Linear.weight
        params[f"w{li}"] = jax.random.uniform(
            kw, (fan_in, fan_out), jnp.float32, -bound, bound)
        params[f"b{li}"] = jax.random.uniform(
            kb, (fan_out,), jnp.float32, -bound, bound)
    return params


def reference_forward(x, params, *, matmul_dtype=jnp.bfloat16,
                      epilogue_dtype=jnp.float32):
    """Pure-JAX reference mirroring the PyTorch forward (and, with matching
    dtypes, the kernel's exact rounding behaviour)."""
    md, ep = matmul_dtype, epilogue_dtype

    def dot(h, w):
        return jnp.dot(h.astype(md), w.astype(md),
                       preferred_element_type=jnp.float32)

    def lin(h, w, b):
        return dot(h, w).astype(ep) + b.astype(ep)

    def relu(v):
        return jnp.maximum(v, 0).astype(md)

    h1 = relu(lin(x, params["w1"], params["b1"]))
    h = relu(lin(h1, params["w2"], params["b2"]))
    # `x_residual1` chain is dead code in the PyTorch module; omitted.
    h = relu(lin(h, params["w3"], params["b3"]))
    h = relu(lin(h, params["w4"], params["b4"]))
    h = relu(lin(h, params["w5"], params["b5"]))
    h = (h.astype(ep) + h1.astype(ep)).astype(md)
    return dot(h, params["w6"]) + params["b6"].astype(jnp.float32) + x


# ----------------------------------------------------------------------------
# Self-test
# ----------------------------------------------------------------------------
if __name__ == "__main__":
    key = jax.random.PRNGKey(0)
    kx, kp = jax.random.split(key)
    params = init_params(kp)
    ep = _tpu_config()["epilogue_dtype"]

    # Small smoke test (single grid step, weight-DMA-bound regime, no split).
    B_small = 8
    x_small = jax.random.normal(kx, (B_small, DIMS[0]), dtype=jnp.float32)
    out_small = jax.block_until_ready(custom_network_forward(x_small, params))
    assert out_small.shape == (B_small, DIMS[-1])
    ref_match = reference_forward(x_small, params,
                                  matmul_dtype=jnp.bfloat16, epilogue_dtype=ep)
    ref_f32 = reference_forward(x_small, params,
                                matmul_dtype=jnp.float32,
                                epilogue_dtype=jnp.float32)
    assert jnp.allclose(out_small, ref_match, atol=3e-2, rtol=3e-2), \
        "mismatch vs dtype-matched reference"
    assert jnp.allclose(out_small, ref_f32, atol=2e-1, rtol=2e-1), \
        "mismatch vs f32 reference beyond expected bf16 rounding"

    # Multi-step grid exercises MXU-aligned batch tiling + the split half-tile
    # chains (tb=128 -> two 64-row chains per tile, 2 grid steps).
    B_big = 256
    x_big = jax.random.normal(kx, (B_big, DIMS[0]), dtype=jnp.float32)
    out_big = jax.block_until_ready(
        custom_network_forward(x_big, params, batch_tile=128))
    ref_big = reference_forward(x_big, params,
                                matmul_dtype=jnp.bfloat16, epilogue_dtype=ep)
    assert jnp.allclose(out_big, ref_big, atol=3e-2, rtol=3e-2), \
        "mismatch on tiled / split path"

    print("KERNEL_OK")
</pallas_src>

<mosaic_0001>
module attributes {stable_mosaic.version = 11 : i64} {
  func.func @kernel(%arg0: i32, %arg1: memref<8x1024xf32, #tpu.memory_space<vmem>>, %arg2: memref<1024x512xbf16, #tpu.memory_space<vmem>>, %arg3: memref<1x512xf32, #tpu.memory_space<vmem>>, %arg4: memref<512x256xbf16, #tpu.memory_space<vmem>>, %arg5: memref<1x256xf32, #tpu.memory_space<vmem>>, %arg6: memref<256x64xbf16, #tpu.memory_space<vmem>>, %arg7: memref<1x64xf32, #tpu.memory_space<vmem>>, %arg8: memref<64x256xbf16, #tpu.memory_space<vmem>>, %arg9: memref<1x256xf32, #tpu.memory_space<vmem>>, %arg10: memref<256x512xbf16, #tpu.memory_space<vmem>>, %arg11: memref<1x512xf32, #tpu.memory_space<vmem>>, %arg12: memref<512x1024xbf16, #tpu.memory_space<vmem>>, %arg13: memref<1x1024xf32, #tpu.memory_space<vmem>>, %arg14: memref<8x1024xf32, #tpu.memory_space<vmem>>) attributes {dimension_semantics = [#tpu.dimension_semantics<parallel>], iteration_bounds = array<i64: 1>, scalar_prefetch = 0 : i64, scratch_operands = 0 : i64, tpu.core_type = #tpu.core_type<tc>, window_params = [{transform_indices = @transform_0, window_bounds = array<i64: 8, 1024>}, {pipeline_mode = #tpu.pipeline_mode<synchronous>, transform_indices = @transform_1, window_bounds = array<i64: 1024, 512>}, {pipeline_mode = #tpu.pipeline_mode<synchronous>, transform_indices = @transform_2, window_bounds = array<i64: 1, 512>}, {pipeline_mode = #tpu.pipeline_mode<synchronous>, transform_indices = @transform_3, window_bounds = array<i64: 512, 256>}, {pipeline_mode = #tpu.pipeline_mode<synchronous>, transform_indices = @transform_4, window_bounds = array<i64: 1, 256>}, {pipeline_mode = #tpu.pipeline_mode<synchronous>, transform_indices = @transform_5, window_bounds = array<i64: 256, 64>}, {pipeline_mode = #tpu.pipeline_mode<synchronous>, transform_indices = @transform_6, window_bounds = array<i64: 1, 64>}, {pipeline_mode = #tpu.pipeline_mode<synchronous>, transform_indices = @transform_7, window_bounds = array<i64: 64, 256>}, {pipeline_mode = #tpu.pipeline_mode<synchronous>, transform_indices = @transform_8, window_bounds = array<i64: 1, 256>}, {pipeline_mode = #tpu.pipeline_mode<synchronous>, transform_indices = @transform_9, window_bounds = array<i64: 256, 512>}, {pipeline_mode = #tpu.pipeline_mode<synchronous>, transform_indices = @transform_10, window_bounds = array<i64: 1, 512>}, {pipeline_mode = #tpu.pipeline_mode<synchronous>, transform_indices = @transform_11, window_bounds = array<i64: 512, 1024>}, {pipeline_mode = #tpu.pipeline_mode<synchronous>, transform_indices = @transform_12, window_bounds = array<i64: 1, 1024>}, {transform_indices = @transform_13, window_bounds = array<i64: 8, 1024>}]} {
    %c0 = arith.constant 0 : index
    %c0_0 = arith.constant 0 : index
    %0 = vector.load %arg1[%c0, %c0_0] : memref<8x1024xf32, #tpu.memory_space<vmem>>, vector<8x1024xf32>
    %1 = arith.truncf %0 : vector<8x1024xf32> to vector<8x1024xbf16>
    %c0_1 = arith.constant 0 : index
    %c0_2 = arith.constant 0 : index
    %2 = vector.load %arg2[%c0_1, %c0_2] : memref<1024x512xbf16, #tpu.memory_space<vmem>>, vector<1024x512xbf16>
    %cst = arith.constant dense<0.000000e+00> : vector<8x512xf32>
    %3 = tpu.matmul %1, %2, %cst {dimension_numbers = #tpu.dot_dimension_numbers<[1], [0], [0], [1], [0, 0, 1, 1], [], []>} : vector<8x1024xbf16>, vector<1024x512xbf16>, vector<8x512xf32> -> vector<8x512xf32>
    %c0_3 = arith.constant 0 : index
    %c0_4 = arith.constant 0 : index
    %4 = vector.load %arg3[%c0_3, %c0_4] : memref<1x512xf32, #tpu.memory_space<vmem>>, vector<1x512xf32>
    %5 = vector.broadcast %4 : vector<1x512xf32> to vector<8x512xf32>
    %6 = arith.addf %3, %5 : vector<8x512xf32>
    %cst_5 = arith.constant 0.000000e+00 : f32
    %7 = vector.broadcast %cst_5 : f32 to vector<8x512xf32>
    %8 = arith.maximumf %6, %7 : vector<8x512xf32>
    %9 = arith.truncf %8 : vector<8x512xf32> to vector<8x512xbf16>
    %c0_6 = arith.constant 0 : index
    %c0_7 = arith.constant 0 : index
    %10 = vector.load %arg4[%c0_6, %c0_7] : memref<512x256xbf16, #tpu.memory_space<vmem>>, vector<512x256xbf16>
    %cst_8 = arith.constant dense<0.000000e+00> : vector<8x256xf32>
    %11 = tpu.matmul %9, %10, %cst_8 {dimension_numbers = #tpu.dot_dimension_numbers<[1], [0], [0], [1], [0, 0, 1, 1], [], []>} : vector<8x512xbf16>, vector<512x256xbf16>, vector<8x256xf32> -> vector<8x256xf32>
    %c0_9 = arith.constant 0 : index
    %c0_10 = arith.constant 0 : index
    %12 = vector.load %arg5[%c0_9, %c0_10] : memref<1x256xf32, #tpu.memory_space<vmem>>, vector<1x256xf32>
    %13 = vector.broadcast %12 : vector<1x256xf32> to vector<8x256xf32>
    %14 = arith.addf %11, %13 : vector<8x256xf32>
    %cst_11 = arith.constant 0.000000e+00 : f32
    %15 = vector.broadcast %cst_11 : f32 to vector<8x256xf32>
    %16 = arith.maximumf %14, %15 : vector<8x256xf32>
    %17 = arith.truncf %16 : vector<8x256xf32> to vector<8x256xbf16>
    %c0_12 = arith.constant 0 : index
    %c0_13 = arith.constant 0 : index
    %18 = vector.load %arg6[%c0_12, %c0_13] : memref<256x64xbf16, #tpu.memory_space<vmem>>, vector<256x64xbf16>
    %cst_14 = arith.constant dense<0.000000e+00> : vector<8x64xf32>
    %19 = tpu.matmul %17, %18, %cst_14 {dimension_numbers = #tpu.dot_dimension_numbers<[1], [0], [0], [1], [0, 0, 1, 1], [], []>} : vector<8x256xbf16>, vector<256x64xbf16>, vector<8x64xf32> -> vector<8x64xf32>
    %c0_15 = arith.constant 0 : index
    %c0_16 = arith.constant 0 : index
    %20 = vector.load %arg7[%c0_15, %c0_16] : memref<1x64xf32, #tpu.memory_space<vmem>>, vector<1x64xf32>
    %21 = vector.broadcast %20 : vector<1x64xf32> to vector<8x64xf32>
    %22 = arith.addf %19, %21 : vector<8x64xf32>
    %cst_17 = arith.constant 0.000000e+00 : f32
    %23 = vector.broadcast %cst_17 : f32 to vector<8x64xf32>
    %24 = arith.maximumf %22, %23 : vector<8x64xf32>
    %25 = arith.truncf %24 : vector<8x64xf32> to vector<8x64xbf16>
    %c0_18 = arith.constant 0 : index
    %c0_19 = arith.constant 0 : index
    %26 = vector.load %arg8[%c0_18, %c0_19] : memref<64x256xbf16, #tpu.memory_space<vmem>>, vector<64x256xbf16>
    %cst_20 = arith.constant dense<0.000000e+00> : vector<8x256xf32>
    %27 = tpu.matmul %25, %26, %cst_20 {dimension_numbers = #tpu.dot_dimension_numbers<[1], [0], [0], [1], [0, 0, 1, 1], [], []>} : vector<8x64xbf16>, vector<64x256xbf16>, vector<8x256xf32> -> vector<8x256xf32>
    %c0_21 = arith.constant 0 : index
    %c0_22 = arith.constant 0 : index
    %28 = vector.load %arg9[%c0_21, %c0_22] : memref<1x256xf32, #tpu.memory_space<vmem>>, vector<1x256xf32>
    %29 = vector.broadcast %28 : vector<1x256xf32> to vector<8x256xf32>
    %30 = arith.addf %27, %29 : vector<8x256xf32>
    %cst_23 = arith.constant 0.000000e+00 : f32
    %31 = vector.broadcast %cst_23 : f32 to vector<8x256xf32>
    %32 = arith.maximumf %30, %31 : vector<8x256xf32>
    %33 = arith.truncf %32 : vector<8x256xf32> to vector<8x256xbf16>
    %c0_24 = arith.constant 0 : index
    %c0_25 = arith.constant 0 : index
    %34 = vector.load %arg10[%c0_24, %c0_25] : memref<256x512xbf16, #tpu.memory_space<vmem>>, vector<256x512xbf16>
    %cst_26 = arith.constant dense<0.000000e+00> : vector<8x512xf32>
    %35 = tpu.matmul %33, %34, %cst_26 {dimension_numbers = #tpu.dot_dimension_numbers<[1], [0], [0], [1], [0, 0, 1, 1], [], []>} : vector<8x256xbf16>, vector<256x512xbf16>, vector<8x512xf32> -> vector<8x512xf32>
    %c0_27 = arith.constant 0 : index
    %c0_28 = arith.constant 0 : index
    %36 = vector.load %arg11[%c0_27, %c0_28] : memref<1x512xf32, #tpu.memory_space<vmem>>, vector<1x512xf32>
    %37 = vector.broadcast %36 : vector<1x512xf32> to vector<8x512xf32>
    %38 = arith.addf %35, %37 : vector<8x512xf32>
    %cst_29 = arith.constant 0.000000e+00 : f32
    %39 = vector.broadcast %cst_29 : f32 to vector<8x512xf32>
    %40 = arith.maximumf %38, %39 : vector<8x512xf32>
    %41 = arith.truncf %40 : vector<8x512xf32> to vector<8x512xbf16>
    %42 = arith.extf %41 : vector<8x512xbf16> to vector<8x512xf32>
    %43 = arith.extf %9 : vector<8x512xbf16> to vector<8x512xf32>
    %44 = arith.addf %42, %43 : vector<8x512xf32>
    %45 = arith.truncf %44 : vector<8x512xf32> to vector<8x512xbf16>
    %c0_30 = arith.constant 0 : index
    %c0_31 = arith.constant 0 : index
    %46 = vector.load %arg12[%c0_30, %c0_31] : memref<512x1024xbf16, #tpu.memory_space<vmem>>, vector<512x1024xbf16>
    %cst_32 = arith.constant dense<0.000000e+00> : vector<8x1024xf32>
    %47 = tpu.matmul %45, %46, %cst_32 {dimension_numbers = #tpu.dot_dimension_numbers<[1], [0], [0], [1], [0, 0, 1, 1], [], []>} : vector<8x512xbf16>, vector<512x1024xbf16>, vector<8x1024xf32> -> vector<8x1024xf32>
    %c0_33 = arith.constant 0 : index
    %c0_34 = arith.constant 0 : index
    %48 = vector.load %arg13[%c0_33, %c0_34] : memref<1x1024xf32, #tpu.memory_space<vmem>>, vector<1x1024xf32>
    %49 = vector.broadcast %48 : vector<1x1024xf32> to vector<8x1024xf32>
    %50 = arith.addf %47, %49 : vector<8x1024xf32>
    %51 = arith.addf %50, %0 : vector<8x1024xf32>
    %c0_35 = arith.constant 0 : index
    %c0_36 = arith.constant 0 : index
    %52 = vector.load %arg14[%c0_35, %c0_36] : memref<8x1024xf32, #tpu.memory_space<vmem>>, vector<8x1024xf32>
    tpu.vector_store %arg14[%c0_35, %c0_36], %51 {strides = array<i32>} : memref<8x1024xf32, #tpu.memory_space<vmem>>, vector<8x1024xf32>,
    return
  }
  func.func @transform_0(%arg0: i32) -> (i32, i32) {
    %c0_i32 = arith.constant 0 : i32
    %c0_i32_0 = arith.constant 0 : i32
    return %arg0, %c0_i32 : i32, i32
  }
  func.func @transform_1(%arg0: i32) -> (i32, i32) {
    %c0_i32 = arith.constant 0 : i32
    %c0_i32_0 = arith.constant 0 : i32
    %c0_i32_1 = arith.constant 0 : i32
    return %c0_i32, %c0_i32_0 : i32, i32
  }
  func.func @transform_2(%arg0: i32) -> (i32, i32) {
    %c0_i32 = arith.constant 0 : i32
    %c0_i32_0 = arith.constant 0 : i32
    %c0_i32_1 = arith.constant 0 : i32
    return %c0_i32, %c0_i32_0 : i32, i32
  }
  func.func @transform_3(%arg0: i32) -> (i32, i32) {
    %c0_i32 = arith.constant 0 : i32
    %c0_i32_0 = arith.constant 0 : i32
    %c0_i32_1 = arith.constant 0 : i32
    return %c0_i32, %c0_i32_0 : i32, i32
  }
  func.func @transform_4(%arg0: i32) -> (i32, i32) {
    %c0_i32 = arith.constant 0 : i32
    %c0_i32_0 = arith.constant 0 : i32
    %c0_i32_1 = arith.constant 0 : i32
    return %c0_i32, %c0_i32_0 : i32, i32
  }
  func.func @transform_5(%arg0: i32) -> (i32, i32) {
    %c0_i32 = arith.constant 0 : i32
    %c0_i32_0 = arith.constant 0 : i32
    %c0_i32_1 = arith.constant 0 : i32
    return %c0_i32, %c0_i32_0 : i32, i32
  }
  func.func @transform_6(%arg0: i32) -> (i32, i32) {
    %c0_i32 = arith.constant 0 : i32
    %c0_i32_0 = arith.constant 0 : i32
    %c0_i32_1 = arith.constant 0 : i32
    return %c0_i32, %c0_i32_0 : i32, i32
  }
  func.func @transform_7(%arg0: i32) -> (i32, i32) {
    %c0_i32 = arith.constant 0 : i32
    %c0_i32_0 = arith.constant 0 : i32
    %c0_i32_1 = arith.constant 0 : i32
    return %c0_i32, %c0_i32_0 : i32, i32
  }
  func.func @transform_8(%arg0: i32) -> (i32, i32) {
    %c0_i32 = arith.constant 0 : i32
    %c0_i32_0 = arith.constant 0 : i32
    %c0_i32_1 = arith.constant 0 : i32
    return %c0_i32, %c0_i32_0 : i32, i32
  }
  func.func @transform_9(%arg0: i32) -> (i32, i32) {
    %c0_i32 = arith.constant 0 : i32
    %c0_i32_0 = arith.constant 0 : i32
    %c0_i32_1 = arith.constant 0 : i32
    return %c0_i32, %c0_i32_0 : i32, i32
  }
  func.func @transform_10(%arg0: i32) -> (i32, i32) {
    %c0_i32 = arith.constant 0 : i32
    %c0_i32_0 = arith.constant 0 : i32
    %c0_i32_1 = arith.constant 0 : i32
    return %c0_i32, %c0_i32_0 : i32, i32
  }
  func.func @transform_11(%arg0: i32) -> (i32, i32) {
    %c0_i32 = arith.constant 0 : i32
    %c0_i32_0 = arith.constant 0 : i32
    %c0_i32_1 = arith.constant 0 : i32
    return %c0_i32, %c0_i32_0 : i32, i32
  }
  func.func @transform_12(%arg0: i32) -> (i32, i32) {
    %c0_i32 = arith.constant 0 : i32
    %c0_i32_0 = arith.constant 0 : i32
    %c0_i32_1 = arith.constant 0 : i32
    return %c0_i32, %c0_i32_0 : i32, i32
  }
  func.func @transform_13(%arg0: i32) -> (i32, i32) {
    %c0_i32 = arith.constant 0 : i32
    %c0_i32_0 = arith.constant 0 : i32
    return %arg0, %c0_i32 : i32, i32
  }
}

</mosaic_0001>

<llo_original>
// kernel: tpu_custom_call.1
$region0: #{tpu_custom_call.1}
  #allocation0 [shape = 'u32[]', space=smem, size = 0x4, offset = 0x4, fixed_abs, tag = 'smem constant byte address 0x4 - core index']
  #allocation1 [shape = 'u32[144,128]{1,0:T(1,128)}', space=vmem, size = 0x12000, scoped, tag = 'internal scratch']
  %s0 = inlined_call_operand.vmem [shape: f32[8,1024], index: 0, kind: input, shape index: {}]
  %s1 = inlined_call_operand.hbm [shape: bf16[1024,512], index: 1, kind: input, shape index: {}]
  %s2 = inlined_call_operand.vmem [shape: f32[1,512], index: 2, kind: input, shape index: {}]
  %s3 = inlined_call_operand.hbm [shape: bf16[512,256], index: 3, kind: input, shape index: {}]
  %s4 = inlined_call_operand.vmem [shape: f32[1,256], index: 4, kind: input, shape index: {}]
  %s5 = inlined_call_operand.vmem [shape: bf16[256,64], index: 5, kind: input, shape index: {}]
  %s6 = inlined_call_operand.vmem [shape: f32[1,64], index: 6, kind: input, shape index: {}]
  %s7 = inlined_call_operand.vmem [shape: bf16[64,256], index: 7, kind: input, shape index: {}]
  %s8 = inlined_call_operand.vmem [shape: f32[1,256], index: 8, kind: input, shape index: {}]
  %s9 = inlined_call_operand.hbm [shape: bf16[256,512], index: 9, kind: input, shape index: {}]
  %s10 = inlined_call_operand.vmem [shape: f32[1,512], index: 10, kind: input, shape index: {}]
  %s11 = inlined_call_operand.hbm [shape: bf16[512,1024], index: 11, kind: input, shape index: {}]
  %s12 = inlined_call_operand.vmem [shape: f32[1,1024], index: 12, kind: input, shape index: {}]
  %s13 = inlined_call_operand.hbm [shape: f32[8,1024], index: 13, kind: output, shape index: {}]
  %s14 = sld [smem:[#allocation0]]
  $region78: #{tpu_custom_call.1} parent=0
    _
  %s16 = ssub.s32 1, %s14
  %s17 = scalar_select 0, %s16, %s14
  $region1: #{tpu_custom_call.1} parent=0
    #allocation2 [shape = 'u8[1048576]{0}', space=vmem, size = 0x100000, scoped, tag = 'input window, operand 1, single buffered']
    #allocation3 [shape = 's32[1]{0}', space=sflag, size = 0x4, scoped, tag = 'scoped memory for tpu_custom_call.1']
    #allocation4 [shape = 's32[1]{0}', space=sflag, size = 0x4, scoped, tag = 'scoped memory for tpu_custom_call.1']
    #allocation5 [shape = 'u8[262144]{0}', space=vmem, size = 0x40000, scoped, tag = 'input window, operand 3, single buffered']
    #allocation6 [shape = 's32[1]{0}', space=sflag, size = 0x4, scoped, tag = 'scoped memory for tpu_custom_call.1']
    #allocation7 [shape = 'u8[262144]{0}', space=vmem, size = 0x40000, scoped, tag = 'input window, operand 9, single buffered']
    #allocation8 [shape = 'u8[1048576]{0}', space=vmem, size = 0x100000, scoped, tag = 'input window, operand 11, single buffered']
    #allocation9 [shape = 's32[1]{0}', space=sflag, size = 0x4, scoped, tag = 'scoped memory for tpu_custom_call.1']
    #allocation10 [shape = 'u8[32768]{0}', space=vmem, size = 0x8000, scoped, tag = 'output window, operand 0, single buffered']
    %18 = vsyncpa [#allocation3], 0
    %19 = vsyncpa [#allocation6], 0
    %20 = vsyncpa [#allocation9], 0
    %21 = vsyncpa [#allocation4], 0
    // Predicated region
    $region2: #{tpu_custom_call.1} parent=1 // pred_check
      _
    $region3: #{tpu_custom_call.1} parent=1 // pred_check_branch
      %23 = sbr.rel (0) target = $region5
    $region4: #{tpu_custom_call.1} parent=1 // pred_region
      _
    $region5: #{tpu_custom_call.1} parent=1 // pred_fallthru
      _
    // Predicated region
    $region6: #{tpu_custom_call.1} parent=1 // pred_check
      _
    $region7: #{tpu_custom_call.1} parent=1 // pred_check_branch
      %25 = sbr.rel (0) target = $region9
    $region8: #{tpu_custom_call.1} parent=1 // pred_region
      %s27 = ssub.s32 32768, 32768
      %28 = vsyncadd [#allocation3], %s27
      %s29 = sshll.u32 [#allocation2], 4
      %s30 = int_to_ptr.vmem [resolvable:$true] %s29
      %35 = dma.hbm_to_vmem [thread:$0]  %s1, 32768, %s30, [#allocation3], 256, 256, 16
    $region9: #{tpu_custom_call.1} parent=1 // pred_fallthru
      _
    // Predicated region
    $region10: #{tpu_custom_call.1} parent=1 // pred_check
      _
    $region11: #{tpu_custom_call.1} parent=1 // pred_check_branch
      %37 = sbr.rel (0) target = $region13
    $region12: #{tpu_custom_call.1} parent=1 // pred_region
      _
    $region13: #{tpu_custom_call.1} parent=1 // pred_fallthru
      _
    // Predicated region
    $region14: #{tpu_custom_call.1} parent=1 // pred_check
      _
    $region15: #{tpu_custom_call.1} parent=1 // pred_check_branch
      %39 = sbr.rel (0) target = $region17
    $region16: #{tpu_custom_call.1} parent=1 // pred_region
      %s41 = ssub.s32 8192, 8192
      %42 = vsyncadd [#allocation6], %s41
      %s43 = sshll.u32 [#allocation5], 4
      %s44 = int_to_ptr.vmem [resolvable:$true] %s43
      %49 = dma.hbm_to_vmem [thread:$0]  %s3, 8192, %s44, [#allocation6], 128, 128, 8
    $region17: #{tpu_custom_call.1} parent=1 // pred_fallthru
      _
    // Predicated region
    $region18: #{tpu_custom_call.1} parent=1 // pred_check
      _
    $region19: #{tpu_custom_call.1} parent=1 // pred_check_branch
      %51 = sbr.rel (0) target = $region21
    $region20: #{tpu_custom_call.1} parent=1 // pred_region
      _
    $region21: #{tpu_custom_call.1} parent=1 // pred_fallthru
      _
    // Predicated region
    $region22: #{tpu_custom_call.1} parent=1 // pred_check
      _
    $region23: #{tpu_custom_call.1} parent=1 // pred_check_branch
      %53 = sbr.rel (0) target = $region25
    $region24: #{tpu_custom_call.1} parent=1 // pred_region
      _
    $region25: #{tpu_custom_call.1} parent=1 // pred_fallthru
      _
    // Predicated region
    $region26: #{tpu_custom_call.1} parent=1 // pred_check
      _
    $region27: #{tpu_custom_call.1} parent=1 // pred_check_branch
      %55 = sbr.rel (0) target = $region29
    $region28: #{tpu_custom_call.1} parent=1 // pred_region
      _
    $region29: #{tpu_custom_call.1} parent=1 // pred_fallthru
      _
    // Predicated region
    $region30: #{tpu_custom_call.1} parent=1 // pred_check
      _
    $region31: #{tpu_custom_call.1} parent=1 // pred_check_branch
      %57 = sbr.rel (0) target = $region33
    $region32: #{tpu_custom_call.1} parent=1 // pred_region
      _
    $region33: #{tpu_custom_call.1} parent=1 // pred_fallthru
      _
    // Predicated region
    $region34: #{tpu_custom_call.1} parent=1 // pred_check
      _
    $region35: #{tpu_custom_call.1} parent=1 // pred_check_branch
      %59 = sbr.rel (0) target = $region37
    $region36: #{tpu_custom_call.1} parent=1 // pred_region
      _
    $region37: #{tpu_custom_call.1} parent=1 // pred_fallthru
      _
    // Predicated region
    $region38: #{tpu_custom_call.1} parent=1 // pred_check
      _
    $region39: #{tpu_custom_call.1} parent=1 // pred_check_branch
      %61 = sbr.rel (0) target = $region41
    $region40: #{tpu_custom_call.1} parent=1 // pred_region
      %s63 = ssub.s32 8192, 8192
      %64 = vsyncadd [#allocation6], %s63
      %s65 = sshll.u32 [#allocation7], 4
      %s66 = int_to_ptr.vmem [resolvable:$true] %s65
      %71 = dma.hbm_to_vmem [thread:$0]  %s9, 8192, %s66, [#allocation6], 256, 256, 16
    $region41: #{tpu_custom_call.1} parent=1 // pred_fallthru
      _
    // Predicated region
    $region42: #{tpu_custom_call.1} parent=1 // pred_check
      _
    $region43: #{tpu_custom_call.1} parent=1 // pred_check_branch
      %73 = sbr.rel (0) target = $region45
    $region44: #{tpu_custom_call.1} parent=1 // pred_region
      _
    $region45: #{tpu_custom_call.1} parent=1 // pred_fallthru
      _
    // Predicated region
    $region46: #{tpu_custom_call.1} parent=1 // pred_check
      _
    $region47: #{tpu_custom_call.1} parent=1 // pred_check_branch
      %75 = sbr.rel (0) target = $region49
    $region48: #{tpu_custom_call.1} parent=1 // pred_region
      %s77 = ssub.s32 32768, 32768
      %78 = vsyncadd [#allocation9], %s77
      %s79 = sshll.u32 [#allocation8], 4
      %s80 = int_to_ptr.vmem [resolvable:$true] %s79
      %85 = dma.hbm_to_vmem [thread:$0]  %s11, 32768, %s80, [#allocation9], 512, 512, 32
    $region49: #{tpu_custom_call.1} parent=1 // pred_fallthru
      _
    // Predicated region
    $region50: #{tpu_custom_call.1} parent=1 // pred_check
      _
    $region51: #{tpu_custom_call.1} parent=1 // pred_check_branch
      %87 = sbr.rel (0) target = $region53
    $region52: #{tpu_custom_call.1} parent=1 // pred_region
      _
    $region53: #{tpu_custom_call.1} parent=1 // pred_fallthru
      _
    // Predicated region
    $region54: #{tpu_custom_call.1} parent=1 // pred_check
      _
    $region55: #{tpu_custom_call.1} parent=1 // pred_check_branch
      %89 = sbr.rel (0) target = $region57
    $region56: #{tpu_custom_call.1} parent=1 // pred_region
      %90 = dma.done [#allocation3], 32768
    $region57: #{tpu_custom_call.1} parent=1 // pred_fallthru
      _
    // Predicated region
    $region58: #{tpu_custom_call.1} parent=1 // pred_check
      _
    $region59: #{tpu_custom_call.1} parent=1 // pred_check_branch
      %92 = sbr.rel (0) target = $region61
    $region60: #{tpu_custom_call.1} parent=1 // pred_region
      %93 = dma.done [#allocation6], 8192
    $region61: #{tpu_custom_call.1} parent=1 // pred_fallthru
      _
    // Predicated region
    $region62: #{tpu_custom_call.1} parent=1 // pred_check
      _
    $region63: #{tpu_custom_call.1} parent=1 // pred_check_branch
      %95 = sbr.rel (0) target = $region65
    $region64: #{tpu_custom_call.1} parent=1 // pred_region
      %96 = dma.done [#allocation6], 8192
    $region65: #{tpu_custom_call.1} parent=1 // pred_fallthru
      _
    // Predicated region
    $region66: #{tpu_custom_call.1} parent=1 // pred_check
      _
    $region67: #{tpu_custom_call.1} parent=1 // pred_check_branch
      %98 = sbr.rel (0) target = $region69
    $region68: #{tpu_custom_call.1} parent=1 // pred_region
      %99 = dma.done [#allocation9], 32768
    $region69: #{tpu_custom_call.1} parent=1 // pred_fallthru
      _
    %v101 = vld [vmem:[%s0] sm:$0xff]
    %v102 = vld [vmem:[%s0 + $0x8] sm:$0xff]
    %v103 = vld [vmem:[%s0 + $0x10] sm:$0xff]
    %v104 = vld [vmem:[%s0 + $0x18] sm:$0xff]
    %v105 = vld [vmem:[%s0 + $0x20] sm:$0xff]
    %v106 = vld [vmem:[%s0 + $0x28] sm:$0xff]
    %v107 = vld [vmem:[%s0 + $0x30] sm:$0xff]
    %v108 = vld [vmem:[%s0 + $0x38] sm:$0xff]
    %v109 = vpack.c.bf16 %v101, %v101
    %v110 = vpack.c.bf16 %v102, %v102
    %v111 = vpack.c.bf16 %v103, %v103
    %v112 = vpack.c.bf16 %v104, %v104
    %v113 = vpack.c.bf16 %v105, %v105
    %v114 = vpack.c.bf16 %v106, %v106
    %v115 = vpack.c.bf16 %v107, %v107
    %v116 = vpack.c.bf16 %v108, %v108
    %v117 = vld [vmem:[#allocation2] sm:$0xff]
    %v118 = vld [vmem:[#allocation2 + $0x8] sm:$0xff]
    %v119 = vld [vmem:[#allocation2 + $0x10] sm:$0xff]
    %v120 = vld [vmem:[#allocation2 + $0x18] sm:$0xff]
    %v121 = vld [vmem:[#allocation2 + $0x20] sm:$0xff]
    %v122 = vld [vmem:[#allocation2 + $0x28] sm:$0xff]
    %v123 = vld [vmem:[#allocation2 + $0x30] sm:$0xff]
    %v124 = vld [vmem:[#allocation2 + $0x38] sm:$0xff]
    %v125 = vld [vmem:[#allocation2 + $0x40] sm:$0xff]
    %v126 = vld [vmem:[#allocation2 + $0x48] sm:$0xff]
    %v127 = vld [vmem:[#allocation2 + $0x50] sm:$0xff]
    %v128 = vld [vmem:[#allocation2 + $0x58] sm:$0xff]
    %v129 = vld [vmem:[#allocation2 + $0x60] sm:$0xff]
    %v130 = vld [vmem:[#allocation2 + $0x68] sm:$0xff]
    %v131 = vld [vmem:[#allocation2 + $0x70] sm:$0xff]
    %v132 = vld [vmem:[#allocation2 + $0x78] sm:$0xff]
    %v133 = vld [vmem:[#allocation2 + $0x80] sm:$0xff]
    %v134 = vld [vmem:[#allocation2 + $0x88] sm:$0xff]
    %v135 = vld [vmem:[#allocation2 + $0x90] sm:$0xff]
    %v136 = vld [vmem:[#allocation2 + $0x98] sm:$0xff]
    %v137 = vld [vmem:[#allocation2 + $0xa0] sm:$0xff]
    %v138 = vld [vmem:[#allocation2 + $0xa8] sm:$0xff]
    %v139 = vld [vmem:[#allocation2 + $0xb0] sm:$0xff]
    %v140 = vld [vmem:[#allocation2 + $0xb8] sm:$0xff]
    %v141 = vld [vmem:[#allocation2 + $0xc0] sm:$0xff]
    %v142 = vld [vmem:[#allocation2 + $0xc8] sm:$0xff]
    %v143 = vld [vmem:[#allocation2 + $0xd0] sm:$0xff]
    %v144 = vld [vmem:[#allocation2 + $0xd8] sm:$0xff]
    %v145 = vld [vmem:[#allocation2 + $0xe0] sm:$0xff]
    %v146 = vld [vmem:[#allocation2 + $0xe8] sm:$0xff]
    %v147 = vld [vmem:[#allocation2 + $0xf0] sm:$0xff]
    %v148 = vld [vmem:[#allocation2 + $0xf8] sm:$0xff]
    %v149 = vld [vmem:[#allocation2 + $0x100] sm:$0xff]
    %v150 = vld [vmem:[#allocation2 + $0x108] sm:$0xff]
    %v151 = vld [vmem:[#allocation2 + $0x110] sm:$0xff]
    %v152 = vld [vmem:[#allocation2 + $0x118] sm:$0xff]
    %v153 = vld [vmem:[#allocation2 + $0x120] sm:$0xff]
    %v154 = vld [vmem:[#allocation2 + $0x128] sm:$0xff]
    %v155 = vld [vmem:[#allocation2 + $0x130] sm:$0xff]
    %v156 = vld [vmem:[#allocation2 + $0x138] sm:$0xff]
    %v157 = vld [vmem:[#allocation2 + $0x140] sm:$0xff]
    %v158 = vld [vmem:[#allocation2 + $0x148] sm:$0xff]
    %v159 = vld [vmem:[#allocation2 + $0x150] sm:$0xff]
    %v160 = vld [vmem:[#allocation2 + $0x158] sm:$0xff]
    %v161 = vld [vmem:[#allocation2 + $0x160] sm:$0xff]
    %v162 = vld [vmem:[#allocation2 + $0x168] sm:$0xff]
    %v163 = vld [vmem:[#allocation2 + $0x170] sm:$0xff]
    %v164 = vld [vmem:[#allocation2 + $0x178] sm:$0xff]
    %v165 = vld [vmem:[#allocation2 + $0x180] sm:$0xff]
    %v166 = vld [vmem:[#allocation2 + $0x188] sm:$0xff]
    %v167 = vld [vmem:[#allocation2 + $0x190] sm:$0xff]
    %v168 = vld [vmem:[#allocation2 + $0x198] sm:$0xff]
    %v169 = vld [vmem:[#allocation2 + $0x1a0] sm:$0xff]
    %v170 = vld [vmem:[#allocation2 + $0x1a8] sm:$0xff]
    %v171 = vld [vmem:[#allocation2 + $0x1b0] sm:$0xff]
    %v172 = vld [vmem:[#allocation2 + $0x1b8] sm:$0xff]
    %v173 = vld [vmem:[#allocation2 + $0x1c0] sm:$0xff]
    %v174 = vld [vmem:[#allocation2 + $0x1c8] sm:$0xff]
    %v175 = vld [vmem:[#allocation2 + $0x1d0] sm:$0xff]
    %v176 = vld [vmem:[#allocation2 + $0x1d8] sm:$0xff]
    %v177 = vld [vmem:[#allocation2 + $0x1e0] sm:$0xff]
    %v178 = vld [vmem:[#allocation2 + $0x1e8] sm:$0xff]
    %v179 = vld [vmem:[#allocation2 + $0x1f0] sm:$0xff]
    %v180 = vld [vmem:[#allocation2 + $0x1f8] sm:$0xff]
    %v181 = vld [vmem:[#allocation2 + $0x200] sm:$0xff]
    %v182 = vld [vmem:[#allocation2 + $0x208] sm:$0xff]
    %v183 = vld [vmem:[#allocation2 + $0x210] sm:$0xff]
    %v184 = vld [vmem:[#allocation2 + $0x218] sm:$0xff]
    %v185 = vld [vmem:[#allocation2 + $0x220] sm:$0xff]
    %v186 = vld [vmem:[#allocation2 + $0x228] sm:$0xff]
    %v187 = vld [vmem:[#allocation2 + $0x230] sm:$0xff]
    %v188 = vld [vmem:[#allocation2 + $0x238] sm:$0xff]
    %v189 = vld [vmem:[#allocation2 + $0x240] sm:$0xff]
    %v190 = vld [vmem:[#allocation2 + $0x248] sm:$0xff]
    %v191 = vld [vmem:[#allocation2 + $0x250] sm:$0xff]
    %v192 = vld [vmem:[#allocation2 + $0x258] sm:$0xff]
    %v193 = vld [vmem:[#allocation2 + $0x260] sm:$0xff]
    %v194 = vld [vmem:[#allocation2 + $0x268] sm:$0xff]
    %v195 = vld [vmem:[#allocation2 + $0x270] sm:$0xff]
    %v196 = vld [vmem:[#allocation2 + $0x278] sm:$0xff]
    %v197 = vld [vmem:[#allocation2 + $0x280] sm:$0xff]
    %v198 = vld [vmem:[#allocation2 + $0x288] sm:$0xff]
    %v199 = vld [vmem:[#allocation2 + $0x290] sm:$0xff]
    %v200 = vld [vmem:[#allocation2 + $0x298] sm:$0xff]
    %v201 = vld [vmem:[#allocation2 + $0x2a0] sm:$0xff]
    %v202 = vld [vmem:[#allocation2 + $0x2a8] sm:$0xff]
    %v203 = vld [vmem:[#allocation2 + $0x2b0] sm:$0xff]
    %v204 = vld [vmem:[#allocation2 + $0x2b8] sm:$0xff]
    %v205 = vld [vmem:[#allocation2 + $0x2c0] sm:$0xff]
    %v206 = vld [vmem:[#allocation2 + $0x2c8] sm:$0xff]
    %v207 = vld [vmem:[#allocation2 + $0x2d0] sm:$0xff]
    %v208 = vld [vmem:[#allocation2 + $0x2d8] sm:$0xff]
    %v209 = vld [vmem:[#allocation2 + $0x2e0] sm:$0xff]
    %v210 = vld [vmem:[#allocation2 + $0x2e8] sm:$0xff]
    %v211 = vld [vmem:[#allocation2 + $0x2f0] sm:$0xff]
    %v212 = vld [vmem:[#allocation2 + $0x2f8] sm:$0xff]
    %v213 = vld [vmem:[#allocation2 + $0x300] sm:$0xff]
    %v214 = vld [vmem:[#allocation2 + $0x308] sm:$0xff]
    %v215 = vld [vmem:[#allocation2 + $0x310] sm:$0xff]
    %v216 = vld [vmem:[#allocation2 + $0x318] sm:$0xff]
    %v217 = vld [vmem:[#allocation2 + $0x320] sm:$0xff]
    %v218 = vld [vmem:[#allocation2 + $0x328] sm:$0xff]
    %v219 = vld [vmem:[#allocation2 + $0x330] sm:$0xff]
    %v220 = vld [vmem:[#allocation2 + $0x338] sm:$0xff]
    %v221 = vld [vmem:[#allocation2 + $0x340] sm:$0xff]
    %v222 = vld [vmem:[#allocation2 + $0x348] sm:$0xff]
    %v223 = vld [vmem:[#allocation2 + $0x350] sm:$0xff]
    %v224 = vld [vmem:[#allocation2 + $0x358] sm:$0xff]
    %v225 = vld [vmem:[#allocation2 + $0x360] sm:$0xff]
    %v226 = vld [vmem:[#allocation2 + $0x368] sm:$0xff]
    %v227 = vld [vmem:[#allocation2 + $0x370] sm:$0xff]
    %v228 = vld [vmem:[#allocation2 + $0x378] sm:$0xff]
    %v229 = vld [vmem:[#allocation2 + $0x380] sm:$0xff]
    %v230 = vld [vmem:[#allocation2 + $0x388] sm:$0xff]
    %v231 = vld [vmem:[#allocation2 + $0x390] sm:$0xff]
    %v232 = vld [vmem:[#allocation2 + $0x398] sm:$0xff]
    %v233 = vld [vmem:[#allocation2 + $0x3a0] sm:$0xff]
    %v234 = vld [vmem:[#allocation2 + $0x3a8] sm:$0xff]
    %v235 = vld [vmem:[#allocation2 + $0x3b0] sm:$0xff]
    %v236 = vld [vmem:[#allocation2 + $0x3b8] sm:$0xff]
    %v237 = vld [vmem:[#allocation2 + $0x3c0] sm:$0xff]
    %v238 = vld [vmem:[#allocation2 + $0x3c8] sm:$0xff]
    %v239 = vld [vmem:[#allocation2 + $0x3d0] sm:$0xff]
    %v240 = vld [vmem:[#allocation2 + $0x3d8] sm:$0xff]
    %v241 = vld [vmem:[#allocation2 + $0x3e0] sm:$0xff]
    %v242 = vld [vmem:[#allocation2 + $0x3e8] sm:$0xff]
    %v243 = vld [vmem:[#allocation2 + $0x3f0] sm:$0xff]
    %v244 = vld [vmem:[#allocation2 + $0x3f8] sm:$0xff]
    %v245 = vld [vmem:[#allocation2 + $0x400] sm:$0xff]
    %v246 = vld [vmem:[#allocation2 + $0x408] sm:$0xff]
    %v247 = vld [vmem:[#allocation2 + $0x410] sm:$0xff]
    %v248 = vld [vmem:[#allocation2 + $0x418] sm:$0xff]
    %v249 = vld [vmem:[#allocation2 + $0x420] sm:$0xff]
    %v250 = vld [vmem:[#allocation2 + $0x428] sm:$0xff]
    %v251 = vld [vmem:[#allocation2 + $0x430] sm:$0xff]
    %v252 = vld [vmem:[#allocation2 + $0x438] sm:$0xff]
    %v253 = vld [vmem:[#allocation2 + $0x440] sm:$0xff]
    %v254 = vld [vmem:[#allocation2 + $0x448] sm:$0xff]
    %v255 = vld [vmem:[#allocation2 + $0x450] sm:$0xff]
    %v256 = vld [vmem:[#allocation2 + $0x458] sm:$0xff]
    %v257 = vld [vmem:[#allocation2 + $0x460] sm:$0xff]
    %v258 = vld [vmem:[#allocation2 + $0x468] sm:$0xff]
    %v259 = vld [vmem:[#allocation2 + $0x470] sm:$0xff]
    %v260 = vld [vmem:[#allocation2 + $0x478] sm:$0xff]
    %v261 = vld [vmem:[#allocation2 + $0x480] sm:$0xff]
    %v262 = vld [vmem:[#allocation2 + $0x488] sm:$0xff]
    %v263 = vld [vmem:[#allocation2 + $0x490] sm:$0xff]
    %v264 = vld [vmem:[#allocation2 + $0x498] sm:$0xff]
    %v265 = vld [vmem:[#allocation2 + $0x4a0] sm:$0xff]
    %v266 = vld [vmem:[#allocation2 + $0x4a8] sm:$0xff]
    %v267 = vld [vmem:[#allocation2 + $0x4b0] sm:$0xff]
    %v268 = vld [vmem:[#allocation2 + $0x4b8] sm:$0xff]
    %v269 = vld [vmem:[#allocation2 + $0x4c0] sm:$0xff]
    %v270 = vld [vmem:[#allocation2 + $0x4c8] sm:$0xff]
    %v271 = vld [vmem:[#allocation2 + $0x4d0] sm:$0xff]
    %v272 = vld [vmem:[#allocation2 + $0x4d8] sm:$0xff]
    %v273 = vld [vmem:[#allocation2 + $0x4e0] sm:$0xff]
    %v274 = vld [vmem:[#allocation2 + $0x4e8] sm:$0xff]
    %v275 = vld [vmem:[#allocation2 + $0x4f0] sm:$0xff]
    %v276 = vld [vmem:[#allocation2 + $0x4f8] sm:$0xff]
    %v277 = vld [vmem:[#allocation2 + $0x500] sm:$0xff]
    %v278 = vld [vmem:[#allocation2 + $0x508] sm:$0xff]
    %v279 = vld [vmem:[#allocation2 + $0x510] sm:$0xff]
    %v280 = vld [vmem:[#allocation2 + $0x518] sm:$0xff]
    %v281 = vld [vmem:[#allocation2 + $0x520] sm:$0xff]
    %v282 = vld [vmem:[#allocation2 + $0x528] sm:$0xff]
    %v283 = vld [vmem:[#allocation2 + $0x530] sm:$0xff]
    %v284 = vld [vmem:[#allocation2 + $0x538] sm:$0xff]
    %v285 = vld [vmem:[#allocation2 + $0x540] sm:$0xff]
    %v286 = vld [vmem:[#allocation2 + $0x548] sm:$0xff]
    %v287 = vld [vmem:[#allocation2 + $0x550] sm:$0xff]
    %v288 = vld [vmem:[#allocation2 + $0x558] sm:$0xff]
    %v289 = vld [vmem:[#allocation2 + $0x560] sm:$0xff]
    %v290 = vld [vmem:[#allocation2 + $0x568] sm:$0xff]
    %v291 = vld [vmem:[#allocation2 + $0x570] sm:$0xff]
    %v292 = vld [vmem:[#allocation2 + $0x578] sm:$0xff]
    %v293 = vld [vmem:[#allocation2 + $0x580] sm:$0xff]
    %v294 = vld [vmem:[#allocation2 + $0x588] sm:$0xff]
    %v295 = vld [vmem:[#allocation2 + $0x590] sm:$0xff]
    %v296 = vld [vmem:[#allocation2 + $0x598] sm:$0xff]
    %v297 = vld [vmem:[#allocation2 + $0x5a0] sm:$0xff]
    %v298 = vld [vmem:[#allocation2 + $0x5a8] sm:$0xff]
    %v299 = vld [vmem:[#allocation2 + $0x5b0] sm:$0xff]
    %v300 = vld [vmem:[#allocation2 + $0x5b8] sm:$0xff]
    %v301 = vld [vmem:[#allocation2 + $0x5c0] sm:$0xff]
    %v302 = vld [vmem:[#allocation2 + $0x5c8] sm:$0xff]
    %v303 = vld [vmem:[#allocation2 + $0x5d0] sm:$0xff]
    %v304 = vld [vmem:[#allocation2 + $0x5d8] sm:$0xff]
    %v305 = vld [vmem:[#allocation2 + $0x5e0] sm:$0xff]
    %v306 = vld [vmem:[#allocation2 + $0x5e8] sm:$0xff]
    %v307 = vld [vmem:[#allocation2 + $0x5f0] sm:$0xff]
    %v308 = vld [vmem:[#allocation2 + $0x5f8] sm:$0xff]
    %v309 = vld [vmem:[#allocation2 + $0x600] sm:$0xff]
    %v310 = vld [vmem:[#allocation2 + $0x608] sm:$0xff]
    %v311 = vld [vmem:[#allocation2 + $0x610] sm:$0xff]
    %v312 = vld [vmem:[#allocation2 + $0x618] sm:$0xff]
    %v313 = vld [vmem:[#allocation2 + $0x620] sm:$0xff]
    %v314 = vld [vmem:[#allocation2 + $0x628] sm:$0xff]
    %v315 = vld [vmem:[#allocation2 + $0x630] sm:$0xff]
    %v316 = vld [vmem:[#allocation2 + $0x638] sm:$0xff]
    %v317 = vld [vmem:[#allocation2 + $0x640] sm:$0xff]
    %v318 = vld [vmem:[#allocation2 + $0x648] sm:$0xff]
    %v319 = vld [vmem:[#allocation2 + $0x650] sm:$0xff]
    %v320 = vld [vmem:[#allocation2 + $0x658] sm:$0xff]
    %v321 = vld [vmem:[#allocation2 + $0x660] sm:$0xff]
    %v322 = vld [vmem:[#allocation2 + $0x668] sm:$0xff]
    %v323 = vld [vmem:[#allocation2 + $0x670] sm:$0xff]
    %v324 = vld [vmem:[#allocation2 + $0x678] sm:$0xff]
    %v325 = vld [vmem:[#allocation2 + $0x680] sm:$0xff]
    %v326 = vld [vmem:[#allocation2 + $0x688] sm:$0xff]
    %v327 = vld [vmem:[#allocation2 + $0x690] sm:$0xff]
    %v328 = vld [vmem:[#allocation2 + $0x698] sm:$0xff]
    %v329 = vld [vmem:[#allocation2 + $0x6a0] sm:$0xff]
    %v330 = vld [vmem:[#allocation2 + $0x6a8] sm:$0xff]
    %v331 = vld [vmem:[#allocation2 + $0x6b0] sm:$0xff]
    %v332 = vld [vmem:[#allocation2 + $0x6b8] sm:$0xff]
    %v333 = vld [vmem:[#allocation2 + $0x6c0] sm:$0xff]
    %v334 = vld [vmem:[#allocation2 + $0x6c8] sm:$0xff]
    %v335 = vld [vmem:[#allocation2 + $0x6d0] sm:$0xff]
    %v336 = vld [vmem:[#allocation2 + $0x6d8] sm:$0xff]
    %v337 = vld [vmem:[#allocation2 + $0x6e0] sm:$0xff]
    %v338 = vld [vmem:[#allocation2 + $0x6e8] sm:$0xff]
    %v339 = vld [vmem:[#allocation2 + $0x6f0] sm:$0xff]
    %v340 = vld [vmem:[#allocation2 + $0x6f8] sm:$0xff]
    %v341 = vld [vmem:[#allocation2 + $0x700] sm:$0xff]
    %v342 = vld [vmem:[#allocation2 + $0x708] sm:$0xff]
    %v343 = vld [vmem:[#allocation2 + $0x710] sm:$0xff]
    %v344 = vld [vmem:[#allocation2 + $0x718] sm:$0xff]
    %v345 = vld [vmem:[#allocation2 + $0x720] sm:$0xff]
    %v346 = vld [vmem:[#allocation2 + $0x728] sm:$0xff]
    %v347 = vld [vmem:[#allocation2 + $0x730] sm:$0xff]
    %v348 = vld [vmem:[#allocation2 + $0x738] sm:$0xff]
    %v349 = vld [vmem:[#allocation2 + $0x740] sm:$0xff]
    %v350 = vld [vmem:[#allocation2 + $0x748] sm:$0xff]
    %v351 = vld [vmem:[#allocation2 + $0x750] sm:$0xff]
    %v352 = vld [vmem:[#allocation2 + $0x758] sm:$0xff]
    %v353 = vld [vmem:[#allocation2 + $0x760] sm:$0xff]
    %v354 = vld [vmem:[#allocation2 + $0x768] sm:$0xff]
    %v355 = vld [vmem:[#allocation2 + $0x770] sm:$0xff]
    %v356 = vld [vmem:[#allocation2 + $0x778] sm:$0xff]
    %v357 = vld [vmem:[#allocation2 + $0x780] sm:$0xff]
    %v358 = vld [vmem:[#allocation2 + $0x788] sm:$0xff]
    %v359 = vld [vmem:[#allocation2 + $0x790] sm:$0xff]
    %v360 = vld [vmem:[#allocation2 + $0x798] sm:$0xff]
    %v361 = vld [vmem:[#allocation2 + $0x7a0] sm:$0xff]
    %v362 = vld [vmem:[#allocation2 + $0x7a8] sm:$0xff]
    %v363 = vld [vmem:[#allocation2 + $0x7b0] sm:$0xff]
    %v364 = vld [vmem:[#allocation2 + $0x7b8] sm:$0xff]
    %v365 = vld [vmem:[#allocation2 + $0x7c0] sm:$0xff]
    %v366 = vld [vmem:[#allocation2 + $0x7c8] sm:$0xff]
    %v367 = vld [vmem:[#allocation2 + $0x7d0] sm:$0xff]
    %v368 = vld [vmem:[#allocation2 + $0x7d8] sm:$0xff]
    %v369 = vld [vmem:[#allocation2 + $0x7e0] sm:$0xff]
    %v370 = vld [vmem:[#allocation2 + $0x7e8] sm:$0xff]
    %v371 = vld [vmem:[#allocation2 + $0x7f0] sm:$0xff]
    %v372 = vld [vmem:[#allocation2 + $0x7f8] sm:$0xff]
    %v373 = vld [vmem:[%s2] sm:$0xf]
    %v375 = vlaneseq
    %v376 = vshrl.u32 %v375, 7
    %v377 = vsub.s32 0, %v376
    %v378 = vrot.slane %v373, %v377
    %v379 = vlaneseq
    %v380 = vshrl.u32 %v379, 7
    %v381 = vsub.s32 1, %v380
    %v382 = vrot.slane %v373, %v381
    %v383 = vlaneseq
    %v384 = vshrl.u32 %v383, 7
    %v385 = vsub.s32 2, %v384
    %v386 = vrot.slane %v373, %v385
    %v387 = vlaneseq
    %v388 = vshrl.u32 %v387, 7
    %v389 = vsub.s32 3, %v388
    %v390 = vrot.slane %v373, %v389
    %v651 = vunpack.c.l.b16 %v117
    %v652 = vunpack.c.h.b16 %v117
    %v653 = vunpack.c.l.b16 %v118
    %v654 = vunpack.c.h.b16 %v118
    %v655 = vunpack.c.l.b16 %v119
    %v656 = vunpack.c.h.b16 %v119
    %v657 = vunpack.c.l.b16 %v120
    %v658 = vunpack.c.h.b16 %v120
    %v659 = vunpack.c.l.b16 %v121
    %v660 = vunpack.c.h.b16 %v121
    %v661 = vunpack.c.l.b16 %v122
    %v662 = vunpack.c.h.b16 %v122
    %v663 = vunpack.c.l.b16 %v123
    %v664 = vunpack.c.h.b16 %v123
    %v665 = vunpack.c.l.b16 %v124
    %v666 = vunpack.c.h.b16 %v124
    %v667 = vunpack.c.l.b16 %v125
    %v668 = vunpack.c.h.b16 %v125
    %v669 = vunpack.c.l.b16 %v126
    %v670 = vunpack.c.h.b16 %v126
    %v671 = vunpack.c.l.b16 %v127
    %v672 = vunpack.c.h.b16 %v127
    %v673 = vunpack.c.l.b16 %v128
    %v674 = vunpack.c.h.b16 %v128
    %v675 = vunpack.c.l.b16 %v129
    %v676 = vunpack.c.h.b16 %v129
    %v677 = vunpack.c.l.b16 %v130
    %v678 = vunpack.c.h.b16 %v130
    %v679 = vunpack.c.l.b16 %v131
    %v680 = vunpack.c.h.b16 %v131
    %v681 = vunpack.c.l.b16 %v132
    %v682 = vunpack.c.h.b16 %v132
    %v683 = vunpack.c.l.b16 %v133
    %v684 = vunpack.c.h.b16 %v133
    %v685 = vunpack.c.l.b16 %v134
    %v686 = vunpack.c.h.b16 %v134
    %v687 = vunpack.c.l.b16 %v135
    %v688 = vunpack.c.h.b16 %v135
    %v689 = vunpack.c.l.b16 %v136
    %v690 = vunpack.c.h.b16 %v136
    %v691 = vunpack.c.l.b16 %v137
    %v692 = vunpack.c.h.b16 %v137
    %v693 = vunpack.c.l.b16 %v138
    %v694 = vunpack.c.h.b16 %v138
    %v695 = vunpack.c.l.b16 %v139
    %v696 = vunpack.c.h.b16 %v139
    %v697 = vunpack.c.l.b16 %v140
    %v698 = vunpack.c.h.b16 %v140
    %v699 = vunpack.c.l.b16 %v141
    %v700 = vunpack.c.h.b16 %v141
    %v701 = vunpack.c.l.b16 %v142
    %v702 = vunpack.c.h.b16 %v142
    %v703 = vunpack.c.l.b16 %v143
    %v704 = vunpack.c.h.b16 %v143
    %v705 = vunpack.c.l.b16 %v144
    %v706 = vunpack.c.h.b16 %v144
    %v707 = vunpack.c.l.b16 %v145
    %v708 = vunpack.c.h.b16 %v145
    %v709 = vunpack.c.l.b16 %v146
    %v710 = vunpack.c.h.b16 %v146
    %v711 = vunpack.c.l.b16 %v147
    %v712 = vunpack.c.h.b16 %v147
    %v713 = vunpack.c.l.b16 %v148
    %v714 = vunpack.c.h.b16 %v148
    %v715 = vunpack.c.l.b16 %v149
    %v716 = vunpack.c.h.b16 %v149
    %v717 = vunpack.c.l.b16 %v150
    %v718 = vunpack.c.h.b16 %v150
    %v719 = vunpack.c.l.b16 %v151
    %v720 = vunpack.c.h.b16 %v151
    %v721 = vunpack.c.l.b16 %v152
    %v722 = vunpack.c.h.b16 %v152
    %v723 = vunpack.c.l.b16 %v153
    %v724 = vunpack.c.h.b16 %v153
    %v725 = vunpack.c.l.b16 %v154
    %v726 = vunpack.c.h.b16 %v154
    %v727 = vunpack.c.l.b16 %v155
    %v728 = vunpack.c.h.b16 %v155
    %v729 = vunpack.c.l.b16 %v156
    %v730 = vunpack.c.h.b16 %v156
    %v731 = vunpack.c.l.b16 %v157
    %v732 = vunpack.c.h.b16 %v157
    %v733 = vunpack.c.l.b16 %v158
    %v734 = vunpack.c.h.b16 %v158
    %v735 = vunpack.c.l.b16 %v159
    %v736 = vunpack.c.h.b16 %v159
    %v737 = vunpack.c.l.b16 %v160
    %v738 = vunpack.c.h.b16 %v160
    %v739 = vunpack.c.l.b16 %v161
    %v740 = vunpack.c.h.b16 %v161
    %v741 = vunpack.c.l.b16 %v162
    %v742 = vunpack.c.h.b16 %v162
    %v743 = vunpack.c.l.b16 %v163
    %v744 = vunpack.c.h.b16 %v163
    %v745 = vunpack.c.l.b16 %v164
    %v746 = vunpack.c.h.b16 %v164
    %v747 = vunpack.c.l.b16 %v165
    %v748 = vunpack.c.h.b16 %v165
    %v749 = vunpack.c.l.b16 %v166
    %v750 = vunpack.c.h.b16 %v166
    %v751 = vunpack.c.l.b16 %v167
    %v752 = vunpack.c.h.b16 %v167
    %v753 = vunpack.c.l.b16 %v168
    %v754 = vunpack.c.h.b16 %v168
    %v755 = vunpack.c.l.b16 %v169
    %v756 = vunpack.c.h.b16 %v169
    %v757 = vunpack.c.l.b16 %v170
    %v758 = vunpack.c.h.b16 %v170
    %v759 = vunpack.c.l.b16 %v171
    %v760 = vunpack.c.h.b16 %v171
    %v761 = vunpack.c.l.b16 %v172
    %v762 = vunpack.c.h.b16 %v172
    %v763 = vunpack.c.l.b16 %v173
    %v764 = vunpack.c.h.b16 %v173
    %v765 = vunpack.c.l.b16 %v174
    %v766 = vunpack.c.h.b16 %v174
    %v767 = vunpack.c.l.b16 %v175
    %v768 = vunpack.c.h.b16 %v175
    %v769 = vunpack.c.l.b16 %v176
    %v770 = vunpack.c.h.b16 %v176
    %v771 = vunpack.c.l.b16 %v177
    %v772 = vunpack.c.h.b16 %v177
    %v773 = vunpack.c.l.b16 %v178
    %v774 = vunpack.c.h.b16 %v178
    %v775 = vunpack.c.l.b16 %v179
    %v776 = vunpack.c.h.b16 %v179
    %v777 = vunpack.c.l.b16 %v180
    %v778 = vunpack.c.h.b16 %v180
    %v779 = vunpack.c.l.b16 %v181
    %v780 = vunpack.c.h.b16 %v181
    %v781 = vunpack.c.l.b16 %v182
    %v782 = vunpack.c.h.b16 %v182
    %v783 = vunpack.c.l.b16 %v183
    %v784 = vunpack.c.h.b16 %v183
    %v785 = vunpack.c.l.b16 %v184
    %v786 = vunpack.c.h.b16 %v184
    %v787 = vunpack.c.l.b16 %v185
    %v788 = vunpack.c.h.b16 %v185
    %v789 = vunpack.c.l.b16 %v186
    %v790 = vunpack.c.h.b16 %v186
    %v791 = vunpack.c.l.b16 %v187
    %v792 = vunpack.c.h.b16 %v187
    %v793 = vunpack.c.l.b16 %v188
    %v794 = vunpack.c.h.b16 %v188
    %v795 = vunpack.c.l.b16 %v189
    %v796 = vunpack.c.h.b16 %v189
    %v797 = vunpack.c.l.b16 %v190
    %v798 = vunpack.c.h.b16 %v190
    %v799 = vunpack.c.l.b16 %v191
    %v800 = vunpack.c.h.b16 %v191
    %v801 = vunpack.c.l.b16 %v192
    %v802 = vunpack.c.h.b16 %v192
    %v803 = vunpack.c.l.b16 %v193
    %v804 = vunpack.c.h.b16 %v193
    %v805 = vunpack.c.l.b16 %v194
    %v806 = vunpack.c.h.b16 %v194
    %v807 = vunpack.c.l.b16 %v195
    %v808 = vunpack.c.h.b16 %v195
    %v809 = vunpack.c.l.b16 %v196
    %v810 = vunpack.c.h.b16 %v196
    %v811 = vunpack.c.l.b16 %v197
    %v812 = vunpack.c.h.b16 %v197
    %v813 = vunpack.c.l.b16 %v198
    %v814 = vunpack.c.h.b16 %v198
    %v815 = vunpack.c.l.b16 %v199
    %v816 = vunpack.c.h.b16 %v199
    %v817 = vunpack.c.l.b16 %v200
    %v818 = vunpack.c.h.b16 %v200
    %v819 = vunpack.c.l.b16 %v201
    %v820 = vunpack.c.h.b16 %v201
    %v821 = vunpack.c.l.b16 %v202
    %v822 = vunpack.c.h.b16 %v202
    %v823 = vunpack.c.l.b16 %v203
    %v824 = vunpack.c.h.b16 %v203
    %v825 = vunpack.c.l.b16 %v204
    %v826 = vunpack.c.h.b16 %v204
    %v827 = vunpack.c.l.b16 %v205
    %v828 = vunpack.c.h.b16 %v205
    %v829 = vunpack.c.l.b16 %v206
    %v830 = vunpack.c.h.b16 %v206
    %v831 = vunpack.c.l.b16 %v207
    %v832 = vunpack.c.h.b16 %v207
    %v833 = vunpack.c.l.b16 %v208
    %v834 = vunpack.c.h.b16 %v208
    %v835 = vunpack.c.l.b16 %v209
    %v836 = vunpack.c.h.b16 %v209
    %v837 = vunpack.c.l.b16 %v210
    %v838 = vunpack.c.h.b16 %v210
    %v839 = vunpack.c.l.b16 %v211
    %v840 = vunpack.c.h.b16 %v211
    %v841 = vunpack.c.l.b16 %v212
    %v842 = vunpack.c.h.b16 %v212
    %v843 = vunpack.c.l.b16 %v213
    %v844 = vunpack.c.h.b16 %v213
    %v845 = vunpack.c.l.b16 %v214
    %v846 = vunpack.c.h.b16 %v214
    %v847 = vunpack.c.l.b16 %v215
    %v848 = vunpack.c.h.b16 %v215
    %v849 = vunpack.c.l.b16 %v216
    %v850 = vunpack.c.h.b16 %v216
    %v851 = vunpack.c.l.b16 %v217
    %v852 = vunpack.c.h.b16 %v217
    %v853 = vunpack.c.l.b16 %v218
    %v854 = vunpack.c.h.b16 %v218
    %v855 = vunpack.c.l.b16 %v219
    %v856 = vunpack.c.h.b16 %v219
    %v857 = vunpack.c.l.b16 %v220
    %v858 = vunpack.c.h.b16 %v220
    %v859 = vunpack.c.l.b16 %v221
    %v860 = vunpack.c.h.b16 %v221
    %v861 = vunpack.c.l.b16 %v222
    %v862 = vunpack.c.h.b16 %v222
    %v863 = vunpack.c.l.b16 %v223
    %v864 = vunpack.c.h.b16 %v223
    %v865 = vunpack.c.l.b16 %v224
    %v866 = vunpack.c.h.b16 %v224
    %v867 = vunpack.c.l.b16 %v225
    %v868 = vunpack.c.h.b16 %v225
    %v869 = vunpack.c.l.b16 %v226
    %v870 = vunpack.c.h.b16 %v226
    %v871 = vunpack.c.l.b16 %v227
    %v872 = vunpack.c.h.b16 %v227
    %v873 = vunpack.c.l.b16 %v228
    %v874 = vunpack.c.h.b16 %v228
    %v875 = vunpack.c.l.b16 %v229
    %v876 = vunpack.c.h.b16 %v229
    %v877 = vunpack.c.l.b16 %v230
    %v878 = vunpack.c.h.b16 %v230
    %v879 = vunpack.c.l.b16 %v231
    %v880 = vunpack.c.h.b16 %v231
    %v881 = vunpack.c.l.b16 %v232
    %v882 = vunpack.c.h.b16 %v232
    %v883 = vunpack.c.l.b16 %v233
    %v884 = vunpack.c.h.b16 %v233
    %v885 = vunpack.c.l.b16 %v234
    %v886 = vunpack.c.h.b16 %v234
    %v887 = vunpack.c.l.b16 %v235
    %v888 = vunpack.c.h.b16 %v235
    %v889 = vunpack.c.l.b16 %v236
    %v890 = vunpack.c.h.b16 %v236
    %v891 = vunpack.c.l.b16 %v237
    %v892 = vunpack.c.h.b16 %v237
    %v893 = vunpack.c.l.b16 %v238
    %v894 = vunpack.c.h.b16 %v238
    %v895 = vunpack.c.l.b16 %v239
    %v896 = vunpack.c.h.b16 %v239
    %v897 = vunpack.c.l.b16 %v240
    %v898 = vunpack.c.h.b16 %v240
    %v899 = vunpack.c.l.b16 %v241
    %v900 = vunpack.c.h.b16 %v241
    %v901 = vunpack.c.l.b16 %v242
    %v902 = vunpack.c.h.b16 %v242
    %v903 = vunpack.c.l.b16 %v243
    %v904 = vunpack.c.h.b16 %v243
    %v905 = vunpack.c.l.b16 %v244
    %v906 = vunpack.c.h.b16 %v244
    %v907 = vunpack.c.l.b16 %v245
    %v908 = vunpack.c.h.b16 %v245
    %v909 = vunpack.c.l.b16 %v246
    %v910 = vunpack.c.h.b16 %v246
    %v911 = vunpack.c.l.b16 %v247
    %v912 = vunpack.c.h.b16 %v247
    %v913 = vunpack.c.l.b16 %v248
    %v914 = vunpack.c.h.b16 %v248
    %v915 = vunpack.c.l.b16 %v249
    %v916 = vunpack.c.h.b16 %v249
    %v917 = vunpack.c.l.b16 %v250
    %v918 = vunpack.c.h.b16 %v250
    %v919 = vunpack.c.l.b16 %v251
    %v920 = vunpack.c.h.b16 %v251
    %v921 = vunpack.c.l.b16 %v252
    %v922 = vunpack.c.h.b16 %v252
    %v923 = vunpack.c.l.b16 %v253
    %v924 = vunpack.c.h.b16 %v253
    %v925 = vunpack.c.l.b16 %v254
    %v926 = vunpack.c.h.b16 %v254
    %v927 = vunpack.c.l.b16 %v255
    %v928 = vunpack.c.h.b16 %v255
    %v929 = vunpack.c.l.b16 %v256
    %v930 = vunpack.c.h.b16 %v256
    %v931 = vunpack.c.l.b16 %v257
    %v932 = vunpack.c.h.b16 %v257
    %v933 = vunpack.c.l.b16 %v258
    %v934 = vunpack.c.h.b16 %v258
    %v935 = vunpack.c.l.b16 %v259
    %v936 = vunpack.c.h.b16 %v259
    %v937 = vunpack.c.l.b16 %v260
    %v938 = vunpack.c.h.b16 %v260
    %v939 = vunpack.c.l.b16 %v261
    %v940 = vunpack.c.h.b16 %v261
    %v941 = vunpack.c.l.b16 %v262
    %v942 = vunpack.c.h.b16 %v262
    %v943 = vunpack.c.l.b16 %v263
    %v944 = vunpack.c.h.b16 %v263
    %v945 = vunpack.c.l.b16 %v264
    %v946 = vunpack.c.h.b16 %v264
    %v947 = vunpack.c.l.b16 %v265
    %v948 = vunpack.c.h.b16 %v265
    %v949 = vunpack.c.l.b16 %v266
    %v950 = vunpack.c.h.b16 %v266
    %v951 = vunpack.c.l.b16 %v267
    %v952 = vunpack.c.h.b16 %v267
    %v953 = vunpack.c.l.b16 %v268
    %v954 = vunpack.c.h.b16 %v268
    %v955 = vunpack.c.l.b16 %v269
    %v956 = vunpack.c.h.b16 %v269
    %v957 = vunpack.c.l.b16 %v270
    %v958 = vunpack.c.h.b16 %v270
    %v959 = vunpack.c.l.b16 %v271
    %v960 = vunpack.c.h.b16 %v271
    %v961 = vunpack.c.l.b16 %v272
    %v962 = vunpack.c.h.b16 %v272
    %v963 = vunpack.c.l.b16 %v273
    %v964 = vunpack.c.h.b16 %v273
    %v965 = vunpack.c.l.b16 %v274
    %v966 = vunpack.c.h.b16 %v274
    %v967 = vunpack.c.l.b16 %v275
    %v968 = vunpack.c.h.b16 %v275
    %v969 = vunpack.c.l.b16 %v276
    %v970 = vunpack.c.h.b16 %v276
    %v971 = vunpack.c.l.b16 %v277
    %v972 = vunpack.c.h.b16 %v277
    %v973 = vunpack.c.l.b16 %v278
    %v974 = vunpack.c.h.b16 %v278
    %v975 = vunpack.c.l.b16 %v279
    %v976 = vunpack.c.h.b16 %v279
    %v977 = vunpack.c.l.b16 %v280
    %v978 = vunpack.c.h.b16 %v280
    %v979 = vunpack.c.l.b16 %v281
    %v980 = vunpack.c.h.b16 %v281
    %v981 = vunpack.c.l.b16 %v282
    %v982 = vunpack.c.h.b16 %v282
    %v983 = vunpack.c.l.b16 %v283
    %v984 = vunpack.c.h.b16 %v283
    %v985 = vunpack.c.l.b16 %v284
    %v986 = vunpack.c.h.b16 %v284
    %v987 = vunpack.c.l.b16 %v285
    %v988 = vunpack.c.h.b16 %v285
    %v989 = vunpack.c.l.b16 %v286
    %v990 = vunpack.c.h.b16 %v286
    %v991 = vunpack.c.l.b16 %v287
    %v992 = vunpack.c.h.b16 %v287
    %v993 = vunpack.c.l.b16 %v288
    %v994 = vunpack.c.h.b16 %v288
    %v995 = vunpack.c.l.b16 %v289
    %v996 = vunpack.c.h.b16 %v289
    %v997 = vunpack.c.l.b16 %v290
    %v998 = vunpack.c.h.b16 %v290
    %v999 = vunpack.c.l.b16 %v291
    %v1000 = vunpack.c.h.b16 %v291
    %v1001 = vunpack.c.l.b16 %v292
    %v1002 = vunpack.c.h.b16 %v292
    %v1003 = vunpack.c.l.b16 %v293
    %v1004 = vunpack.c.h.b16 %v293
    %v1005 = vunpack.c.l.b16 %v294
    %v1006 = vunpack.c.h.b16 %v294
    %v1007 = vunpack.c.l.b16 %v295
    %v1008 = vunpack.c.h.b16 %v295
    %v1009 = vunpack.c.l.b16 %v296
    %v1010 = vunpack.c.h.b16 %v296
    %v1011 = vunpack.c.l.b16 %v297
    %v1012 = vunpack.c.h.b16 %v297
    %v1013 = vunpack.c.l.b16 %v298
    %v1014 = vunpack.c.h.b16 %v298
    %v1015 = vunpack.c.l.b16 %v299
    %v1016 = vunpack.c.h.b16 %v299
    %v1017 = vunpack.c.l.b16 %v300
    %v1018 = vunpack.c.h.b16 %v300
    %v1019 = vunpack.c.l.b16 %v301
    %v1020 = vunpack.c.h.b16 %v301
    %v1021 = vunpack.c.l.b16 %v302
    %v1022 = vunpack.c.h.b16 %v302
    %v1023 = vunpack.c.l.b16 %v303
    %v1024 = vunpack.c.h.b16 %v303
    %v1025 = vunpack.c.l.b16 %v304
    %v1026 = vunpack.c.h.b16 %v304
    %v1027 = vunpack.c.l.b16 %v305
    %v1028 = vunpack.c.h.b16 %v305
    %v1029 = vunpack.c.l.b16 %v306
    %v1030 = vunpack.c.h.b16 %v306
    %v1031 = vunpack.c.l.b16 %v307
    %v1032 = vunpack.c.h.b16 %v307
    %v1033 = vunpack.c.l.b16 %v308
    %v1034 = vunpack.c.h.b16 %v308
    %v1035 = vunpack.c.l.b16 %v309
    %v1036 = vunpack.c.h.b16 %v309
    %v1037 = vunpack.c.l.b16 %v310
    %v1038 = vunpack.c.h.b16 %v310
    %v1039 = vunpack.c.l.b16 %v311
    %v1040 = vunpack.c.h.b16 %v311
    %v1041 = vunpack.c.l.b16 %v312
    %v1042 = vunpack.c.h.b16 %v312
    %v1043 = vunpack.c.l.b16 %v313
    %v1044 = vunpack.c.h.b16 %v313
    %v1045 = vunpack.c.l.b16 %v314
    %v1046 = vunpack.c.h.b16 %v314
    %v1047 = vunpack.c.l.b16 %v315
    %v1048 = vunpack.c.h.b16 %v315
    %v1049 = vunpack.c.l.b16 %v316
    %v1050 = vunpack.c.h.b16 %v316
    %v1051 = vunpack.c.l.b16 %v317
    %v1052 = vunpack.c.h.b16 %v317
    %v1053 = vunpack.c.l.b16 %v318
    %v1054 = vunpack.c.h.b16 %v318
    %v1055 = vunpack.c.l.b16 %v319
    %v1056 = vunpack.c.h.b16 %v319
    %v1057 = vunpack.c.l.b16 %v320
    %v1058 = vunpack.c.h.b16 %v320
    %v1059 = vunpack.c.l.b16 %v321
    %v1060 = vunpack.c.h.b16 %v321
    %v1061 = vunpack.c.l.b16 %v322
    %v1062 = vunpack.c.h.b16 %v322
    %v1063 = vunpack.c.l.b16 %v323
    %v1064 = vunpack.c.h.b16 %v323
    %v1065 = vunpack.c.l.b16 %v324
    %v1066 = vunpack.c.h.b16 %v324
    %v1067 = vunpack.c.l.b16 %v325
    %v1068 = vunpack.c.h.b16 %v325
    %v1069 = vunpack.c.l.b16 %v326
    %v1070 = vunpack.c.h.b16 %v326
    %v1071 = vunpack.c.l.b16 %v327
    %v1072 = vunpack.c.h.b16 %v327
    %v1073 = vunpack.c.l.b16 %v328
    %v1074 = vunpack.c.h.b16 %v328
    %v1075 = vunpack.c.l.b16 %v329
    %v1076 = vunpack.c.h.b16 %v329
    %v1077 = vunpack.c.l.b16 %v330
    %v1078 = vunpack.c.h.b16 %v330
    %v1079 = vunpack.c.l.b16 %v331
    %v1080 = vunpack.c.h.b16 %v331
    %v1081 = vunpack.c.l.b16 %v332
    %v1082 = vunpack.c.h.b16 %v332
    %v1083 = vunpack.c.l.b16 %v333
    %v1084 = vunpack.c.h.b16 %v333
    %v1085 = vunpack.c.l.b16 %v334
    %v1086 = vunpack.c.h.b16 %v334
    %v1087 = vunpack.c.l.b16 %v335
    %v1088 = vunpack.c.h.b16 %v335
    %v1089 = vunpack.c.l.b16 %v336
    %v1090 = vunpack.c.h.b16 %v336
    %v1091 = vunpack.c.l.b16 %v337
    %v1092 = vunpack.c.h.b16 %v337
    %v1093 = vunpack.c.l.b16 %v338
    %v1094 = vunpack.c.h.b16 %v338
    %v1095 = vunpack.c.l.b16 %v339
    %v1096 = vunpack.c.h.b16 %v339
    %v1097 = vunpack.c.l.b16 %v340
    %v1098 = vunpack.c.h.b16 %v340
    %v1099 = vunpack.c.l.b16 %v341
    %v1100 = vunpack.c.h.b16 %v341
    %v1101 = vunpack.c.l.b16 %v342
    %v1102 = vunpack.c.h.b16 %v342
    %v1103 = vunpack.c.l.b16 %v343
    %v1104 = vunpack.c.h.b16 %v343
    %v1105 = vunpack.c.l.b16 %v344
    %v1106 = vunpack.c.h.b16 %v344
    %v1107 = vunpack.c.l.b16 %v345
    %v1108 = vunpack.c.h.b16 %v345
    %v1109 = vunpack.c.l.b16 %v346
    %v1110 = vunpack.c.h.b16 %v346
    %v1111 = vunpack.c.l.b16 %v347
    %v1112 = vunpack.c.h.b16 %v347
    %v1113 = vunpack.c.l.b16 %v348
    %v1114 = vunpack.c.h.b16 %v348
    %v1115 = vunpack.c.l.b16 %v349
    %v1116 = vunpack.c.h.b16 %v349
    %v1117 = vunpack.c.l.b16 %v350
    %v1118 = vunpack.c.h.b16 %v350
    %v1119 = vunpack.c.l.b16 %v351
    %v1120 = vunpack.c.h.b16 %v351
    %v1121 = vunpack.c.l.b16 %v352
    %v1122 = vunpack.c.h.b16 %v352
    %v1123 = vunpack.c.l.b16 %v353
    %v1124 = vunpack.c.h.b16 %v353
    %v1125 = vunpack.c.l.b16 %v354
    %v1126 = vunpack.c.h.b16 %v354
    %v1127 = vunpack.c.l.b16 %v355
    %v1128 = vunpack.c.h.b16 %v355
    %v1129 = vunpack.c.l.b16 %v356
    %v1130 = vunpack.c.h.b16 %v356
    %v1131 = vunpack.c.l.b16 %v357
    %v1132 = vunpack.c.h.b16 %v357
    %v1133 = vunpack.c.l.b16 %v358
    %v1134 = vunpack.c.h.b16 %v358
    %v1135 = vunpack.c.l.b16 %v359
    %v1136 = vunpack.c.h.b16 %v359
    %v1137 = vunpack.c.l.b16 %v360
    %v1138 = vunpack.c.h.b16 %v360
    %v1139 = vunpack.c.l.b16 %v361
    %v1140 = vunpack.c.h.b16 %v361
    %v1141 = vunpack.c.l.b16 %v362
    %v1142 = vunpack.c.h.b16 %v362
    %v1143 = vunpack.c.l.b16 %v363
    %v1144 = vunpack.c.h.b16 %v363
    %v1145 = vunpack.c.l.b16 %v364
    %v1146 = vunpack.c.h.b16 %v364
    %v1147 = vunpack.c.l.b16 %v365
    %v1148 = vunpack.c.h.b16 %v365
    %v1149 = vunpack.c.l.b16 %v366
    %v1150 = vunpack.c.h.b16 %v366
    %v1151 = vunpack.c.l.b16 %v367
    %v1152 = vunpack.c.h.b16 %v367
    %v1153 = vunpack.c.l.b16 %v368
    %v1154 = vunpack.c.h.b16 %v368
    %v1155 = vunpack.c.l.b16 %v369
    %v1156 = vunpack.c.h.b16 %v369
    %v1157 = vunpack.c.l.b16 %v370
    %v1158 = vunpack.c.h.b16 %v370
    %v1159 = vunpack.c.l.b16 %v371
    %v1160 = vunpack.c.h.b16 %v371
    %v1161 = vunpack.c.l.b16 %v372
    %v1162 = vunpack.c.h.b16 %v372
    %v1163 = vpack.c.b16 %v655, %v651
    %v1164 = vpack.c.b16 %v656, %v652
    %v1165 = vpack.c.b16 %v657, %v653
    %v1166 = vpack.c.b16 %v658, %v654
    %v1167 = vpack.c.b16 %v663, %v659
    %v1168 = vpack.c.b16 %v664, %v660
    %v1169 = vpack.c.b16 %v665, %v661
    %v1170 = vpack.c.b16 %v666, %v662
    %v1171 = vpack.c.b16 %v671, %v667
    %v1172 = vpack.c.b16 %v672, %v668
    %v1173 = vpack.c.b16 %v673, %v669
    %v1174 = vpack.c.b16 %v674, %v670
    %v1175 = vpack.c.b16 %v679, %v675
    %v1176 = vpack.c.b16 %v680, %v676
    %v1177 = vpack.c.b16 %v681, %v677
    %v1178 = vpack.c.b16 %v682, %v678
    %v1179 = vpack.c.b16 %v687, %v683
    %v1180 = vpack.c.b16 %v688, %v684
    %v1181 = vpack.c.b16 %v689, %v685
    %v1182 = vpack.c.b16 %v690, %v686
    %v1183 = vpack.c.b16 %v695, %v691
    %v1184 = vpack.c.b16 %v696, %v692
    %v1185 = vpack.c.b16 %v697, %v693
    %v1186 = vpack.c.b16 %v698, %v694
    %v1187 = vpack.c.b16 %v703, %v699
    %v1188 = vpack.c.b16 %v704, %v700
    %v1189 = vpack.c.b16 %v705, %v701
    %v1190 = vpack.c.b16 %v706, %v702
    %v1191 = vpack.c.b16 %v711, %v707
    %v1192 = vpack.c.b16 %v712, %v708
    %v1193 = vpack.c.b16 %v713, %v709
    %v1194 = vpack.c.b16 %v714, %v710
    %v1195 = vpack.c.b16 %v719, %v715
    %v1196 = vpack.c.b16 %v720, %v716
    %v1197 = vpack.c.b16 %v721, %v717
    %v1198 = vpack.c.b16 %v722, %v718
    %v1199 = vpack.c.b16 %v727, %v723
    %v1200 = vpack.c.b16 %v728, %v724
    %v1201 = vpack.c.b16 %v729, %v725
    %v1202 = vpack.c.b16 %v730, %v726
    %v1203 = vpack.c.b16 %v735, %v731
    %v1204 = vpack.c.b16 %v736, %v732
    %v1205 = vpack.c.b16 %v737, %v733
    %v1206 = vpack.c.b16 %v738, %v734
    %v1207 = vpack.c.b16 %v743, %v739
    %v1208 = vpack.c.b16 %v744, %v740
    %v1209 = vpack.c.b16 %v745, %v741
    %v1210 = vpack.c.b16 %v746, %v742
    %v1211 = vpack.c.b16 %v751, %v747
    %v1212 = vpack.c.b16 %v752, %v748
    %v1213 = vpack.c.b16 %v753, %v749
    %v1214 = vpack.c.b16 %v754, %v750
    %v1215 = vpack.c.b16 %v759, %v755
    %v1216 = vpack.c.b16 %v760, %v756
    %v1217 = vpack.c.b16 %v761, %v757
    %v1218 = vpack.c.b16 %v762, %v758
    %v1219 = vpack.c.b16 %v767, %v763
    %v1220 = vpack.c.b16 %v768, %v764
    %v1221 = vpack.c.b16 %v769, %v765
    %v1222 = vpack.c.b16 %v770, %v766
    %v1223 = vpack.c.b16 %v775, %v771
    %v1224 = vpack.c.b16 %v776, %v772
    %v1225 = vpack.c.b16 %v777, %v773
    %v1226 = vpack.c.b16 %v778, %v774
    %v1227 = vpack.c.b16 %v783, %v779
    %v1228 = vpack.c.b16 %v784, %v780
    %v1229 = vpack.c.b16 %v785, %v781
    %v1230 = vpack.c.b16 %v786, %v782
    %v1231 = vpack.c.b16 %v791, %v787
    %v1232 = vpack.c.b16 %v792, %v788
    %v1233 = vpack.c.b16 %v793, %v789
    %v1234 = vpack.c.b16 %v794, %v790
    %v1235 = vpack.c.b16 %v799, %v795
    %v1236 = vpack.c.b16 %v800, %v796
    %v1237 = vpack.c.b16 %v801, %v797
    %v1238 = vpack.c.b16 %v802, %v798
    %v1239 = vpack.c.b16 %v807, %v803
    %v1240 = vpack.c.b16 %v808, %v804
    %v1241 = vpack.c.b16 %v809, %v805
    %v1242 = vpack.c.b16 %v810, %v806
    %v1243 = vpack.c.b16 %v815, %v811
    %v1244 = vpack.c.b16 %v816, %v812
    %v1245 = vpack.c.b16 %v817, %v813
    %v1246 = vpack.c.b16 %v818, %v814
    %v1247 = vpack.c.b16 %v823, %v819
    %v1248 = vpack.c.b16 %v824, %v820
    %v1249 = vpack.c.b16 %v825, %v821
    %v1250 = vpack.c.b16 %v826, %v822
    %v1251 = vpack.c.b16 %v831, %v827
    %v1252 = vpack.c.b16 %v832, %v828
    %v1253 = vpack.c.b16 %v833, %v829
    %v1254 = vpack.c.b16 %v834, %v830
    %v1255 = vpack.c.b16 %v839, %v835
    %v1256 = vpack.c.b16 %v840, %v836
    %v1257 = vpack.c.b16 %v841, %v837
    %v1258 = vpack.c.b16 %v842, %v838
    %v1259 = vpack.c.b16 %v847, %v843
    %v1260 = vpack.c.b16 %v848, %v844
    %v1261 = vpack.c.b16 %v849, %v845
    %v1262 = vpack.c.b16 %v850, %v846
    %v1263 = vpack.c.b16 %v855, %v851
    %v1264 = vpack.c.b16 %v856, %v852
    %v1265 = vpack.c.b16 %v857, %v853
    %v1266 = vpack.c.b16 %v858, %v854
    %v1267 = vpack.c.b16 %v863, %v859
    %v1268 = vpack.c.b16 %v864, %v860
    %v1269 = vpack.c.b16 %v865, %v861
    %v1270 = vpack.c.b16 %v866, %v862
    %v1271 = vpack.c.b16 %v871, %v867
    %v1272 = vpack.c.b16 %v872, %v868
    %v1273 = vpack.c.b16 %v873, %v869
    %v1274 = vpack.c.b16 %v874, %v870
    %v1275 = vpack.c.b16 %v879, %v875
    %v1276 = vpack.c.b16 %v880, %v876
    %v1277 = vpack.c.b16 %v881, %v877
    %v1278 = vpack.c.b16 %v882, %v878
    %v1279 = vpack.c.b16 %v887, %v883
    %v1280 = vpack.c.b16 %v888, %v884
    %v1281 = vpack.c.b16 %v889, %v885
    %v1282 = vpack.c.b16 %v890, %v886
    %v1283 = vpack.c.b16 %v895, %v891
    %v1284 = vpack.c.b16 %v896, %v892
    %v1285 = vpack.c.b16 %v897, %v893
    %v1286 = vpack.c.b16 %v898, %v894
    %v1287 = vpack.c.b16 %v903, %v899
    %v1288 = vpack.c.b16 %v904, %v900
    %v1289 = vpack.c.b16 %v905, %v901
    %v1290 = vpack.c.b16 %v906, %v902
    %v1291 = vpack.c.b16 %v911, %v907
    %v1292 = vpack.c.b16 %v912, %v908
    %v1293 = vpack.c.b16 %v913, %v909
    %v1294 = vpack.c.b16 %v914, %v910
    %v1295 = vpack.c.b16 %v919, %v915
    %v1296 = vpack.c.b16 %v920, %v916
    %v1297 = vpack.c.b16 %v921, %v917
    %v1298 = vpack.c.b16 %v922, %v918
    %v1299 = vpack.c.b16 %v927, %v923
    %v1300 = vpack.c.b16 %v928, %v924
    %v1301 = vpack.c.b16 %v929, %v925
    %v1302 = vpack.c.b16 %v930, %v926
    %v1303 = vpack.c.b16 %v935, %v931
    %v1304 = vpack.c.b16 %v936, %v932
    %v1305 = vpack.c.b16 %v937, %v933
    %v1306 = vpack.c.b16 %v938, %v934
    %v1307 = vpack.c.b16 %v943, %v939
    %v1308 = vpack.c.b16 %v944, %v940
    %v1309 = vpack.c.b16 %v945, %v941
    %v1310 = vpack.c.b16 %v946, %v942
    %v1311 = vpack.c.b16 %v951, %v947
    %v1312 = vpack.c.b16 %v952, %v948
    %v1313 = vpack.c.b16 %v953, %v949
    %v1314 = vpack.c.b16 %v954, %v950
    %v1315 = vpack.c.b16 %v959, %v955
    %v1316 = vpack.c.b16 %v960, %v956
    %v1317 = vpack.c.b16 %v961, %v957
    %v1318 = vpack.c.b16 %v962, %v958
    %v1319 = vpack.c.b16 %v967, %v963
    %v1320 = vpack.c.b16 %v968, %v964
    %v1321 = vpack.c.b16 %v969, %v965
    %v1322 = vpack.c.b16 %v970, %v966
    %v1323 = vpack.c.b16 %v975, %v971
    %v1324 = vpack.c.b16 %v976, %v972
    %v1325 = vpack.c.b16 %v977, %v973
    %v1326 = vpack.c.b16 %v978, %v974
    %v1327 = vpack.c.b16 %v983, %v979
    %v1328 = vpack.c.b16 %v984, %v980
    %v1329 = vpack.c.b16 %v985, %v981
    %v1330 = vpack.c.b16 %v986, %v982
    %v1331 = vpack.c.b16 %v991, %v987
    %v1332 = vpack.c.b16 %v992, %v988
    %v1333 = vpack.c.b16 %v993, %v989
    %v1334 = vpack.c.b16 %v994, %v990
    %v1335 = vpack.c.b16 %v999, %v995
    %v1336 = vpack.c.b16 %v1000, %v996
    %v1337 = vpack.c.b16 %v1001, %v997
    %v1338 = vpack.c.b16 %v1002, %v998
    %v1339 = vpack.c.b16 %v1007, %v1003
    %v1340 = vpack.c.b16 %v1008, %v1004
    %v1341 = vpack.c.b16 %v1009, %v1005
    %v1342 = vpack.c.b16 %v1010, %v1006
    %v1343 = vpack.c.b16 %v1015, %v1011
    %v1344 = vpack.c.b16 %v1016, %v1012
    %v1345 = vpack.c.b16 %v1017, %v1013
    %v1346 = vpack.c.b16 %v1018, %v1014
    %v1347 = vpack.c.b16 %v1023, %v1019
    %v1348 = vpack.c.b16 %v1024, %v1020
    %v1349 = vpack.c.b16 %v1025, %v1021
    %v1350 = vpack.c.b16 %v1026, %v1022
    %v1351 = vpack.c.b16 %v1031, %v1027
    %v1352 = vpack.c.b16 %v1032, %v1028
    %v1353 = vpack.c.b16 %v1033, %v1029
    %v1354 = vpack.c.b16 %v1034, %v1030
    %v1355 = vpack.c.b16 %v1039, %v1035
    %v1356 = vpack.c.b16 %v1040, %v1036
    %v1357 = vpack.c.b16 %v1041, %v1037
    %v1358 = vpack.c.b16 %v1042, %v1038
    %v1359 = vpack.c.b16 %v1047, %v1043
    %v1360 = vpack.c.b16 %v1048, %v1044
    %v1361 = vpack.c.b16 %v1049, %v1045
    %v1362 = vpack.c.b16 %v1050, %v1046
    %v1363 = vpack.c.b16 %v1055, %v1051
    %v1364 = vpack.c.b16 %v1056, %v1052
    %v1365 = vpack.c.b16 %v1057, %v1053
    %v1366 = vpack.c.b16 %v1058, %v1054
    %v1367 = vpack.c.b16 %v1063, %v1059
    %v1368 = vpack.c.b16 %v1064, %v1060
    %v1369 = vpack.c.b16 %v1065, %v1061
    %v1370 = vpack.c.b16 %v1066, %v1062
    %v1371 = vpack.c.b16 %v1071, %v1067
    %v1372 = vpack.c.b16 %v1072, %v1068
    %v1373 = vpack.c.b16 %v1073, %v1069
    %v1374 = vpack.c.b16 %v1074, %v1070
    %v1375 = vpack.c.b16 %v1079, %v1075
    %v1376 = vpack.c.b16 %v1080, %v1076
    %v1377 = vpack.c.b16 %v1081, %v1077
    %v1378 = vpack.c.b16 %v1082, %v1078
    %v1379 = vpack.c.b16 %v1087, %v1083
    %v1380 = vpack.c.b16 %v1088, %v1084
    %v1381 = vpack.c.b16 %v1089, %v1085
    %v1382 = vpack.c.b16 %v1090, %v1086
    %v1383 = vpack.c.b16 %v1095, %v1091
    %v1384 = vpack.c.b16 %v1096, %v1092
    %v1385 = vpack.c.b16 %v1097, %v1093
    %v1386 = vpack.c.b16 %v1098, %v1094
    %v1387 = vpack.c.b16 %v1103, %v1099
    %v1388 = vpack.c.b16 %v1104, %v1100
    %v1389 = vpack.c.b16 %v1105, %v1101
    %v1390 = vpack.c.b16 %v1106, %v1102
    %v1391 = vpack.c.b16 %v1111, %v1107
    %v1392 = vpack.c.b16 %v1112, %v1108
    %v1393 = vpack.c.b16 %v1113, %v1109
    %v1394 = vpack.c.b16 %v1114, %v1110
    %v1395 = vpack.c.b16 %v1119, %v1115
    %v1396 = vpack.c.b16 %v1120, %v1116
    %v1397 = vpack.c.b16 %v1121, %v1117
    %v1398 = vpack.c.b16 %v1122, %v1118
    %v1399 = vpack.c.b16 %v1127, %v1123
    %v1400 = vpack.c.b16 %v1128, %v1124
    %v1401 = vpack.c.b16 %v1129, %v1125
    %v1402 = vpack.c.b16 %v1130, %v1126
    %v1403 = vpack.c.b16 %v1135, %v1131
    %v1404 = vpack.c.b16 %v1136, %v1132
    %v1405 = vpack.c.b16 %v1137, %v1133
    %v1406 = vpack.c.b16 %v1138, %v1134
    %v1407 = vpack.c.b16 %v1143, %v1139
    %v1408 = vpack.c.b16 %v1144, %v1140
    %v1409 = vpack.c.b16 %v1145, %v1141
    %v1410 = vpack.c.b16 %v1146, %v1142
    %v1411 = vpack.c.b16 %v1151, %v1147
    %v1412 = vpack.c.b16 %v1152, %v1148
    %v1413 = vpack.c.b16 %v1153, %v1149
    %v1414 = vpack.c.b16 %v1154, %v1150
    %v1415 = vpack.c.b16 %v1159, %v1155
    %v1416 = vpack.c.b16 %v1160, %v1156
    %v1417 = vpack.c.b16 %v1161, %v1157
    %v1418 = vpack.c.b16 %v1162, %v1158
    %1675 = vmatprep.subr.bf16.mxu0 %v1164
    %1676 = vmatpush1.bf16.msra.mxu0 %v1163
    %1677 = vmatprep.subr.bf16.mxu0 %v1168
    %1678 = vmatpush1.bf16.msra.mxu0 %v1167
    %1679 = vmatprep.subr.bf16.mxu0 %v1172
    %1680 = vmatpush1.bf16.msra.mxu0 %v1171
    %1681 = vmatprep.subr.bf16.mxu0 %v1176
    %1682 = vmatpush1.bf16.msra.mxu0 %v1175
    %1683 = vmatprep.subr.bf16.mxu0 %v1180
    %1684 = vmatpush1.bf16.msra.mxu0 %v1179
    %1685 = vmatprep.subr.bf16.mxu0 %v1184
    %1686 = vmatpush1.bf16.msra.mxu0 %v1183
    %1687 = vmatprep.subr.bf16.mxu0 %v1188
    %1688 = vmatpush1.bf16.msra.mxu0 %v1187
    %1689 = vmatprep.subr.bf16.mxu0 %v1192
    %1690 = vmatpush1.bf16.msra.mxu0 %v1191
    %1691 = vmatprep.subr.bf16.mxu0 %v1196
    %1692 = vmatpush1.bf16.msra.mxu0 %v1195
    %1693 = vmatprep.subr.bf16.mxu0 %v1200
    %1694 = vmatpush1.bf16.msra.mxu0 %v1199
    %1695 = vmatprep.subr.bf16.mxu0 %v1204
    %1696 = vmatpush1.bf16.msra.mxu0 %v1203
    %1697 = vmatprep.subr.bf16.mxu0 %v1208
    %1698 = vmatpush1.bf16.msra.mxu0 %v1207
    %1699 = vmatprep.subr.bf16.mxu0 %v1212
    %1700 = vmatpush1.bf16.msra.mxu0 %v1211
    %1701 = vmatprep.subr.bf16.mxu0 %v1216
    %1702 = vmatpush1.bf16.msra.mxu0 %v1215
    %1703 = vmatprep.subr.bf16.mxu0 %v1220
    %1704 = vmatpush1.bf16.msra.mxu0 %v1219
    %1705 = vmatprep.subr.bf16.mxu0 %v1224
    %1706 = vmatpush1.bf16.msra.mxu0 %v1223
    %1707 = vmatprep.mubr.bf16.mxu0 %v110
    %1708 = vmatmul.mubr.bf16.gmra.mrb[0].mxu0 %v109
    %v1709 = vpop.f32.mrb[0].mxu0
    %v1710 = vadd.f32 %v378, %v1709
    %v1711 = vpop.f32.mrb[0].mxu0
    %v1712 = vadd.f32 %v382, %v1711
    %v1713 = vpop.f32.mrb[0].mxu0
    %v1714 = vpop.f32.mrb[0].mxu0
    %1715 = vdwg.mxu0
    %1716 = vmatprep.subr.bf16.mxu0 %v1228
    %1717 = vmatpush1.bf16.msra.mxu0 %v1227
    %1718 = vmatprep.subr.bf16.mxu0 %v1232
    %1719 = vmatpush1.bf16.msra.mxu0 %v1231
    %1720 = vmatprep.subr.bf16.mxu0 %v1236
    %1721 = vmatpush1.bf16.msra.mxu0 %v1235
    %1722 = vmatprep.subr.bf16.mxu0 %v1240
    %1723 = vmatpush1.bf16.msra.mxu0 %v1239
    %1724 = vmatprep.subr.bf16.mxu0 %v1244
    %1725 = vmatpush1.bf16.msra.mxu0 %v1243
    %1726 = vmatprep.subr.bf16.mxu0 %v1248
    %1727 = vmatpush1.bf16.msra.mxu0 %v1247
    %1728 = vmatprep.subr.bf16.mxu0 %v1252
    %1729 = vmatpush1.bf16.msra.mxu0 %v1251
    %1730 = vmatprep.subr.bf16.mxu0 %v1256
    %1731 = vmatpush1.bf16.msra.mxu0 %v1255
    %1732 = vmatprep.subr.bf16.mxu0 %v1260
    %1733 = vmatpush1.bf16.msra.mxu0 %v1259
    %1734 = vmatprep.subr.bf16.mxu0 %v1264
    %1735 = vmatpush1.bf16.msra.mxu0 %v1263
    %1736 = vmatprep.subr.bf16.mxu0 %v1268
    %1737 = vmatpush1.bf16.msra.mxu0 %v1267
    %1738 = vmatprep.subr.bf16.mxu0 %v1272
    %1739 = vmatpush1.bf16.msra.mxu0 %v1271
    %1740 = vmatprep.subr.bf16.mxu0 %v1276
    %1741 = vmatpush1.bf16.msra.mxu0 %v1275
    %1742 = vmatprep.subr.bf16.mxu0 %v1280
    %1743 = vmatpush1.bf16.msra.mxu0 %v1279
    %1744 = vmatprep.subr.bf16.mxu0 %v1284
    %1745 = vmatpush1.bf16.msra.mxu0 %v1283
    %1746 = vmatprep.subr.bf16.mxu0 %v1288
    %1747 = vmatpush1.bf16.msra.mxu0 %v1287
    %1748 = vmatprep.mubr.bf16.mxu0 %v112
    %1749 = vmatmul.mubr.bf16.gmra.mrb[0].mxu0 %v111
    %v1750 = vpop.f32.mrb[0].mxu0
    %v1751 = vadd.f32 %v1710, %v1750
    %v1752 = vpop.f32.mrb[0].mxu0
    %v1753 = vadd.f32 %v1712, %v1752
    %v1754 = vpop.f32.mrb[0].mxu0
    %v1755 = vpop.f32.mrb[0].mxu0
    %1756 = vdwg.mxu0
    %1757 = vmatprep.subr.bf16.mxu0 %v1292
    %1758 = vmatpush1.bf16.msra.mxu0 %v1291
    %1759 = vmatprep.subr.bf16.mxu0 %v1296
    %1760 = vmatpush1.bf16.msra.mxu0 %v1295
    %1761 = vmatprep.subr.bf16.mxu0 %v1300
    %1762 = vmatpush1.bf16.msra.mxu0 %v1299
    %1763 = vmatprep.subr.bf16.mxu0 %v1304
    %1764 = vmatpush1.bf16.msra.mxu0 %v1303
    %1765 = vmatprep.subr.bf16.mxu0 %v1308
    %1766 = vmatpush1.bf16.msra.mxu0 %v1307
    %1767 = vmatprep.subr.bf16.mxu0 %v1312
    %1768 = vmatpush1.bf16.msra.mxu0 %v1311
    %1769 = vmatprep.subr.bf16.mxu0 %v1316
    %1770 = vmatpush1.bf16.msra.mxu0 %v1315
    %1771 = vmatprep.subr.bf16.mxu0 %v1320
    %1772 = vmatpush1.bf16.msra.mxu0 %v1319
    %1773 = vmatprep.subr.bf16.mxu0 %v1324
    %1774 = vmatpush1.bf16.msra.mxu0 %v1323
    %1775 = vmatprep.subr.bf16.mxu0 %v1328
    %1776 = vmatpush1.bf16.msra.mxu0 %v1327
    %1777 = vmatprep.subr.bf16.mxu0 %v1332
    %1778 = vmatpush1.bf16.msra.mxu0 %v1331
    %1779 = vmatprep.subr.bf16.mxu0 %v1336
    %1780 = vmatpush1.bf16.msra.mxu0 %v1335
    %1781 = vmatprep.subr.bf16.mxu0 %v1340
    %1782 = vmatpush1.bf16.msra.mxu0 %v1339
    %1783 = vmatprep.subr.bf16.mxu0 %v1344
    %1784 = vmatpush1.bf16.msra.mxu0 %v1343
    %1785 = vmatprep.subr.bf16.mxu0 %v1348
    %1786 = vmatpush1.bf16.msra.mxu0 %v1347
    %1787 = vmatprep.subr.bf16.mxu0 %v1352
    %1788 = vmatpush1.bf16.msra.mxu0 %v1351
    %1789 = vmatprep.mubr.bf16.mxu0 %v114
    %1790 = vmatmul.mubr.bf16.gmra.mrb[0].mxu0 %v113
    %v1791 = vpop.f32.mrb[0].mxu0
    %v1792 = vadd.f32 %v1751, %v1791
    %v1793 = vpop.f32.mrb[0].mxu0
    %v1794 = vadd.f32 %v1753, %v1793
    %v1795 = vpop.f32.mrb[0].mxu0
    %v1796 = vpop.f32.mrb[0].mxu0
    %1797 = vdwg.mxu0
    %1798 = vmatprep.subr.bf16.mxu0 %v1356
    %1799 = vmatpush1.bf16.msra.mxu0 %v1355
    %1800 = vmatprep.subr.bf16.mxu0 %v1360
    %1801 = vmatpush1.bf16.msra.mxu0 %v1359
    %1802 = vmatprep.subr.bf16.mxu0 %v1364
    %1803 = vmatpush1.bf16.msra.mxu0 %v1363
    %1804 = vmatprep.subr.bf16.mxu0 %v1368
    %1805 = vmatpush1.bf16.msra.mxu0 %v1367
    %1806 = vmatprep.subr.bf16.mxu0 %v1372
    %1807 = vmatpush1.bf16.msra.mxu0 %v1371
    %1808 = vmatprep.subr.bf16.mxu0 %v1376
    %1809 = vmatpush1.bf16.msra.mxu0 %v1375
    %1810 = vmatprep.subr.bf16.mxu0 %v1380
    %1811 = vmatpush1.bf16.msra.mxu0 %v1379
    %1812 = vmatprep.subr.bf16.mxu0 %v1384
    %1813 = vmatpush1.bf16.msra.mxu0 %v1383
    %1814 = vmatprep.subr.bf16.mxu0 %v1388
    %1815 = vmatpush1.bf16.msra.mxu0 %v1387
    %1816 = vmatprep.subr.bf16.mxu0 %v1392
    %1817 = vmatpush1.bf16.msra.mxu0 %v1391
    %1818 = vmatprep.subr.bf16.mxu0 %v1396
    %1819 = vmatpush1.bf16.msra.mxu0 %v1395
    %1820 = vmatprep.subr.bf16.mxu0 %v1400
    %1821 = vmatpush1.bf16.msra.mxu0 %v1399
    %1822 = vmatprep.subr.bf16.mxu0 %v1404
    %1823 = vmatpush1.bf16.msra.mxu0 %v1403
    %1824 = vmatprep.subr.bf16.mxu0 %v1408
    %1825 = vmatpush1.bf16.msra.mxu0 %v1407
    %1826 = vmatprep.subr.bf16.mxu0 %v1412
    %1827 = vmatpush1.bf16.msra.mxu0 %v1411
    %1828 = vmatprep.subr.bf16.mxu0 %v1416
    %1829 = vmatpush1.bf16.msra.mxu0 %v1415
    %1830 = vmatprep.mubr.bf16.mxu0 %v116
    %1831 = vmatmul.mubr.bf16.gmra.mrb[0].mxu0 %v115
    %v1832 = vpop.f32.mrb[0].mxu0
    %v1833 = vadd.f32 %v1792, %v1832
    %v1834 = vpop.f32.mrb[0].mxu0
    %v1835 = vadd.f32 %v1794, %v1834
    %v1836 = vpop.f32.mrb[0].mxu0
    %v1837 = vpop.f32.mrb[0].mxu0
    %1838 = vdwg.mxu0
    %1839 = vmatprep.subr.bf16.mxu0 %v1166
    %1840 = vmatpush1.bf16.msra.mxu0 %v1165
    %1841 = vmatprep.subr.bf16.mxu0 %v1170
    %1842 = vmatpush1.bf16.msra.mxu0 %v1169
    %1843 = vmatprep.subr.bf16.mxu0 %v1174
    %1844 = vmatpush1.bf16.msra.mxu0 %v1173
    %1845 = vmatprep.subr.bf16.mxu0 %v1178
    %1846 = vmatpush1.bf16.msra.mxu0 %v1177
    %1847 = vmatprep.subr.bf16.mxu0 %v1182
    %1848 = vmatpush1.bf16.msra.mxu0 %v1181
    %1849 = vmatprep.subr.bf16.mxu0 %v1186
    %1850 = vmatpush1.bf16.msra.mxu0 %v1185
    %1851 = vmatprep.subr.bf16.mxu0 %v1190
    %1852 = vmatpush1.bf16.msra.mxu0 %v1189
    %1853 = vmatprep.subr.bf16.mxu0 %v1194
    %1854 = vmatpush1.bf16.msra.mxu0 %v1193
    %1855 = vmatprep.subr.bf16.mxu0 %v1198
    %1856 = vmatpush1.bf16.msra.mxu0 %v1197
    %1857 = vmatprep.subr.bf16.mxu0 %v1202
    %1858 = vmatpush1.bf16.msra.mxu0 %v1201
    %1859 = vmatprep.subr.bf16.mxu0 %v1206
    %1860 = vmatpush1.bf16.msra.mxu0 %v1205
    %1861 = vmatprep.subr.bf16.mxu0 %v1210
    %1862 = vmatpush1.bf16.msra.mxu0 %v1209
    %1863 = vmatprep.subr.bf16.mxu0 %v1214
    %1864 = vmatpush1.bf16.msra.mxu0 %v1213
    %1865 = vmatprep.subr.bf16.mxu0 %v1218
    %1866 = vmatpush1.bf16.msra.mxu0 %v1217
    %1867 = vmatprep.subr.bf16.mxu0 %v1222
    %1868 = vmatpush1.bf16.msra.mxu0 %v1221
    %1869 = vmatprep.subr.bf16.mxu0 %v1226
    %1870 = vmatpush1.bf16.msra.mxu0 %v1225
    %1871 = vmatprep.mubr.bf16.mxu0 %v110
    %1872 = vmatmul.mubr.bf16.gmra.mrb[0].mxu0 %v109
    %v1873 = vpop.f32.mrb[0].mxu0
    %v1874 = vadd.f32 %v386, %v1873
    %v1875 = vpop.f32.mrb[0].mxu0
    %v1876 = vadd.f32 %v390, %v1875
    %v1877 = vpop.f32.mrb[0].mxu0
    %v1878 = vpop.f32.mrb[0].mxu0
    %1879 = vdwg.mxu0
    %1880 = vmatprep.subr.bf16.mxu0 %v1230
    %1881 = vmatpush1.bf16.msra.mxu0 %v1229
    %1882 = vmatprep.subr.bf16.mxu0 %v1234
    %1883 = vmatpush1.bf16.msra.mxu0 %v1233
    %1884 = vmatprep.subr.bf16.mxu0 %v1238
    %1885 = vmatpush1.bf16.msra.mxu0 %v1237
    %1886 = vmatprep.subr.bf16.mxu0 %v1242
    %1887 = vmatpush1.bf16.msra.mxu0 %v1241
    %1888 = vmatprep.subr.bf16.mxu0 %v1246
    %1889 = vmatpush1.bf16.msra.mxu0 %v1245
    %1890 = vmatprep.subr.bf16.mxu0 %v1250
    %1891 = vmatpush1.bf16.msra.mxu0 %v1249
    %1892 = vmatprep.subr.bf16.mxu0 %v1254
    %1893 = vmatpush1.bf16.msra.mxu0 %v1253
    %1894 = vmatprep.subr.bf16.mxu0 %v1258
    %1895 = vmatpush1.bf16.msra.mxu0 %v1257
    %1896 = vmatprep.subr.bf16.mxu0 %v1262
    %1897 = vmatpush1.bf16.msra.mxu0 %v1261
    %1898 = vmatprep.subr.bf16.mxu0 %v1266
    %1899 = vmatpush1.bf16.msra.mxu0 %v1265
    %1900 = vmatprep.subr.bf16.mxu0 %v1270
    %1901 = vmatpush1.bf16.msra.mxu0 %v1269
    %1902 = vmatprep.subr.bf16.mxu0 %v1274
    %1903 = vmatpush1.bf16.msra.mxu0 %v1273
    %1904 = vmatprep.subr.bf16.mxu0 %v1278
    %1905 = vmatpush1.bf16.msra.mxu0 %v1277
    %1906 = vmatprep.subr.bf16.mxu0 %v1282
    %1907 = vmatpush1.bf16.msra.mxu0 %v1281
    %1908 = vmatprep.subr.bf16.mxu0 %v1286
    %1909 = vmatpush1.bf16.msra.mxu0 %v1285
    %1910 = vmatprep.subr.bf16.mxu0 %v1290
    %1911 = vmatpush1.bf16.msra.mxu0 %v1289
    %1912 = vmatprep.mubr.bf16.mxu0 %v112
    %1913 = vmatmul.mubr.bf16.gmra.mrb[0].mxu0 %v111
    %v1914 = vpop.f32.mrb[0].mxu0
    %v1915 = vadd.f32 %v1874, %v1914
    %v1916 = vpop.f32.mrb[0].mxu0
    %v1917 = vadd.f32 %v1876, %v1916
    %v1918 = vpop.f32.mrb[0].mxu0
    %v1919 = vpop.f32.mrb[0].mxu0
    %1920 = vdwg.mxu0
    %1921 = vmatprep.subr.bf16.mxu0 %v1294
    %1922 = vmatpush1.bf16.msra.mxu0 %v1293
    %1923 = vmatprep.subr.bf16.mxu0 %v1298
    %1924 = vmatpush1.bf16.msra.mxu0 %v1297
    %1925 = vmatprep.subr.bf16.mxu0 %v1302
    %1926 = vmatpush1.bf16.msra.mxu0 %v1301
    %1927 = vmatprep.subr.bf16.mxu0 %v1306
    %1928 = vmatpush1.bf16.msra.mxu0 %v1305
    %1929 = vmatprep.subr.bf16.mxu0 %v1310
    %1930 = vmatpush1.bf16.msra.mxu0 %v1309
    %1931 = vmatprep.subr.bf16.mxu0 %v1314
    %1932 = vmatpush1.bf16.msra.mxu0 %v1313
    %1933 = vmatprep.subr.bf16.mxu0 %v1318
    %1934 = vmatpush1.bf16.msra.mxu0 %v1317
    %1935 = vmatprep.subr.bf16.mxu0 %v1322
    %1936 = vmatpush1.bf16.msra.mxu0 %v1321
    %1937 = vmatprep.subr.bf16.mxu0 %v1326
    %1938 = vmatpush1.bf16.msra.mxu0 %v1325
    %1939 = vmatprep.subr.bf16.mxu0 %v1330
    %1940 = vmatpush1.bf16.msra.mxu0 %v1329
    %1941 = vmatprep.subr.bf16.mxu0 %v1334
    %1942 = vmatpush1.bf16.msra.mxu0 %v1333
    %1943 = vmatprep.subr.bf16.mxu0 %v1338
    %1944 = vmatpush1.bf16.msra.mxu0 %v1337
    %1945 = vmatprep.subr.bf16.mxu0 %v1342
    %1946 = vmatpush1.bf16.msra.mxu0 %v1341
    %1947 = vmatprep.subr.bf16.mxu0 %v1346
    %1948 = vmatpush1.bf16.msra.mxu0 %v1345
    %1949 = vmatprep.subr.bf16.mxu0 %v1350
    %1950 = vmatpush1.bf16.msra.mxu0 %v1349
    %1951 = vmatprep.subr.bf16.mxu0 %v1354
    %1952 = vmatpush1.bf16.msra.mxu0 %v1353
    %1953 = vmatprep.mubr.bf16.mxu0 %v114
    %1954 = vmatmul.mubr.bf16.gmra.mrb[0].mxu0 %v113
    %v1955 = vpop.f32.mrb[0].mxu0
    %v1956 = vadd.f32 %v1915, %v1955
    %v1957 = vpop.f32.mrb[0].mxu0
    %v1958 = vadd.f32 %v1917, %v1957
    %v1959 = vpop.f32.mrb[0].mxu0
    %v1960 = vpop.f32.mrb[0].mxu0
    %1961 = vdwg.mxu0
    %1962 = vmatprep.subr.bf16.mxu0 %v1358
    %1963 = vmatpush1.bf16.msra.mxu0 %v1357
    %1964 = vmatprep.subr.bf16.mxu0 %v1362
    %1965 = vmatpush1.bf16.msra.mxu0 %v1361
    %1966 = vmatprep.subr.bf16.mxu0 %v1366
    %1967 = vmatpush1.bf16.msra.mxu0 %v1365
    %1968 = vmatprep.subr.bf16.mxu0 %v1370
    %1969 = vmatpush1.bf16.msra.mxu0 %v1369
    %1970 = vmatprep.subr.bf16.mxu0 %v1374
    %1971 = vmatpush1.bf16.msra.mxu0 %v1373
    %1972 = vmatprep.subr.bf16.mxu0 %v1378
    %1973 = vmatpush1.bf16.msra.mxu0 %v1377
    %1974 = vmatprep.subr.bf16.mxu0 %v1382
    %1975 = vmatpush1.bf16.msra.mxu0 %v1381
    %1976 = vmatprep.subr.bf16.mxu0 %v1386
    %1977 = vmatpush1.bf16.msra.mxu0 %v1385
    %1978 = vmatprep.subr.bf16.mxu0 %v1390
    %1979 = vmatpush1.bf16.msra.mxu0 %v1389
    %1980 = vmatprep.subr.bf16.mxu0 %v1394
    %1981 = vmatpush1.bf16.msra.mxu0 %v1393
    %1982 = vmatprep.subr.bf16.mxu0 %v1398
    %1983 = vmatpush1.bf16.msra.mxu0 %v1397
    %1984 = vmatprep.subr.bf16.mxu0 %v1402
    %1985 = vmatpush1.bf16.msra.mxu0 %v1401
    %1986 = vmatprep.subr.bf16.mxu0 %v1406
    %1987 = vmatpush1.bf16.msra.mxu0 %v1405
    %1988 = vmatprep.subr.bf16.mxu0 %v1410
    %1989 = vmatpush1.bf16.msra.mxu0 %v1409
    %1990 = vmatprep.subr.bf16.mxu0 %v1414
    %1991 = vmatpush1.bf16.msra.mxu0 %v1413
    %1992 = vmatprep.subr.bf16.mxu0 %v1418
    %1993 = vmatpush1.bf16.msra.mxu0 %v1417
    %1994 = vmatprep.mubr.bf16.mxu0 %v116
    %1995 = vmatmul.mubr.bf16.gmra.mrb[0].mxu0 %v115
    %v1996 = vpop.f32.mrb[0].mxu0
    %v1997 = vadd.f32 %v1956, %v1996
    %v1998 = vpop.f32.mrb[0].mxu0
    %v1999 = vadd.f32 %v1958, %v1998
    %v2000 = vpop.f32.mrb[0].mxu0
    %v2001 = vpop.f32.mrb[0].mxu0
    %2002 = vdwg.mxu0
    %v2003 = vmax.f32 %v1833, 0.0
    %v2004 = vmax.f32 %v1835, 0.0
    %v2005 = vmax.f32 %v1997, 0.0
    %v2006 = vmax.f32 %v1999, 0.0
    %v2007 = vpack.c.bf16 %v2003, %v2003
    %v2008 = vpack.c.bf16 %v2004, %v2004
    %v2009 = vpack.c.bf16 %v2005, %v2005
    %v2010 = vpack.c.bf16 %v2006, %v2006
    %v2011 = vld [vmem:[#allocation5] sm:$0xff]
    %v2012 = vld [vmem:[#allocation5 + $0x8] sm:$0xff]
    %v2013 = vld [vmem:[#allocation5 + $0x10] sm:$0xff]
    %v2014 = vld [vmem:[#allocation5 + $0x18] sm:$0xff]
    %v2015 = vld [vmem:[#allocation5 + $0x20] sm:$0xff]
    %v2016 = vld [vmem:[#allocation5 + $0x28] sm:$0xff]
    %v2017 = vld [vmem:[#allocation5 + $0x30] sm:$0xff]
    %v2018 = vld [vmem:[#allocation5 + $0x38] sm:$0xff]
    %v2019 = vld [vmem:[#allocation5 + $0x40] sm:$0xff]
    %v2020 = vld [vmem:[#allocation5 + $0x48] sm:$0xff]
    %v2021 = vld [vmem:[#allocation5 + $0x50] sm:$0xff]
    %v2022 = vld [vmem:[#allocation5 + $0x58] sm:$0xff]
    %v2023 = vld [vmem:[#allocation5 + $0x60] sm:$0xff]
    %v2024 = vld [vmem:[#allocation5 + $0x68] sm:$0xff]
    %v2025 = vld [vmem:[#allocation5 + $0x70] sm:$0xff]
    %v2026 = vld [vmem:[#allocation5 + $0x78] sm:$0xff]
    %v2027 = vld [vmem:[#allocation5 + $0x80] sm:$0xff]
    %v2028 = vld [vmem:[#allocation5 + $0x88] sm:$0xff]
    %v2029 = vld [vmem:[#allocation5 + $0x90] sm:$0xff]
    %v2030 = vld [vmem:[#allocation5 + $0x98] sm:$0xff]
    %v2031 = vld [vmem:[#allocation5 + $0xa0] sm:$0xff]
    %v2032 = vld [vmem:[#allocation5 + $0xa8] sm:$0xff]
    %v2033 = vld [vmem:[#allocation5 + $0xb0] sm:$0xff]
    %v2034 = vld [vmem:[#allocation5 + $0xb8] sm:$0xff]
    %v2035 = vld [vmem:[#allocation5 + $0xc0] sm:$0xff]
    %v2036 = vld [vmem:[#allocation5 + $0xc8] sm:$0xff]
    %v2037 = vld [vmem:[#allocation5 + $0xd0] sm:$0xff]
    %v2038 = vld [vmem:[#allocation5 + $0xd8] sm:$0xff]
    %v2039 = vld [vmem:[#allocation5 + $0xe0] sm:$0xff]
    %v2040 = vld [vmem:[#allocation5 + $0xe8] sm:$0xff]
    %v2041 = vld [vmem:[#allocation5 + $0xf0] sm:$0xff]
    %v2042 = vld [vmem:[#allocation5 + $0xf8] sm:$0xff]
    %v2043 = vld [vmem:[#allocation5 + $0x100] sm:$0xff]
    %v2044 = vld [vmem:[#allocation5 + $0x108] sm:$0xff]
    %v2045 = vld [vmem:[#allocation5 + $0x110] sm:$0xff]
    %v2046 = vld [vmem:[#allocation5 + $0x118] sm:$0xff]
    %v2047 = vld [vmem:[#allocation5 + $0x120] sm:$0xff]
    %v2048 = vld [vmem:[#allocation5 + $0x128] sm:$0xff]
    %v2049 = vld [vmem:[#allocation5 + $0x130] sm:$0xff]
    %v2050 = vld [vmem:[#allocation5 + $0x138] sm:$0xff]
    %v2051 = vld [vmem:[#allocation5 + $0x140] sm:$0xff]
    %v2052 = vld [vmem:[#allocation5 + $0x148] sm:$0xff]
    %v2053 = vld [vmem:[#allocation5 + $0x150] sm:$0xff]
    %v2054 = vld [vmem:[#allocation5 + $0x158] sm:$0xff]
    %v2055 = vld [vmem:[#allocation5 + $0x160] sm:$0xff]
    %v2056 = vld [vmem:[#allocation5 + $0x168] sm:$0xff]
    %v2057 = vld [vmem:[#allocation5 + $0x170] sm:$0xff]
    %v2058 = vld [vmem:[#allocation5 + $0x178] sm:$0xff]
    %v2059 = vld [vmem:[#allocation5 + $0x180] sm:$0xff]
    %v2060 = vld [vmem:[#allocation5 + $0x188] sm:$0xff]
    %v2061 = vld [vmem:[#allocation5 + $0x190] sm:$0xff]
    %v2062 = vld [vmem:[#allocation5 + $0x198] sm:$0xff]
    %v2063 = vld [vmem:[#allocation5 + $0x1a0] sm:$0xff]
    %v2064 = vld [vmem:[#allocation5 + $0x1a8] sm:$0xff]
    %v2065 = vld [vmem:[#allocation5 + $0x1b0] sm:$0xff]
    %v2066 = vld [vmem:[#allocation5 + $0x1b8] sm:$0xff]
    %v2067 = vld [vmem:[#allocation5 + $0x1c0] sm:$0xff]
    %v2068 = vld [vmem:[#allocation5 + $0x1c8] sm:$0xff]
    %v2069 = vld [vmem:[#allocation5 + $0x1d0] sm:$0xff]
    %v2070 = vld [vmem:[#allocation5 + $0x1d8] sm:$0xff]
    %v2071 = vld [vmem:[#allocation5 + $0x1e0] sm:$0xff]
    %v2072 = vld [vmem:[#allocation5 + $0x1e8] sm:$0xff]
    %v2073 = vld [vmem:[#allocation5 + $0x1f0] sm:$0xff]
    %v2074 = vld [vmem:[#allocation5 + $0x1f8] sm:$0xff]
    %v2075 = vld [vmem:[%s4] sm:$0x3]
    %v2077 = vlaneseq
    %v2078 = vshrl.u32 %v2077, 7
    %v2079 = vsub.s32 0, %v2078
    %v2080 = vrot.slane %v2075, %v2079
    %v2081 = vlaneseq
    %v2082 = vshrl.u32 %v2081, 7
    %v2083 = vsub.s32 1, %v2082
    %v2084 = vrot.slane %v2075, %v2083
    %v2151 = vunpack.c.l.b16 %v2011
    %v2152 = vunpack.c.h.b16 %v2011
    %v2153 = vunpack.c.l.b16 %v2012
    %v2154 = vunpack.c.h.b16 %v2012
    %v2155 = vunpack.c.l.b16 %v2013
    %v2156 = vunpack.c.h.b16 %v2013
    %v2157 = vunpack.c.l.b16 %v2014
    %v2158 = vunpack.c.h.b16 %v2014
    %v2159 = vunpack.c.l.b16 %v2015
    %v2160 = vunpack.c.h.b16 %v2015
    %v2161 = vunpack.c.l.b16 %v2016
    %v2162 = vunpack.c.h.b16 %v2016
    %v2163 = vunpack.c.l.b16 %v2017
    %v2164 = vunpack.c.h.b16 %v2017
    %v2165 = vunpack.c.l.b16 %v2018
    %v2166 = vunpack.c.h.b16 %v2018
    %v2167 = vunpack.c.l.b16 %v2019
    %v2168 = vunpack.c.h.b16 %v2019
    %v2169 = vunpack.c.l.b16 %v2020
    %v2170 = vunpack.c.h.b16 %v2020
    %v2171 = vunpack.c.l.b16 %v2021
    %v2172 = vunpack.c.h.b16 %v2021
    %v2173 = vunpack.c.l.b16 %v2022
    %v2174 = vunpack.c.h.b16 %v2022
    %v2175 = vunpack.c.l.b16 %v2023
    %v2176 = vunpack.c.h.b16 %v2023
    %v2177 = vunpack.c.l.b16 %v2024
    %v2178 = vunpack.c.h.b16 %v2024
    %v2179 = vunpack.c.l.b16 %v2025
    %v2180 = vunpack.c.h.b16 %v2025
    %v2181 = vunpack.c.l.b16 %v2026
    %v2182 = vunpack.c.h.b16 %v2026
    %v2183 = vunpack.c.l.b16 %v2027
    %v2184 = vunpack.c.h.b16 %v2027
    %v2185 = vunpack.c.l.b16 %v2028
    %v2186 = vunpack.c.h.b16 %v2028
    %v2187 = vunpack.c.l.b16 %v2029
    %v2188 = vunpack.c.h.b16 %v2029
    %v2189 = vunpack.c.l.b16 %v2030
    %v2190 = vunpack.c.h.b16 %v2030
    %v2191 = vunpack.c.l.b16 %v2031
    %v2192 = vunpack.c.h.b16 %v2031
    %v2193 = vunpack.c.l.b16 %v2032
    %v2194 = vunpack.c.h.b16 %v2032
    %v2195 = vunpack.c.l.b16 %v2033
    %v2196 = vunpack.c.h.b16 %v2033
    %v2197 = vunpack.c.l.b16 %v2034
    %v2198 = vunpack.c.h.b16 %v2034
    %v2199 = vunpack.c.l.b16 %v2035
    %v2200 = vunpack.c.h.b16 %v2035
    %v2201 = vunpack.c.l.b16 %v2036
    %v2202 = vunpack.c.h.b16 %v2036
    %v2203 = vunpack.c.l.b16 %v2037
    %v2204 = vunpack.c.h.b16 %v2037
    %v2205 = vunpack.c.l.b16 %v2038
    %v2206 = vunpack.c.h.b16 %v2038
    %v2207 = vunpack.c.l.b16 %v2039
    %v2208 = vunpack.c.h.b16 %v2039
    %v2209 = vunpack.c.l.b16 %v2040
    %v2210 = vunpack.c.h.b16 %v2040
    %v2211 = vunpack.c.l.b16 %v2041
    %v2212 = vunpack.c.h.b16 %v2041
    %v2213 = vunpack.c.l.b16 %v2042
    %v2214 = vunpack.c.h.b16 %v2042
    %v2215 = vunpack.c.l.b16 %v2043
    %v2216 = vunpack.c.h.b16 %v2043
    %v2217 = vunpack.c.l.b16 %v2044
    %v2218 = vunpack.c.h.b16 %v2044
    %v2219 = vunpack.c.l.b16 %v2045
    %v2220 = vunpack.c.h.b16 %v2045
    %v2221 = vunpack.c.l.b16 %v2046
    %v2222 = vunpack.c.h.b16 %v2046
    %v2223 = vunpack.c.l.b16 %v2047
    %v2224 = vunpack.c.h.b16 %v2047
    %v2225 = vunpack.c.l.b16 %v2048
    %v2226 = vunpack.c.h.b16 %v2048
    %v2227 = vunpack.c.l.b16 %v2049
    %v2228 = vunpack.c.h.b16 %v2049
    %v2229 = vunpack.c.l.b16 %v2050
    %v2230 = vunpack.c.h.b16 %v2050
    %v2231 = vunpack.c.l.b16 %v2051
    %v2232 = vunpack.c.h.b16 %v2051
    %v2233 = vunpack.c.l.b16 %v2052
    %v2234 = vunpack.c.h.b16 %v2052
    %v2235 = vunpack.c.l.b16 %v2053
    %v2236 = vunpack.c.h.b16 %v2053
    %v2237 = vunpack.c.l.b16 %v2054
    %v2238 = vunpack.c.h.b16 %v2054
    %v2239 = vunpack.c.l.b16 %v2055
    %v2240 = vunpack.c.h.b16 %v2055
    %v2241 = vunpack.c.l.b16 %v2056
    %v2242 = vunpack.c.h.b16 %v2056
    %v2243 = vunpack.c.l.b16 %v2057
    %v2244 = vunpack.c.h.b16 %v2057
    %v2245 = vunpack.c.l.b16 %v2058
    %v2246 = vunpack.c.h.b16 %v2058
    %v2247 = vunpack.c.l.b16 %v2059
    %v2248 = vunpack.c.h.b16 %v2059
    %v2249 = vunpack.c.l.b16 %v2060
    %v2250 = vunpack.c.h.b16 %v2060
    %v2251 = vunpack.c.l.b16 %v2061
    %v2252 = vunpack.c.h.b16 %v2061
    %v2253 = vunpack.c.l.b16 %v2062
    %v2254 = vunpack.c.h.b16 %v2062
    %v2255 = vunpack.c.l.b16 %v2063
    %v2256 = vunpack.c.h.b16 %v2063
    %v2257 = vunpack.c.l.b16 %v2064
    %v2258 = vunpack.c.h.b16 %v2064
    %v2259 = vunpack.c.l.b16 %v2065
    %v2260 = vunpack.c.h.b16 %v2065
    %v2261 = vunpack.c.l.b16 %v2066
    %v2262 = vunpack.c.h.b16 %v2066
    %v2263 = vunpack.c.l.b16 %v2067
    %v2264 = vunpack.c.h.b16 %v2067
    %v2265 = vunpack.c.l.b16 %v2068
    %v2266 = vunpack.c.h.b16 %v2068
    %v2267 = vunpack.c.l.b16 %v2069
    %v2268 = vunpack.c.h.b16 %v2069
    %v2269 = vunpack.c.l.b16 %v2070
    %v2270 = vunpack.c.h.b16 %v2070
    %v2271 = vunpack.c.l.b16 %v2071
    %v2272 = vunpack.c.h.b16 %v2071
    %v2273 = vunpack.c.l.b16 %v2072
    %v2274 = vunpack.c.h.b16 %v2072
    %v2275 = vunpack.c.l.b16 %v2073
    %v2276 = vunpack.c.h.b16 %v2073
    %v2277 = vunpack.c.l.b16 %v2074
    %v2278 = vunpack.c.h.b16 %v2074
    %v2279 = vpack.c.b16 %v2153, %v2151
    %v2280 = vpack.c.b16 %v2154, %v2152
    %v2281 = vpack.c.b16 %v2157, %v2155
    %v2282 = vpack.c.b16 %v2158, %v2156
    %v2283 = vpack.c.b16 %v2161, %v2159
    %v2284 = vpack.c.b16 %v2162, %v2160
    %v2285 = vpack.c.b16 %v2165, %v2163
    %v2286 = vpack.c.b16 %v2166, %v2164
    %v2287 = vpack.c.b16 %v2169, %v2167
    %v2288 = vpack.c.b16 %v2170, %v2168
    %v2289 = vpack.c.b16 %v2173, %v2171
    %v2290 = vpack.c.b16 %v2174, %v2172
    %v2291 = vpack.c.b16 %v2177, %v2175
    %v2292 = vpack.c.b16 %v2178, %v2176
    %v2293 = vpack.c.b16 %v2181, %v2179
    %v2294 = vpack.c.b16 %v2182, %v2180
    %v2295 = vpack.c.b16 %v2185, %v2183
    %v2296 = vpack.c.b16 %v2186, %v2184
    %v2297 = vpack.c.b16 %v2189, %v2187
    %v2298 = vpack.c.b16 %v2190, %v2188
    %v2299 = vpack.c.b16 %v2193, %v2191
    %v2300 = vpack.c.b16 %v2194, %v2192
    %v2301 = vpack.c.b16 %v2197, %v2195
    %v2302 = vpack.c.b16 %v2198, %v2196
    %v2303 = vpack.c.b16 %v2201, %v2199
    %v2304 = vpack.c.b16 %v2202, %v2200
    %v2305 = vpack.c.b16 %v2205, %v2203
    %v2306 = vpack.c.b16 %v2206, %v2204
    %v2307 = vpack.c.b16 %v2209, %v2207
    %v2308 = vpack.c.b16 %v2210, %v2208
    %v2309 = vpack.c.b16 %v2213, %v2211
    %v2310 = vpack.c.b16 %v2214, %v2212
    %v2311 = vpack.c.b16 %v2217, %v2215
    %v2312 = vpack.c.b16 %v2218, %v2216
    %v2313 = vpack.c.b16 %v2221, %v2219
    %v2314 = vpack.c.b16 %v2222, %v2220
    %v2315 = vpack.c.b16 %v2225, %v2223
    %v2316 = vpack.c.b16 %v2226, %v2224
    %v2317 = vpack.c.b16 %v2229, %v2227
    %v2318 = vpack.c.b16 %v2230, %v2228
    %v2319 = vpack.c.b16 %v2233, %v2231
    %v2320 = vpack.c.b16 %v2234, %v2232
    %v2321 = vpack.c.b16 %v2237, %v2235
    %v2322 = vpack.c.b16 %v2238, %v2236
    %v2323 = vpack.c.b16 %v2241, %v2239
    %v2324 = vpack.c.b16 %v2242, %v2240
    %v2325 = vpack.c.b16 %v2245, %v2243
    %v2326 = vpack.c.b16 %v2246, %v2244
    %v2327 = vpack.c.b16 %v2249, %v2247
    %v2328 = vpack.c.b16 %v2250, %v2248
    %v2329 = vpack.c.b16 %v2253, %v2251
    %v2330 = vpack.c.b16 %v2254, %v2252
    %v2331 = vpack.c.b16 %v2257, %v2255
    %v2332 = vpack.c.b16 %v2258, %v2256
    %v2333 = vpack.c.b16 %v2261, %v2259
    %v2334 = vpack.c.b16 %v2262, %v2260
    %v2335 = vpack.c.b16 %v2265, %v2263
    %v2336 = vpack.c.b16 %v2266, %v2264
    %v2337 = vpack.c.b16 %v2269, %v2267
    %v2338 = vpack.c.b16 %v2270, %v2268
    %v2339 = vpack.c.b16 %v2273, %v2271
    %v2340 = vpack.c.b16 %v2274, %v2272
    %v2341 = vpack.c.b16 %v2277, %v2275
    %v2342 = vpack.c.b16 %v2278, %v2276
    %2407 = vmatprep.subr.bf16.mxu0 %v2280
    %2408 = vmatpush1.bf16.msra.mxu0 %v2279
    %2409 = vmatprep.subr.bf16.mxu0 %v2282
    %2410 = vmatpush1.bf16.msra.mxu0 %v2281
    %2411 = vmatprep.subr.bf16.mxu0 %v2284
    %2412 = vmatpush1.bf16.msra.mxu0 %v2283
    %2413 = vmatprep.subr.bf16.mxu0 %v2286
    %2414 = vmatpush1.bf16.msra.mxu0 %v2285
    %2415 = vmatprep.subr.bf16.mxu0 %v2288
    %2416 = vmatpush1.bf16.msra.mxu0 %v2287
    %2417 = vmatprep.subr.bf16.mxu0 %v2290
    %2418 = vmatpush1.bf16.msra.mxu0 %v2289
    %2419 = vmatprep.subr.bf16.mxu0 %v2292
    %2420 = vmatpush1.bf16.msra.mxu0 %v2291
    %2421 = vmatprep.subr.bf16.mxu0 %v2294
    %2422 = vmatpush1.bf16.msra.mxu0 %v2293
    %2423 = vmatprep.subr.bf16.mxu0 %v2296
    %2424 = vmatpush1.bf16.msra.mxu0 %v2295
    %2425 = vmatprep.subr.bf16.mxu0 %v2298
    %2426 = vmatpush1.bf16.msra.mxu0 %v2297
    %2427 = vmatprep.subr.bf16.mxu0 %v2300
    %2428 = vmatpush1.bf16.msra.mxu0 %v2299
    %2429 = vmatprep.subr.bf16.mxu0 %v2302
    %2430 = vmatpush1.bf16.msra.mxu0 %v2301
    %2431 = vmatprep.subr.bf16.mxu0 %v2304
    %2432 = vmatpush1.bf16.msra.mxu0 %v2303
    %2433 = vmatprep.subr.bf16.mxu0 %v2306
    %2434 = vmatpush1.bf16.msra.mxu0 %v2305
    %2435 = vmatprep.subr.bf16.mxu0 %v2308
    %2436 = vmatpush1.bf16.msra.mxu0 %v2307
    %2437 = vmatprep.subr.bf16.mxu0 %v2310
    %2438 = vmatpush1.bf16.msra.mxu0 %v2309
    %2439 = vmatprep.mubr.bf16.mxu0 %v2008
    %2440 = vmatmul.mubr.bf16.gmra.mrb[0].mxu0 %v2007
    %v2441 = vpop.f32.mrb[0].mxu0
    %v2442 = vadd.f32 %v2080, %v2441
    %v2443 = vpop.f32.mrb[0].mxu0
    %v2444 = vadd.f32 %v2084, %v2443
    %v2445 = vpop.f32.mrb[0].mxu0
    %v2446 = vpop.f32.mrb[0].mxu0
    %2447 = vdwg.mxu0
    %2448 = vmatprep.subr.bf16.mxu0 %v2312
    %2449 = vmatpush1.bf16.msra.mxu0 %v2311
    %2450 = vmatprep.subr.bf16.mxu0 %v2314
    %2451 = vmatpush1.bf16.msra.mxu0 %v2313
    %2452 = vmatprep.subr.bf16.mxu0 %v2316
    %2453 = vmatpush1.bf16.msra.mxu0 %v2315
    %2454 = vmatprep.subr.bf16.mxu0 %v2318
    %2455 = vmatpush1.bf16.msra.mxu0 %v2317
    %2456 = vmatprep.subr.bf16.mxu0 %v2320
    %2457 = vmatpush1.bf16.msra.mxu0 %v2319
    %2458 = vmatprep.subr.bf16.mxu0 %v2322
    %2459 = vmatpush1.bf16.msra.mxu0 %v2321
    %2460 = vmatprep.subr.bf16.mxu0 %v2324
    %2461 = vmatpush1.bf16.msra.mxu0 %v2323
    %2462 = vmatprep.subr.bf16.mxu0 %v2326
    %2463 = vmatpush1.bf16.msra.mxu0 %v2325
    %2464 = vmatprep.subr.bf16.mxu0 %v2328
    %2465 = vmatpush1.bf16.msra.mxu0 %v2327
    %2466 = vmatprep.subr.bf16.mxu0 %v2330
    %2467 = vmatpush1.bf16.msra.mxu0 %v2329
    %2468 = vmatprep.subr.bf16.mxu0 %v2332
    %2469 = vmatpush1.bf16.msra.mxu0 %v2331
    %2470 = vmatprep.subr.bf16.mxu0 %v2334
    %2471 = vmatpush1.bf16.msra.mxu0 %v2333
    %2472 = vmatprep.subr.bf16.mxu0 %v2336
    %2473 = vmatpush1.bf16.msra.mxu0 %v2335
    %2474 = vmatprep.subr.bf16.mxu0 %v2338
    %2475 = vmatpush1.bf16.msra.mxu0 %v2337
    %2476 = vmatprep.subr.bf16.mxu0 %v2340
    %2477 = vmatpush1.bf16.msra.mxu0 %v2339
    %2478 = vmatprep.subr.bf16.mxu0 %v2342
    %2479 = vmatpush1.bf16.msra.mxu0 %v2341
    %2480 = vmatprep.mubr.bf16.mxu0 %v2010
    %2481 = vmatmul.mubr.bf16.gmra.mrb[0].mxu0 %v2009
    %v2482 = vpop.f32.mrb[0].mxu0
    %v2483 = vadd.f32 %v2442, %v2482
    %v2484 = vpop.f32.mrb[0].mxu0
    %v2485 = vadd.f32 %v2444, %v2484
    %v2486 = vpop.f32.mrb[0].mxu0
    %v2487 = vpop.f32.mrb[0].mxu0
    %2488 = vdwg.mxu0
    %v2489 = vmax.f32 %v2483, 0.0
    %v2490 = vmax.f32 %v2485, 0.0
    %v2491 = vpack.c.bf16 %v2489, %v2489
    %v2492 = vpack.c.bf16 %v2490, %v2490
    %v2493 = vld [vmem:[%s5] sm:$0xf]
    %v2494 = vld [vmem:[%s5 + $0x4] sm:$0xf]
    %v2495 = vld [vmem:[%s5 + $0x8] sm:$0xf]
    %v2496 = vld [vmem:[%s5 + $0xc] sm:$0xf]
    %v2497 = vld [vmem:[%s5 + $0x10] sm:$0xf]
    %v2498 = vld [vmem:[%s5 + $0x14] sm:$0xf]
    %v2499 = vld [vmem:[%s5 + $0x18] sm:$0xf]
    %v2500 = vld [vmem:[%s5 + $0x1c] sm:$0xf]
    %v2501 = vld [vmem:[%s5 + $0x20] sm:$0xf]
    %v2502 = vld [vmem:[%s5 + $0x24] sm:$0xf]
    %v2503 = vld [vmem:[%s5 + $0x28] sm:$0xf]
    %v2504 = vld [vmem:[%s5 + $0x2c] sm:$0xf]
    %v2505 = vld [vmem:[%s5 + $0x30] sm:$0xf]
    %v2506 = vld [vmem:[%s5 + $0x34] sm:$0xf]
    %v2507 = vld [vmem:[%s5 + $0x38] sm:$0xf]
    %v2508 = vld [vmem:[%s5 + $0x3c] sm:$0xf]
    %v2509 = vld [vmem:[%s5 + $0x40] sm:$0xf]
    %v2510 = vld [vmem:[%s5 + $0x44] sm:$0xf]
    %v2511 = vld [vmem:[%s5 + $0x48] sm:$0xf]
    %v2512 = vld [vmem:[%s5 + $0x4c] sm:$0xf]
    %v2513 = vld [vmem:[%s5 + $0x50] sm:$0xf]
    %v2514 = vld [vmem:[%s5 + $0x54] sm:$0xf]
    %v2515 = vld [vmem:[%s5 + $0x58] sm:$0xf]
    %v2516 = vld [vmem:[%s5 + $0x5c] sm:$0xf]
    %v2517 = vld [vmem:[%s5 + $0x60] sm:$0xf]
    %v2518 = vld [vmem:[%s5 + $0x64] sm:$0xf]
    %v2519 = vld [vmem:[%s5 + $0x68] sm:$0xf]
    %v2520 = vld [vmem:[%s5 + $0x6c] sm:$0xf]
    %v2521 = vld [vmem:[%s5 + $0x70] sm:$0xf]
    %v2522 = vld [vmem:[%s5 + $0x74] sm:$0xf]
    %v2523 = vld [vmem:[%s5 + $0x78] sm:$0xf]
    %v2524 = vld [vmem:[%s5 + $0x7c] sm:$0xf]
    %v2525 = vld [vmem:[%s6] sm:$0x1]
    %v2527 = vlaneseq
    %v2528 = vshrl.u32 %v2527, 7
    %v2529 = vsub.s32 0, %v2528
    %v2530 = vrot.slane %v2525, %v2529
    %v2564 = vunpack.c.l.b16 %v2493
    %v2565 = vunpack.c.l.b16 %v2494
    %v2566 = vunpack.c.l.b16 %v2495
    %v2567 = vunpack.c.l.b16 %v2496
    %v2568 = vunpack.c.l.b16 %v2497
    %v2569 = vunpack.c.l.b16 %v2498
    %v2570 = vunpack.c.l.b16 %v2499
    %v2571 = vunpack.c.l.b16 %v2500
    %v2572 = vunpack.c.l.b16 %v2501
    %v2573 = vunpack.c.l.b16 %v2502
    %v2574 = vunpack.c.l.b16 %v2503
    %v2575 = vunpack.c.l.b16 %v2504
    %v2576 = vunpack.c.l.b16 %v2505
    %v2577 = vunpack.c.l.b16 %v2506
    %v2578 = vunpack.c.l.b16 %v2507
    %v2579 = vunpack.c.l.b16 %v2508
    %v2580 = vunpack.c.l.b16 %v2509
    %v2581 = vunpack.c.l.b16 %v2510
    %v2582 = vunpack.c.l.b16 %v2511
    %v2583 = vunpack.c.l.b16 %v2512
    %v2584 = vunpack.c.l.b16 %v2513
    %v2585 = vunpack.c.l.b16 %v2514
    %v2586 = vunpack.c.l.b16 %v2515
    %v2587 = vunpack.c.l.b16 %v2516
    %v2588 = vunpack.c.l.b16 %v2517
    %v2589 = vunpack.c.l.b16 %v2518
    %v2590 = vunpack.c.l.b16 %v2519
    %v2591 = vunpack.c.l.b16 %v2520
    %v2592 = vunpack.c.l.b16 %v2521
    %v2593 = vunpack.c.l.b16 %v2522
    %v2594 = vunpack.c.l.b16 %v2523
    %v2595 = vunpack.c.l.b16 %v2524
    %v2596 = vpack.c.b16 %v2565, %v2564
    %v2597 = vpack.c.b16 %v2567, %v2566
    %v2598 = vpack.c.b16 %v2569, %v2568
    %v2599 = vpack.c.b16 %v2571, %v2570
    %v2600 = vpack.c.b16 %v2573, %v2572
    %v2601 = vpack.c.b16 %v2575, %v2574
    %v2602 = vpack.c.b16 %v2577, %v2576
    %v2603 = vpack.c.b16 %v2579, %v2578
    %v2604 = vpack.c.b16 %v2581, %v2580
    %v2605 = vpack.c.b16 %v2583, %v2582
    %v2606 = vpack.c.b16 %v2585, %v2584
    %v2607 = vpack.c.b16 %v2587, %v2586
    %v2608 = vpack.c.b16 %v2589, %v2588
    %v2609 = vpack.c.b16 %v2591, %v2590
    %v2610 = vpack.c.b16 %v2593, %v2592
    %v2611 = vpack.c.b16 %v2595, %v2594
    %2628 = vmatprep.subr.bf16.mxu0 0
    %2629 = vmatpush1.bf16.msra.mxu0 %v2596
    %2630 = vmatprep.subr.bf16.mxu0 0
    %2631 = vmatpush1.bf16.msra.mxu0 %v2597
    %2632 = vmatprep.subr.bf16.mxu0 0
    %2633 = vmatpush1.bf16.msra.mxu0 %v2598
    %2634 = vmatprep.subr.bf16.mxu0 0
    %2635 = vmatpush1.bf16.msra.mxu0 %v2599
    %2636 = vmatprep.subr.bf16.mxu0 0
    %2637 = vmatpush1.bf16.msra.mxu0 %v2600
    %2638 = vmatprep.subr.bf16.mxu0 0
    %2639 = vmatpush1.bf16.msra.mxu0 %v2601
    %2640 = vmatprep.subr.bf16.mxu0 0
    %2641 = vmatpush1.bf16.msra.mxu0 %v2602
    %2642 = vmatprep.subr.bf16.mxu0 0
    %2643 = vmatpush1.bf16.msra.mxu0 %v2603
    %2644 = vmatprep.subr.bf16.mxu0 0
    %2645 = vmatpush1.bf16.msra.mxu0 %v2604
    %2646 = vmatprep.subr.bf16.mxu0 0
    %2647 = vmatpush1.bf16.msra.mxu0 %v2605
    %2648 = vmatprep.subr.bf16.mxu0 0
    %2649 = vmatpush1.bf16.msra.mxu0 %v2606
    %2650 = vmatprep.subr.bf16.mxu0 0
    %2651 = vmatpush1.bf16.msra.mxu0 %v2607
    %2652 = vmatprep.subr.bf16.mxu0 0
    %2653 = vmatpush1.bf16.msra.mxu0 %v2608
    %2654 = vmatprep.subr.bf16.mxu0 0
    %2655 = vmatpush1.bf16.msra.mxu0 %v2609
    %2656 = vmatprep.subr.bf16.mxu0 0
    %2657 = vmatpush1.bf16.msra.mxu0 %v2610
    %2658 = vmatprep.subr.bf16.mxu0 0
    %2659 = vmatpush1.bf16.msra.mxu0 %v2611
    %2660 = vmatprep.mubr.bf16.mxu0 %v2492
    %2661 = vmatmul.mubr.bf16.gmra.mrb[0].mxu0 %v2491
    %v2662 = vpop.f32.mrb[0].mxu0
    %v2663 = vadd.f32 %v2530, %v2662
    %v2664 = vpop.f32.mrb[0].mxu0
    %v2665 = vpop.f32.mrb[0].mxu0
    %v2666 = vpop.f32.mrb[0].mxu0
    %2667 = vdwg.mxu0
    %v2668 = vmax.f32 %v2663, 0.0
    %v2669 = vpack.c.bf16 %v2668, %v2668
    %v2670 = vld [vmem:[%s7] sm:$0xff]
    %v2671 = vld [vmem:[%s7 + $0x8] sm:$0xff]
    %v2672 = vld [vmem:[%s7 + $0x10] sm:$0xff]
    %v2673 = vld [vmem:[%s7 + $0x18] sm:$0xff]
    %v2674 = vld [vmem:[%s7 + $0x20] sm:$0xff]
    %v2675 = vld [vmem:[%s7 + $0x28] sm:$0xff]
    %v2676 = vld [vmem:[%s7 + $0x30] sm:$0xff]
    %v2677 = vld [vmem:[%s7 + $0x38] sm:$0xff]
    %v2678 = vld [vmem:[%s8] sm:$0x3]
    %v2680 = vlaneseq
    %v2681 = vshrl.u32 %v2680, 7
    %v2682 = vsub.s32 0, %v2681
    %v2683 = vrot.slane %v2678, %v2682
    %v2684 = vlaneseq
    %v2685 = vshrl.u32 %v2684, 7
    %v2686 = vsub.s32 1, %v2685
    %v2687 = vrot.slane %v2678, %v2686
    %v2698 = vunpack.c.l.b16 %v2670
    %v2699 = vunpack.c.h.b16 %v2670
    %v2700 = vunpack.c.l.b16 %v2671
    %v2701 = vunpack.c.h.b16 %v2671
    %v2702 = vunpack.c.l.b16 %v2672
    %v2703 = vunpack.c.h.b16 %v2672
    %v2704 = vunpack.c.l.b16 %v2673
    %v2705 = vunpack.c.h.b16 %v2673
    %v2706 = vunpack.c.l.b16 %v2674
    %v2707 = vunpack.c.h.b16 %v2674
    %v2708 = vunpack.c.l.b16 %v2675
    %v2709 = vunpack.c.h.b16 %v2675
    %v2710 = vunpack.c.l.b16 %v2676
    %v2711 = vunpack.c.h.b16 %v2676
    %v2712 = vunpack.c.l.b16 %v2677
    %v2713 = vunpack.c.h.b16 %v2677
    %v2714 = vpack.c.b16 %v2700, %v2698
    %v2715 = vpack.c.b16 %v2701, %v2699
    %v2716 = vpack.c.b16 %v2704, %v2702
    %v2717 = vpack.c.b16 %v2705, %v2703
    %v2718 = vpack.c.b16 %v2708, %v2706
    %v2719 = vpack.c.b16 %v2709, %v2707
    %v2720 = vpack.c.b16 %v2712, %v2710
    %v2721 = vpack.c.b16 %v2713, %v2711
    %vm2730 = vcmask 523264
    %v2732 = vsel %vm2730, %v2669, 0
    %2734 = vmatprep.subr.bf16.mxu0 %v2715
    %2735 = vmatpush1.bf16.msra.mxu0 %v2714
    %2736 = vmatprep.subr.bf16.mxu0 %v2717
    %2737 = vmatpush1.bf16.msra.mxu0 %v2716
    %2738 = vmatprep.subr.bf16.mxu0 %v2719
    %2739 = vmatpush1.bf16.msra.mxu0 %v2718
    %2740 = vmatprep.subr.bf16.mxu0 %v2721
    %2741 = vmatpush1.bf16.msra.mxu0 %v2720
    %2742 = vmatprep.subr.bf16.mxu0 0
    %2743 = vmatpush1.bf16.msra.mxu0 0
    %2744 = vmatprep.subr.bf16.mxu0 0
    %2745 = vmatpush1.bf16.msra.mxu0 0
    %2746 = vmatprep.subr.bf16.mxu0 0
    %2747 = vmatpush1.bf16.msra.mxu0 0
    %2748 = vmatprep.subr.bf16.mxu0 0
    %2749 = vmatpush1.bf16.msra.mxu0 0
    %2750 = vmatprep.subr.bf16.mxu0 0
    %2751 = vmatpush1.bf16.msra.mxu0 0
    %2752 = vmatprep.subr.bf16.mxu0 0
    %2753 = vmatpush1.bf16.msra.mxu0 0
    %2754 = vmatprep.subr.bf16.mxu0 0
    %2755 = vmatpush1.bf16.msra.mxu0 0
    %2756 = vmatprep.subr.bf16.mxu0 0
    %2757 = vmatpush1.bf16.msra.mxu0 0
    %2758 = vmatprep.subr.bf16.mxu0 0
    %2759 = vmatpush1.bf16.msra.mxu0 0
    %2760 = vmatprep.subr.bf16.mxu0 0
    %2761 = vmatpush1.bf16.msra.mxu0 0
    %2762 = vmatprep.subr.bf16.mxu0 0
    %2763 = vmatpush1.bf16.msra.mxu0 0
    %2764 = vmatprep.subr.bf16.mxu0 0
    %2765 = vmatpush1.bf16.msra.mxu0 0
    %2766 = vmatprep.mubr.bf16.mxu0 0
    %2767 = vmatmul.mubr.bf16.gmra.mrb[0].mxu0 %v2732
    %v2768 = vpop.f32.mrb[0].mxu0
    %v2769 = vadd.f32 %v2683, %v2768
    %v2770 = vpop.f32.mrb[0].mxu0
    %v2771 = vadd.f32 %v2687, %v2770
    %v2772 = vpop.f32.mrb[0].mxu0
    %v2773 = vpop.f32.mrb[0].mxu0
    %2774 = vdwg.mxu0
    %v2775 = vmax.f32 %v2769, 0.0
    %v2776 = vmax.f32 %v2771, 0.0
    %v2777 = vpack.c.bf16 %v2775, %v2775
    %v2778 = vpack.c.bf16 %v2776, %v2776
    %v2779 = vld [vmem:[#allocation7] sm:$0xff]
    %v2780 = vld [vmem:[#allocation7 + $0x8] sm:$0xff]
    %v2781 = vld [vmem:[#allocation7 + $0x10] sm:$0xff]
    %v2782 = vld [vmem:[#allocation7 + $0x18] sm:$0xff]
    %v2783 = vld [vmem:[#allocation7 + $0x20] sm:$0xff]
    %v2784 = vld [vmem:[#allocation7 + $0x28] sm:$0xff]
    %v2785 = vld [vmem:[#allocation7 + $0x30] sm:$0xff]
    %v2786 = vld [vmem:[#allocation7 + $0x38] sm:$0xff]
    %v2787 = vld [vmem:[#allocation7 + $0x40] sm:$0xff]
    %v2788 = vld [vmem:[#allocation7 + $0x48] sm:$0xff]
    %v2789 = vld [vmem:[#allocation7 + $0x50] sm:$0xff]
    %v2790 = vld [vmem:[#allocation7 + $0x58] sm:$0xff]
    %v2791 = vld [vmem:[#allocation7 + $0x60] sm:$0xff]
    %v2792 = vld [vmem:[#allocation7 + $0x68] sm:$0xff]
    %v2793 = vld [vmem:[#allocation7 + $0x70] sm:$0xff]
    %v2794 = vld [vmem:[#allocation7 + $0x78] sm:$0xff]
    %v2795 = vld [vmem:[#allocation7 + $0x80] sm:$0xff]
    %v2796 = vld [vmem:[#allocation7 + $0x88] sm:$0xff]
    %v2797 = vld [vmem:[#allocation7 + $0x90] sm:$0xff]
    %v2798 = vld [vmem:[#allocation7 + $0x98] sm:$0xff]
    %v2799 = vld [vmem:[#allocation7 + $0xa0] sm:$0xff]
    %v2800 = vld [vmem:[#allocation7 + $0xa8] sm:$0xff]
    %v2801 = vld [vmem:[#allocation7 + $0xb0] sm:$0xff]
    %v2802 = vld [vmem:[#allocation7 + $0xb8] sm:$0xff]
    %v2803 = vld [vmem:[#allocation7 + $0xc0] sm:$0xff]
    %v2804 = vld [vmem:[#allocation7 + $0xc8] sm:$0xff]
    %v2805 = vld [vmem:[#allocation7 + $0xd0] sm:$0xff]
    %v2806 = vld [vmem:[#allocation7 + $0xd8] sm:$0xff]
    %v2807 = vld [vmem:[#allocation7 + $0xe0] sm:$0xff]
    %v2808 = vld [vmem:[#allocation7 + $0xe8] sm:$0xff]
    %v2809 = vld [vmem:[#allocation7 + $0xf0] sm:$0xff]
    %v2810 = vld [vmem:[#allocation7 + $0xf8] sm:$0xff]
    %v2811 = vld [vmem:[#allocation7 + $0x100] sm:$0xff]
    %v2812 = vld [vmem:[#allocation7 + $0x108] sm:$0xff]
    %v2813 = vld [vmem:[#allocation7 + $0x110] sm:$0xff]
    %v2814 = vld [vmem:[#allocation7 + $0x118] sm:$0xff]
    %v2815 = vld [vmem:[#allocation7 + $0x120] sm:$0xff]
    %v2816 = vld [vmem:[#allocation7 + $0x128] sm:$0xff]
    %v2817 = vld [vmem:[#allocation7 + $0x130] sm:$0xff]
    %v2818 = vld [vmem:[#allocation7 + $0x138] sm:$0xff]
    %v2819 = vld [vmem:[#allocation7 + $0x140] sm:$0xff]
    %v2820 = vld [vmem:[#allocation7 + $0x148] sm:$0xff]
    %v2821 = vld [vmem:[#allocation7 + $0x150] sm:$0xff]
    %v2822 = vld [vmem:[#allocation7 + $0x158] sm:$0xff]
    %v2823 = vld [vmem:[#allocation7 + $0x160] sm:$0xff]
    %v2824 = vld [vmem:[#allocation7 + $0x168] sm:$0xff]
    %v2825 = vld [vmem:[#allocation7 + $0x170] sm:$0xff]
    %v2826 = vld [vmem:[#allocation7 + $0x178] sm:$0xff]
    %v2827 = vld [vmem:[#allocation7 + $0x180] sm:$0xff]
    %v2828 = vld [vmem:[#allocation7 + $0x188] sm:$0xff]
    %v2829 = vld [vmem:[#allocation7 + $0x190] sm:$0xff]
    %v2830 = vld [vmem:[#allocation7 + $0x198] sm:$0xff]
    %v2831 = vld [vmem:[#allocation7 + $0x1a0] sm:$0xff]
    %v2832 = vld [vmem:[#allocation7 + $0x1a8] sm:$0xff]
    %v2833 = vld [vmem:[#allocation7 + $0x1b0] sm:$0xff]
    %v2834 = vld [vmem:[#allocation7 + $0x1b8] sm:$0xff]
    %v2835 = vld [vmem:[#allocation7 + $0x1c0] sm:$0xff]
    %v2836 = vld [vmem:[#allocation7 + $0x1c8] sm:$0xff]
    %v2837 = vld [vmem:[#allocation7 + $0x1d0] sm:$0xff]
    %v2838 = vld [vmem:[#allocation7 + $0x1d8] sm:$0xff]
    %v2839 = vld [vmem:[#allocation7 + $0x1e0] sm:$0xff]
    %v2840 = vld [vmem:[#allocation7 + $0x1e8] sm:$0xff]
    %v2841 = vld [vmem:[#allocation7 + $0x1f0] sm:$0xff]
    %v2842 = vld [vmem:[#allocation7 + $0x1f8] sm:$0xff]
    %v2843 = vld [vmem:[%s10] sm:$0xf]
    %v2845 = vlaneseq
    %v2846 = vshrl.u32 %v2845, 7
    %v2847 = vsub.s32 0, %v2846
    %v2848 = vrot.slane %v2843, %v2847
    %v2849 = vlaneseq
    %v2850 = vshrl.u32 %v2849, 7
    %v2851 = vsub.s32 1, %v2850
    %v2852 = vrot.slane %v2843, %v2851
    %v2853 = vlaneseq
    %v2854 = vshrl.u32 %v2853, 7
    %v2855 = vsub.s32 2, %v2854
    %v2856 = vrot.slane %v2843, %v2855
    %v2857 = vlaneseq
    %v2858 = vshrl.u32 %v2857, 7
    %v2859 = vsub.s32 3, %v2858
    %v2860 = vrot.slane %v2843, %v2859
    %v2929 = vunpack.c.l.b16 %v2779
    %v2930 = vunpack.c.h.b16 %v2779
    %v2931 = vunpack.c.l.b16 %v2780
    %v2932 = vunpack.c.h.b16 %v2780
    %v2933 = vunpack.c.l.b16 %v2781
    %v2934 = vunpack.c.h.b16 %v2781
    %v2935 = vunpack.c.l.b16 %v2782
    %v2936 = vunpack.c.h.b16 %v2782
    %v2937 = vunpack.c.l.b16 %v2783
    %v2938 = vunpack.c.h.b16 %v2783
    %v2939 = vunpack.c.l.b16 %v2784
    %v2940 = vunpack.c.h.b16 %v2784
    %v2941 = vunpack.c.l.b16 %v2785
    %v2942 = vunpack.c.h.b16 %v2785
    %v2943 = vunpack.c.l.b16 %v2786
    %v2944 = vunpack.c.h.b16 %v2786
    %v2945 = vunpack.c.l.b16 %v2787
    %v2946 = vunpack.c.h.b16 %v2787
    %v2947 = vunpack.c.l.b16 %v2788
    %v2948 = vunpack.c.h.b16 %v2788
    %v2949 = vunpack.c.l.b16 %v2789
    %v2950 = vunpack.c.h.b16 %v2789
    %v2951 = vunpack.c.l.b16 %v2790
    %v2952 = vunpack.c.h.b16 %v2790
    %v2953 = vunpack.c.l.b16 %v2791
    %v2954 = vunpack.c.h.b16 %v2791
    %v2955 = vunpack.c.l.b16 %v2792
    %v2956 = vunpack.c.h.b16 %v2792
    %v2957 = vunpack.c.l.b16 %v2793
    %v2958 = vunpack.c.h.b16 %v2793
    %v2959 = vunpack.c.l.b16 %v2794
    %v2960 = vunpack.c.h.b16 %v2794
    %v2961 = vunpack.c.l.b16 %v2795
    %v2962 = vunpack.c.h.b16 %v2795
    %v2963 = vunpack.c.l.b16 %v2796
    %v2964 = vunpack.c.h.b16 %v2796
    %v2965 = vunpack.c.l.b16 %v2797
    %v2966 = vunpack.c.h.b16 %v2797
    %v2967 = vunpack.c.l.b16 %v2798
    %v2968 = vunpack.c.h.b16 %v2798
    %v2969 = vunpack.c.l.b16 %v2799
    %v2970 = vunpack.c.h.b16 %v2799
    %v2971 = vunpack.c.l.b16 %v2800
    %v2972 = vunpack.c.h.b16 %v2800
    %v2973 = vunpack.c.l.b16 %v2801
    %v2974 = vunpack.c.h.b16 %v2801
    %v2975 = vunpack.c.l.b16 %v2802
    %v2976 = vunpack.c.h.b16 %v2802
    %v2977 = vunpack.c.l.b16 %v2803
    %v2978 = vunpack.c.h.b16 %v2803
    %v2979 = vunpack.c.l.b16 %v2804
    %v2980 = vunpack.c.h.b16 %v2804
    %v2981 = vunpack.c.l.b16 %v2805
    %v2982 = vunpack.c.h.b16 %v2805
    %v2983 = vunpack.c.l.b16 %v2806
    %v2984 = vunpack.c.h.b16 %v2806
    %v2985 = vunpack.c.l.b16 %v2807
    %v2986 = vunpack.c.h.b16 %v2807
    %v2987 = vunpack.c.l.b16 %v2808
    %v2988 = vunpack.c.h.b16 %v2808
    %v2989 = vunpack.c.l.b16 %v2809
    %v2990 = vunpack.c.h.b16 %v2809
    %v2991 = vunpack.c.l.b16 %v2810
    %v2992 = vunpack.c.h.b16 %v2810
    %v2993 = vunpack.c.l.b16 %v2811
    %v2994 = vunpack.c.h.b16 %v2811
    %v2995 = vunpack.c.l.b16 %v2812
    %v2996 = vunpack.c.h.b16 %v2812
    %v2997 = vunpack.c.l.b16 %v2813
    %v2998 = vunpack.c.h.b16 %v2813
    %v2999 = vunpack.c.l.b16 %v2814
    %v3000 = vunpack.c.h.b16 %v2814
    %v3001 = vunpack.c.l.b16 %v2815
    %v3002 = vunpack.c.h.b16 %v2815
    %v3003 = vunpack.c.l.b16 %v2816
    %v3004 = vunpack.c.h.b16 %v2816
    %v3005 = vunpack.c.l.b16 %v2817
    %v3006 = vunpack.c.h.b16 %v2817
    %v3007 = vunpack.c.l.b16 %v2818
    %v3008 = vunpack.c.h.b16 %v2818
    %v3009 = vunpack.c.l.b16 %v2819
    %v3010 = vunpack.c.h.b16 %v2819
    %v3011 = vunpack.c.l.b16 %v2820
    %v3012 = vunpack.c.h.b16 %v2820
    %v3013 = vunpack.c.l.b16 %v2821
    %v3014 = vunpack.c.h.b16 %v2821
    %v3015 = vunpack.c.l.b16 %v2822
    %v3016 = vunpack.c.h.b16 %v2822
    %v3017 = vunpack.c.l.b16 %v2823
    %v3018 = vunpack.c.h.b16 %v2823
    %v3019 = vunpack.c.l.b16 %v2824
    %v3020 = vunpack.c.h.b16 %v2824
    %v3021 = vunpack.c.l.b16 %v2825
    %v3022 = vunpack.c.h.b16 %v2825
    %v3023 = vunpack.c.l.b16 %v2826
    %v3024 = vunpack.c.h.b16 %v2826
    %v3025 = vunpack.c.l.b16 %v2827
    %v3026 = vunpack.c.h.b16 %v2827
    %v3027 = vunpack.c.l.b16 %v2828
    %v3028 = vunpack.c.h.b16 %v2828
    %v3029 = vunpack.c.l.b16 %v2829
    %v3030 = vunpack.c.h.b16 %v2829
    %v3031 = vunpack.c.l.b16 %v2830
    %v3032 = vunpack.c.h.b16 %v2830
    %v3033 = vunpack.c.l.b16 %v2831
    %v3034 = vunpack.c.h.b16 %v2831
    %v3035 = vunpack.c.l.b16 %v2832
    %v3036 = vunpack.c.h.b16 %v2832
    %v3037 = vunpack.c.l.b16 %v2833
    %v3038 = vunpack.c.h.b16 %v2833
    %v3039 = vunpack.c.l.b16 %v2834
    %v3040 = vunpack.c.h.b16 %v2834
    %v3041 = vunpack.c.l.b16 %v2835
    %v3042 = vunpack.c.h.b16 %v2835
    %v3043 = vunpack.c.l.b16 %v2836
    %v3044 = vunpack.c.h.b16 %v2836
    %v3045 = vunpack.c.l.b16 %v2837
    %v3046 = vunpack.c.h.b16 %v2837
    %v3047 = vunpack.c.l.b16 %v2838
    %v3048 = vunpack.c.h.b16 %v2838
    %v3049 = vunpack.c.l.b16 %v2839
    %v3050 = vunpack.c.h.b16 %v2839
    %v3051 = vunpack.c.l.b16 %v2840
    %v3052 = vunpack.c.h.b16 %v2840
    %v3053 = vunpack.c.l.b16 %v2841
    %v3054 = vunpack.c.h.b16 %v2841
    %v3055 = vunpack.c.l.b16 %v2842
    %v3056 = vunpack.c.h.b16 %v2842
    %v3057 = vpack.c.b16 %v2933, %v2929
    %v3058 = vpack.c.b16 %v2934, %v2930
    %v3059 = vpack.c.b16 %v2935, %v2931
    %v3060 = vpack.c.b16 %v2936, %v2932
    %v3061 = vpack.c.b16 %v2941, %v2937
    %v3062 = vpack.c.b16 %v2942, %v2938
    %v3063 = vpack.c.b16 %v2943, %v2939
    %v3064 = vpack.c.b16 %v2944, %v2940
    %v3065 = vpack.c.b16 %v2949, %v2945
    %v3066 = vpack.c.b16 %v2950, %v2946
    %v3067 = vpack.c.b16 %v2951, %v2947
    %v3068 = vpack.c.b16 %v2952, %v2948
    %v3069 = vpack.c.b16 %v2957, %v2953
    %v3070 = vpack.c.b16 %v2958, %v2954
    %v3071 = vpack.c.b16 %v2959, %v2955
    %v3072 = vpack.c.b16 %v2960, %v2956
    %v3073 = vpack.c.b16 %v2965, %v2961
    %v3074 = vpack.c.b16 %v2966, %v2962
    %v3075 = vpack.c.b16 %v2967, %v2963
    %v3076 = vpack.c.b16 %v2968, %v2964
    %v3077 = vpack.c.b16 %v2973, %v2969
    %v3078 = vpack.c.b16 %v2974, %v2970
    %v3079 = vpack.c.b16 %v2975, %v2971
    %v3080 = vpack.c.b16 %v2976, %v2972
    %v3081 = vpack.c.b16 %v2981, %v2977
    %v3082 = vpack.c.b16 %v2982, %v2978
    %v3083 = vpack.c.b16 %v2983, %v2979
    %v3084 = vpack.c.b16 %v2984, %v2980
    %v3085 = vpack.c.b16 %v2989, %v2985
    %v3086 = vpack.c.b16 %v2990, %v2986
    %v3087 = vpack.c.b16 %v2991, %v2987
    %v3088 = vpack.c.b16 %v2992, %v2988
    %v3089 = vpack.c.b16 %v2997, %v2993
    %v3090 = vpack.c.b16 %v2998, %v2994
    %v3091 = vpack.c.b16 %v2999, %v2995
    %v3092 = vpack.c.b16 %v3000, %v2996
    %v3093 = vpack.c.b16 %v3005, %v3001
    %v3094 = vpack.c.b16 %v3006, %v3002
    %v3095 = vpack.c.b16 %v3007, %v3003
    %v3096 = vpack.c.b16 %v3008, %v3004
    %v3097 = vpack.c.b16 %v3013, %v3009
    %v3098 = vpack.c.b16 %v3014, %v3010
    %v3099 = vpack.c.b16 %v3015, %v3011
    %v3100 = vpack.c.b16 %v3016, %v3012
    %v3101 = vpack.c.b16 %v3021, %v3017
    %v3102 = vpack.c.b16 %v3022, %v3018
    %v3103 = vpack.c.b16 %v3023, %v3019
    %v3104 = vpack.c.b16 %v3024, %v3020
    %v3105 = vpack.c.b16 %v3029, %v3025
    %v3106 = vpack.c.b16 %v3030, %v3026
    %v3107 = vpack.c.b16 %v3031, %v3027
    %v3108 = vpack.c.b16 %v3032, %v3028
    %v3109 = vpack.c.b16 %v3037, %v3033
    %v3110 = vpack.c.b16 %v3038, %v3034
    %v3111 = vpack.c.b16 %v3039, %v3035
    %v3112 = vpack.c.b16 %v3040, %v3036
    %v3113 = vpack.c.b16 %v3045, %v3041
    %v3114 = vpack.c.b16 %v3046, %v3042
    %v3115 = vpack.c.b16 %v3047, %v3043
    %v3116 = vpack.c.b16 %v3048, %v3044
    %v3117 = vpack.c.b16 %v3053, %v3049
    %v3118 = vpack.c.b16 %v3054, %v3050
    %v3119 = vpack.c.b16 %v3055, %v3051
    %v3120 = vpack.c.b16 %v3056, %v3052
    %3185 = vmatprep.subr.bf16.mxu0 %v3058
    %3186 = vmatpush1.bf16.msra.mxu0 %v3057
    %3187 = vmatprep.subr.bf16.mxu0 %v3062
    %3188 = vmatpush1.bf16.msra.mxu0 %v3061
    %3189 = vmatprep.subr.bf16.mxu0 %v3066
    %3190 = vmatpush1.bf16.msra.mxu0 %v3065
    %3191 = vmatprep.subr.bf16.mxu0 %v3070
    %3192 = vmatpush1.bf16.msra.mxu0 %v3069
    %3193 = vmatprep.subr.bf16.mxu0 %v3074
    %3194 = vmatpush1.bf16.msra.mxu0 %v3073
    %3195 = vmatprep.subr.bf16.mxu0 %v3078
    %3196 = vmatpush1.bf16.msra.mxu0 %v3077
    %3197 = vmatprep.subr.bf16.mxu0 %v3082
    %3198 = vmatpush1.bf16.msra.mxu0 %v3081
    %3199 = vmatprep.subr.bf16.mxu0 %v3086
    %3200 = vmatpush1.bf16.msra.mxu0 %v3085
    %3201 = vmatprep.subr.bf16.mxu0 %v3090
    %3202 = vmatpush1.bf16.msra.mxu0 %v3089
    %3203 = vmatprep.subr.bf16.mxu0 %v3094
    %3204 = vmatpush1.bf16.msra.mxu0 %v3093
    %3205 = vmatprep.subr.bf16.mxu0 %v3098
    %3206 = vmatpush1.bf16.msra.mxu0 %v3097
    %3207 = vmatprep.subr.bf16.mxu0 %v3102
    %3208 = vmatpush1.bf16.msra.mxu0 %v3101
    %3209 = vmatprep.subr.bf16.mxu0 %v3106
    %3210 = vmatpush1.bf16.msra.mxu0 %v3105
    %3211 = vmatprep.subr.bf16.mxu0 %v3110
    %3212 = vmatpush1.bf16.msra.mxu0 %v3109
    %3213 = vmatprep.subr.bf16.mxu0 %v3114
    %3214 = vmatpush1.bf16.msra.mxu0 %v3113
    %3215 = vmatprep.subr.bf16.mxu0 %v3118
    %3216 = vmatpush1.bf16.msra.mxu0 %v3117
    %3217 = vmatprep.mubr.bf16.mxu0 %v2778
    %3218 = vmatmul.mubr.bf16.gmra.mrb[0].mxu0 %v2777
    %v3219 = vpop.f32.mrb[0].mxu0
    %v3220 = vadd.f32 %v2848, %v3219
    %v3221 = vpop.f32.mrb[0].mxu0
    %v3222 = vadd.f32 %v2852, %v3221
    %v3223 = vpop.f32.mrb[0].mxu0
    %v3224 = vpop.f32.mrb[0].mxu0
    %3225 = vdwg.mxu0
    %3226 = vmatprep.subr.bf16.mxu0 %v3060
    %3227 = vmatpush1.bf16.msra.mxu0 %v3059
    %3228 = vmatprep.subr.bf16.mxu0 %v3064
    %3229 = vmatpush1.bf16.msra.mxu0 %v3063
    %3230 = vmatprep.subr.bf16.mxu0 %v3068
    %3231 = vmatpush1.bf16.msra.mxu0 %v3067
    %3232 = vmatprep.subr.bf16.mxu0 %v3072
    %3233 = vmatpush1.bf16.msra.mxu0 %v3071
    %3234 = vmatprep.subr.bf16.mxu0 %v3076
    %3235 = vmatpush1.bf16.msra.mxu0 %v3075
    %3236 = vmatprep.subr.bf16.mxu0 %v3080
    %3237 = vmatpush1.bf16.msra.mxu0 %v3079
    %3238 = vmatprep.subr.bf16.mxu0 %v3084
    %3239 = vmatpush1.bf16.msra.mxu0 %v3083
    %3240 = vmatprep.subr.bf16.mxu0 %v3088
    %3241 = vmatpush1.bf16.msra.mxu0 %v3087
    %3242 = vmatprep.subr.bf16.mxu0 %v3092
    %3243 = vmatpush1.bf16.msra.mxu0 %v3091
    %3244 = vmatprep.subr.bf16.mxu0 %v3096
    %3245 = vmatpush1.bf16.msra.mxu0 %v3095
    %3246 = vmatprep.subr.bf16.mxu0 %v3100
    %3247 = vmatpush1.bf16.msra.mxu0 %v3099
    %3248 = vmatprep.subr.bf16.mxu0 %v3104
    %3249 = vmatpush1.bf16.msra.mxu0 %v3103
    %3250 = vmatprep.subr.bf16.mxu0 %v3108
    %3251 = vmatpush1.bf16.msra.mxu0 %v3107
    %3252 = vmatprep.subr.bf16.mxu0 %v3112
    %3253 = vmatpush1.bf16.msra.mxu0 %v3111
    %3254 = vmatprep.subr.bf16.mxu0 %v3116
    %3255 = vmatpush1.bf16.msra.mxu0 %v3115
    %3256 = vmatprep.subr.bf16.mxu0 %v3120
    %3257 = vmatpush1.bf16.msra.mxu0 %v3119
    %3258 = vmatprep.mubr.bf16.mxu0 %v2778
    %3259 = vmatmul.mubr.bf16.gmra.mrb[0].mxu0 %v2777
    %v3260 = vpop.f32.mrb[0].mxu0
    %v3261 = vadd.f32 %v2856, %v3260
    %v3262 = vpop.f32.mrb[0].mxu0
    %v3263 = vadd.f32 %v2860, %v3262
    %v3264 = vpop.f32.mrb[0].mxu0
    %v3265 = vpop.f32.mrb[0].mxu0
    %3266 = vdwg.mxu0
    %v3267 = vmax.f32 %v3220, 0.0
    %v3268 = vmax.f32 %v3222, 0.0
    %v3269 = vmax.f32 %v3261, 0.0
    %v3270 = vmax.f32 %v3263, 0.0
    %v3271 = vpack.c.bf16 %v3267, %v3267
    %v3272 = vpack.c.bf16 %v3268, %v3268
    %v3273 = vpack.c.bf16 %v3269, %v3269
    %v3274 = vpack.c.bf16 %v3270, %v3270
    %v3275 = vunpack.c.l.bf16 %v3271
    %v3276 = vunpack.c.l.bf16 %v3272
    %v3277 = vunpack.c.l.bf16 %v3273
    %v3278 = vunpack.c.l.bf16 %v3274
    %v3279 = vunpack.c.l.bf16 %v2007
    %v3280 = vunpack.c.l.bf16 %v2008
    %v3281 = vunpack.c.l.bf16 %v2009
    %v3282 = vunpack.c.l.bf16 %v2010
    %v3283 = vadd.f32 %v3275, %v3279
    %v3284 = vadd.f32 %v3276, %v3280
    %v3285 = vadd.f32 %v3277, %v3281
    %v3286 = vadd.f32 %v3278, %v3282
    %v3287 = vpack.c.bf16 %v3283, %v3283
    %v3288 = vpack.c.bf16 %v3284, %v3284
    %v3289 = vpack.c.bf16 %v3285, %v3285
    %v3290 = vpack.c.bf16 %v3286, %v3286
    %v3291 = vld [vmem:[#allocation8] sm:$0xff]
    %v3292 = vld [vmem:[#allocation8 + $0x8] sm:$0xff]
    %v3293 = vld [vmem:[#allocation8 + $0x10] sm:$0xff]
    %v3294 = vld [vmem:[#allocation8 + $0x18] sm:$0xff]
    %v3295 = vld [vmem:[#allocation8 + $0x20] sm:$0xff]
    %v3296 = vld [vmem:[#allocation8 + $0x28] sm:$0xff]
    %v3297 = vld [vmem:[#allocation8 + $0x30] sm:$0xff]
    %v3298 = vld [vmem:[#allocation8 + $0x38] sm:$0xff]
    %v3299 = vld [vmem:[#allocation8 + $0x40] sm:$0xff]
    %v3300 = vld [vmem:[#allocation8 + $0x48] sm:$0xff]
    %v3301 = vld [vmem:[#allocation8 + $0x50] sm:$0xff]
    %v3302 = vld [vmem:[#allocation8 + $0x58] sm:$0xff]
    %v3303 = vld [vmem:[#allocation8 + $0x60] sm:$0xff]
    %v3304 = vld [vmem:[#allocation8 + $0x68] sm:$0xff]
    %v3305 = vld [vmem:[#allocation8 + $0x70] sm:$0xff]
    %v3306 = vld [vmem:[#allocation8 + $0x78] sm:$0xff]
    %v3307 = vld [vmem:[#allocation8 + $0x80] sm:$0xff]
    %v3308 = vld [vmem:[#allocation8 + $0x88] sm:$0xff]
    %v3309 = vld [vmem:[#allocation8 + $0x90] sm:$0xff]
    %v3310 = vld [vmem:[#allocation8 + $0x98] sm:$0xff]
    %v3311 = vld [vmem:[#allocation8 + $0xa0] sm:$0xff]
    %v3312 = vld [vmem:[#allocation8 + $0xa8] sm:$0xff]
    %v3313 = vld [vmem:[#allocation8 + $0xb0] sm:$0xff]
    %v3314 = vld [vmem:[#allocation8 + $0xb8] sm:$0xff]
    %v3315 = vld [vmem:[#allocation8 + $0xc0] sm:$0xff]
    %v3316 = vld [vmem:[#allocation8 + $0xc8] sm:$0xff]
    %v3317 = vld [vmem:[#allocation8 + $0xd0] sm:$0xff]
    %v3318 = vld [vmem:[#allocation8 + $0xd8] sm:$0xff]
    %v3319 = vld [vmem:[#allocation8 + $0xe0] sm:$0xff]
    %v3320 = vld [vmem:[#allocation8 + $0xe8] sm:$0xff]
    %v3321 = vld [vmem:[#allocation8 + $0xf0] sm:$0xff]
    %v3322 = vld [vmem:[#allocation8 + $0xf8] sm:$0xff]
    %v3323 = vld [vmem:[#allocation8 + $0x100] sm:$0xff]
    %v3324 = vld [vmem:[#allocation8 + $0x108] sm:$0xff]
    %v3325 = vld [vmem:[#allocation8 + $0x110] sm:$0xff]
    %v3326 = vld [vmem:[#allocation8 + $0x118] sm:$0xff]
    %v3327 = vld [vmem:[#allocation8 + $0x120] sm:$0xff]
    %v3328 = vld [vmem:[#allocation8 + $0x128] sm:$0xff]
    %v3329 = vld [vmem:[#allocation8 + $0x130] sm:$0xff]
    %v3330 = vld [vmem:[#allocation8 + $0x138] sm:$0xff]
    %v3331 = vld [vmem:[#allocation8 + $0x140] sm:$0xff]
    %v3332 = vld [vmem:[#allocation8 + $0x148] sm:$0xff]
    %v3333 = vld [vmem:[#allocation8 + $0x150] sm:$0xff]
    %v3334 = vld [vmem:[#allocation8 + $0x158] sm:$0xff]
    %v3335 = vld [vmem:[#allocation8 + $0x160] sm:$0xff]
    %v3336 = vld [vmem:[#allocation8 + $0x168] sm:$0xff]
    %v3337 = vld [vmem:[#allocation8 + $0x170] sm:$0xff]
    %v3338 = vld [vmem:[#allocation8 + $0x178] sm:$0xff]
    %v3339 = vld [vmem:[#allocation8 + $0x180] sm:$0xff]
    %v3340 = vld [vmem:[#allocation8 + $0x188] sm:$0xff]
    %v3341 = vld [vmem:[#allocation8 + $0x190] sm:$0xff]
    %v3342 = vld [vmem:[#allocation8 + $0x198] sm:$0xff]
    %v3343 = vld [vmem:[#allocation8 + $0x1a0] sm:$0xff]
    %v3344 = vld [vmem:[#allocation8 + $0x1a8] sm:$0xff]
    %v3345 = vld [vmem:[#allocation8 + $0x1b0] sm:$0xff]
    %v3346 = vld [vmem:[#allocation8 + $0x1b8] sm:$0xff]
    %v3347 = vld [vmem:[#allocation8 + $0x1c0] sm:$0xff]
    %v3348 = vld [vmem:[#allocation8 + $0x1c8] sm:$0xff]
    %v3349 = vld [vmem:[#allocation8 + $0x1d0] sm:$0xff]
    %v3350 = vld [vmem:[#allocation8 + $0x1d8] sm:$0xff]
    %v3351 = vld [vmem:[#allocation8 + $0x1e0] sm:$0xff]
    %v3352 = vld [vmem:[#allocation8 + $0x1e8] sm:$0xff]
    %v3353 = vld [vmem:[#allocation8 + $0x1f0] sm:$0xff]
    %v3354 = vld [vmem:[#allocation8 + $0x1f8] sm:$0xff]
    %v3355 = vld [vmem:[#allocation8 + $0x200] sm:$0xff]
    %v3356 = vld [vmem:[#allocation8 + $0x208] sm:$0xff]
    %v3357 = vld [vmem:[#allocation8 + $0x210] sm:$0xff]
    %v3358 = vld [vmem:[#allocation8 + $0x218] sm:$0xff]
    %v3359 = vld [vmem:[#allocation8 + $0x220] sm:$0xff]
    %v3360 = vld [vmem:[#allocation8 + $0x228] sm:$0xff]
    %v3361 = vld [vmem:[#allocation8 + $0x230] sm:$0xff]
    %v3362 = vld [vmem:[#allocation8 + $0x238] sm:$0xff]
    %v3363 = vld [vmem:[#allocation8 + $0x240] sm:$0xff]
    %v3364 = vld [vmem:[#allocation8 + $0x248] sm:$0xff]
    %v3365 = vld [vmem:[#allocation8 + $0x250] sm:$0xff]
    %v3366 = vld [vmem:[#allocation8 + $0x258] sm:$0xff]
    %v3367 = vld [vmem:[#allocation8 + $0x260] sm:$0xff]
    %v3368 = vld [vmem:[#allocation8 + $0x268] sm:$0xff]
    %v3369 = vld [vmem:[#allocation8 + $0x270] sm:$0xff]
    %v3370 = vld [vmem:[#allocation8 + $0x278] sm:$0xff]
    %v3371 = vld [vmem:[#allocation8 + $0x280] sm:$0xff]
    %v3372 = vld [vmem:[#allocation8 + $0x288] sm:$0xff]
    %v3373 = vld [vmem:[#allocation8 + $0x290] sm:$0xff]
    %v3374 = vld [vmem:[#allocation8 + $0x298] sm:$0xff]
    %v3375 = vld [vmem:[#allocation8 + $0x2a0] sm:$0xff]
    %v3376 = vld [vmem:[#allocation8 + $0x2a8] sm:$0xff]
    %v3377 = vld [vmem:[#allocation8 + $0x2b0] sm:$0xff]
    %v3378 = vld [vmem:[#allocation8 + $0x2b8] sm:$0xff]
    %v3379 = vld [vmem:[#allocation8 + $0x2c0] sm:$0xff]
    %v3380 = vld [vmem:[#allocation8 + $0x2c8] sm:$0xff]
    %v3381 = vld [vmem:[#allocation8 + $0x2d0] sm:$0xff]
    %v3382 = vld [vmem:[#allocation8 + $0x2d8] sm:$0xff]
    %v3383 = vld [vmem:[#allocation8 + $0x2e0] sm:$0xff]
    %v3384 = vld [vmem:[#allocation8 + $0x2e8] sm:$0xff]
    %v3385 = vld [vmem:[#allocation8 + $0x2f0] sm:$0xff]
    %v3386 = vld [vmem:[#allocation8 + $0x2f8] sm:$0xff]
    %v3387 = vld [vmem:[#allocation8 + $0x300] sm:$0xff]
    %v3388 = vld [vmem:[#allocation8 + $0x308] sm:$0xff]
    %v3389 = vld [vmem:[#allocation8 + $0x310] sm:$0xff]
    %v3390 = vld [vmem:[#allocation8 + $0x318] sm:$0xff]
    %v3391 = vld [vmem:[#allocation8 + $0x320] sm:$0xff]
    %v3392 = vld [vmem:[#allocation8 + $0x328] sm:$0xff]
    %v3393 = vld [vmem:[#allocation8 + $0x330] sm:$0xff]
    %v3394 = vld [vmem:[#allocation8 + $0x338] sm:$0xff]
    %v3395 = vld [vmem:[#allocation8 + $0x340] sm:$0xff]
    %v3396 = vld [vmem:[#allocation8 + $0x348] sm:$0xff]
    %v3397 = vld [vmem:[#allocation8 + $0x350] sm:$0xff]
    %v3398 = vld [vmem:[#allocation8 + $0x358] sm:$0xff]
    %v3399 = vld [vmem:[#allocation8 + $0x360] sm:$0xff]
    %v3400 = vld [vmem:[#allocation8 + $0x368] sm:$0xff]
    %v3401 = vld [vmem:[#allocation8 + $0x370] sm:$0xff]
    %v3402 = vld [vmem:[#allocation8 + $0x378] sm:$0xff]
    %v3403 = vld [vmem:[#allocation8 + $0x380] sm:$0xff]
    %v3404 = vld [vmem:[#allocation8 + $0x388] sm:$0xff]
    %v3405 = vld [vmem:[#allocation8 + $0x390] sm:$0xff]
    %v3406 = vld [vmem:[#allocation8 + $0x398] sm:$0xff]
    %v3407 = vld [vmem:[#allocation8 + $0x3a0] sm:$0xff]
    %v3408 = vld [vmem:[#allocation8 + $0x3a8] sm:$0xff]
    %v3409 = vld [vmem:[#allocation8 + $0x3b0] sm:$0xff]
    %v3410 = vld [vmem:[#allocation8 + $0x3b8] sm:$0xff]
    %v3411 = vld [vmem:[#allocation8 + $0x3c0] sm:$0xff]
    %v3412 = vld [vmem:[#allocation8 + $0x3c8] sm:$0xff]
    %v3413 = vld [vmem:[#allocation8 + $0x3d0] sm:$0xff]
    %v3414 = vld [vmem:[#allocation8 + $0x3d8] sm:$0xff]
    %v3415 = vld [vmem:[#allocation8 + $0x3e0] sm:$0xff]
    %v3416 = vld [vmem:[#allocation8 + $0x3e8] sm:$0xff]
    %v3417 = vld [vmem:[#allocation8 + $0x3f0] sm:$0xff]
    %v3418 = vld [vmem:[#allocation8 + $0x3f8] sm:$0xff]
    %v3419 = vld [vmem:[#allocation8 + $0x400] sm:$0xff]
    %v3420 = vld [vmem:[#allocation8 + $0x408] sm:$0xff]
    %v3421 = vld [vmem:[#allocation8 + $0x410] sm:$0xff]
    %v3422 = vld [vmem:[#allocation8 + $0x418] sm:$0xff]
    %v3423 = vld [vmem:[#allocation8 + $0x420] sm:$0xff]
    %v3424 = vld [vmem:[#allocation8 + $0x428] sm:$0xff]
    %v3425 = vld [vmem:[#allocation8 + $0x430] sm:$0xff]
    %v3426 = vld [vmem:[#allocation8 + $0x438] sm:$0xff]
    %v3427 = vld [vmem:[#allocation8 + $0x440] sm:$0xff]
    %v3428 = vld [vmem:[#allocation8 + $0x448] sm:$0xff]
    %v3429 = vld [vmem:[#allocation8 + $0x450] sm:$0xff]
    %v3430 = vld [vmem:[#allocation8 + $0x458] sm:$0xff]
    %v3431 = vld [vmem:[#allocation8 + $0x460] sm:$0xff]
    %v3432 = vld [vmem:[#allocation8 + $0x468] sm:$0xff]
    %v3433 = vld [vmem:[#allocation8 + $0x470] sm:$0xff]
    %v3434 = vld [vmem:[#allocation8 + $0x478] sm:$0xff]
    %v3435 = vld [vmem:[#allocation8 + $0x480] sm:$0xff]
    %v3436 = vld [vmem:[#allocation8 + $0x488] sm:$0xff]
    %v3437 = vld [vmem:[#allocation8 + $0x490] sm:$0xff]
    %v3438 = vld [vmem:[#allocation8 + $0x498] sm:$0xff]
    %v3439 = vld [vmem:[#allocation8 + $0x4a0] sm:$0xff]
    %v3440 = vld [vmem:[#allocation8 + $0x4a8] sm:$0xff]
    %v3441 = vld [vmem:[#allocation8 + $0x4b0] sm:$0xff]
    %v3442 = vld [vmem:[#allocation8 + $0x4b8] sm:$0xff]
    %v3443 = vld [vmem:[#allocation8 + $0x4c0] sm:$0xff]
    %v3444 = vld [vmem:[#allocation8 + $0x4c8] sm:$0xff]
    %v3445 = vld [vmem:[#allocation8 + $0x4d0] sm:$0xff]
    %v3446 = vld [vmem:[#allocation8 + $0x4d8] sm:$0xff]
    %v3447 = vld [vmem:[#allocation8 + $0x4e0] sm:$0xff]
    %v3448 = vld [vmem:[#allocation8 + $0x4e8] sm:$0xff]
    %v3449 = vld [vmem:[#allocation8 + $0x4f0] sm:$0xff]
    %v3450 = vld [vmem:[#allocation8 + $0x4f8] sm:$0xff]
    %v3451 = vld [vmem:[#allocation8 + $0x500] sm:$0xff]
    %v3452 = vld [vmem:[#allocation8 + $0x508] sm:$0xff]
    %v3453 = vld [vmem:[#allocation8 + $0x510] sm:$0xff]
    %v3454 = vld [vmem:[#allocation8 + $0x518] sm:$0xff]
    %v3455 = vld [vmem:[#allocation8 + $0x520] sm:$0xff]
    %v3456 = vld [vmem:[#allocation8 + $0x528] sm:$0xff]
    %v3457 = vld [vmem:[#allocation8 + $0x530] sm:$0xff]
    %v3458 = vld [vmem:[#allocation8 + $0x538] sm:$0xff]
    %v3459 = vld [vmem:[#allocation8 + $0x540] sm:$0xff]
    %v3460 = vld [vmem:[#allocation8 + $0x548] sm:$0xff]
    %v3461 = vld [vmem:[#allocation8 + $0x550] sm:$0xff]
    %v3462 = vld [vmem:[#allocation8 + $0x558] sm:$0xff]
    %v3463 = vld [vmem:[#allocation8 + $0x560] sm:$0xff]
    %v3464 = vld [vmem:[#allocation8 + $0x568] sm:$0xff]
    %v3465 = vld [vmem:[#allocation8 + $0x570] sm:$0xff]
    %v3466 = vld [vmem:[#allocation8 + $0x578] sm:$0xff]
    %v3467 = vld [vmem:[#allocation8 + $0x580] sm:$0xff]
    %v3468 = vld [vmem:[#allocation8 + $0x588] sm:$0xff]
    %v3469 = vld [vmem:[#allocation8 + $0x590] sm:$0xff]
    %v3470 = vld [vmem:[#allocation8 + $0x598] sm:$0xff]
    %v3471 = vld [vmem:[#allocation8 + $0x5a0] sm:$0xff]
    %v3472 = vld [vmem:[#allocation8 + $0x5a8] sm:$0xff]
    %v3473 = vld [vmem:[#allocation8 + $0x5b0] sm:$0xff]
    %v3474 = vld [vmem:[#allocation8 + $0x5b8] sm:$0xff]
    %v3475 = vld [vmem:[#allocation8 + $0x5c0] sm:$0xff]
    %v3476 = vld [vmem:[#allocation8 + $0x5c8] sm:$0xff]
    %v3477 = vld [vmem:[#allocation8 + $0x5d0] sm:$0xff]
    %v3478 = vld [vmem:[#allocation8 + $0x5d8] sm:$0xff]
    %v3479 = vld [vmem:[#allocation8 + $0x5e0] sm:$0xff]
    %v3480 = vld [vmem:[#allocation8 + $0x5e8] sm:$0xff]
    %v3481 = vld [vmem:[#allocation8 + $0x5f0] sm:$0xff]
    %v3482 = vld [vmem:[#allocation8 + $0x5f8] sm:$0xff]
    %v3483 = vld [vmem:[#allocation8 + $0x600] sm:$0xff]
    %v3484 = vld [vmem:[#allocation8 + $0x608] sm:$0xff]
    %v3485 = vld [vmem:[#allocation8 + $0x610] sm:$0xff]
    %v3486 = vld [vmem:[#allocation8 + $0x618] sm:$0xff]
    %v3487 = vld [vmem:[#allocation8 + $0x620] sm:$0xff]
    %v3488 = vld [vmem:[#allocation8 + $0x628] sm:$0xff]
    %v3489 = vld [vmem:[#allocation8 + $0x630] sm:$0xff]
    %v3490 = vld [vmem:[#allocation8 + $0x638] sm:$0xff]
    %v3491 = vld [vmem:[#allocation8 + $0x640] sm:$0xff]
    %v3492 = vld [vmem:[#allocation8 + $0x648] sm:$0xff]
    %v3493 = vld [vmem:[#allocation8 + $0x650] sm:$0xff]
    %v3494 = vld [vmem:[#allocation8 + $0x658] sm:$0xff]
    %v3495 = vld [vmem:[#allocation8 + $0x660] sm:$0xff]
    %v3496 = vld [vmem:[#allocation8 + $0x668] sm:$0xff]
    %v3497 = vld [vmem:[#allocation8 + $0x670] sm:$0xff]
    %v3498 = vld [vmem:[#allocation8 + $0x678] sm:$0xff]
    %v3499 = vld [vmem:[#allocation8 + $0x680] sm:$0xff]
    %v3500 = vld [vmem:[#allocation8 + $0x688] sm:$0xff]
    %v3501 = vld [vmem:[#allocation8 + $0x690] sm:$0xff]
    %v3502 = vld [vmem:[#allocation8 + $0x698] sm:$0xff]
    %v3503 = vld [vmem:[#allocation8 + $0x6a0] sm:$0xff]
    %v3504 = vld [vmem:[#allocation8 + $0x6a8] sm:$0xff]
    %v3505 = vld [vmem:[#allocation8 + $0x6b0] sm:$0xff]
    %v3506 = vld [vmem:[#allocation8 + $0x6b8] sm:$0xff]
    %v3507 = vld [vmem:[#allocation8 + $0x6c0] sm:$0xff]
    %v3508 = vld [vmem:[#allocation8 + $0x6c8] sm:$0xff]
    %v3509 = vld [vmem:[#allocation8 + $0x6d0] sm:$0xff]
    %v3510 = vld [vmem:[#allocation8 + $0x6d8] sm:$0xff]
    %v3511 = vld [vmem:[#allocation8 + $0x6e0] sm:$0xff]
    %v3512 = vld [vmem:[#allocation8 + $0x6e8] sm:$0xff]
    %v3513 = vld [vmem:[#allocation8 + $0x6f0] sm:$0xff]
    %v3514 = vld [vmem:[#allocation8 + $0x6f8] sm:$0xff]
    %v3515 = vld [vmem:[#allocation8 + $0x700] sm:$0xff]
    %v3516 = vld [vmem:[#allocation8 + $0x708] sm:$0xff]
    %v3517 = vld [vmem:[#allocation8 + $0x710] sm:$0xff]
    %v3518 = vld [vmem:[#allocation8 + $0x718] sm:$0xff]
    %v3519 = vld [vmem:[#allocation8 + $0x720] sm:$0xff]
    %v3520 = vld [vmem:[#allocation8 + $0x728] sm:$0xff]
    %v3521 = vld [vmem:[#allocation8 + $0x730] sm:$0xff]
    %v3522 = vld [vmem:[#allocation8 + $0x738] sm:$0xff]
    %v3523 = vld [vmem:[#allocation8 + $0x740] sm:$0xff]
    %v3524 = vld [vmem:[#allocation8 + $0x748] sm:$0xff]
    %v3525 = vld [vmem:[#allocation8 + $0x750] sm:$0xff]
    %v3526 = vld [vmem:[#allocation8 + $0x758] sm:$0xff]
    %v3527 = vld [vmem:[#allocation8 + $0x760] sm:$0xff]
    %v3528 = vld [vmem:[#allocation8 + $0x768] sm:$0xff]
    %v3529 = vld [vmem:[#allocation8 + $0x770] sm:$0xff]
    %v3530 = vld [vmem:[#allocation8 + $0x778] sm:$0xff]
    %v3531 = vld [vmem:[#allocation8 + $0x780] sm:$0xff]
    %v3532 = vld [vmem:[#allocation8 + $0x788] sm:$0xff]
    %v3533 = vld [vmem:[#allocation8 + $0x790] sm:$0xff]
    %v3534 = vld [vmem:[#allocation8 + $0x798] sm:$0xff]
    %v3535 = vld [vmem:[#allocation8 + $0x7a0] sm:$0xff]
    %v3536 = vld [vmem:[#allocation8 + $0x7a8] sm:$0xff]
    %v3537 = vld [vmem:[#allocation8 + $0x7b0] sm:$0xff]
    %v3538 = vld [vmem:[#allocation8 + $0x7b8] sm:$0xff]
    %v3539 = vld [vmem:[#allocation8 + $0x7c0] sm:$0xff]
    %v3540 = vld [vmem:[#allocation8 + $0x7c8] sm:$0xff]
    %v3541 = vld [vmem:[#allocation8 + $0x7d0] sm:$0xff]
    %v3542 = vld [vmem:[#allocation8 + $0x7d8] sm:$0xff]
    %v3543 = vld [vmem:[#allocation8 + $0x7e0] sm:$0xff]
    %v3544 = vld [vmem:[#allocation8 + $0x7e8] sm:$0xff]
    %v3545 = vld [vmem:[#allocation8 + $0x7f0] sm:$0xff]
    %v3546 = vld [vmem:[#allocation8 + $0x7f8] sm:$0xff]
    %v3547 = vld [vmem:[%s12] sm:$0xff]
    %v3549 = vlaneseq
    %v3550 = vshrl.u32 %v3549, 7
    %v3551 = vsub.s32 0, %v3550
    %v3552 = vrot.slane %v3547, %v3551
    %v3553 = vlaneseq
    %v3554 = vshrl.u32 %v3553, 7
    %v3555 = vsub.s32 1, %v3554
    %v3556 = vrot.slane %v3547, %v3555
    %v3557 = vlaneseq
    %v3558 = vshrl.u32 %v3557, 7
    %v3559 = vsub.s32 2, %v3558
    %v3560 = vrot.slane %v3547, %v3559
    %v3561 = vlaneseq
    %v3562 = vshrl.u32 %v3561, 7
    %v3563 = vsub.s32 3, %v3562
    %v3564 = vrot.slane %v3547, %v3563
    %v3565 = vlaneseq
    %v3566 = vshrl.u32 %v3565, 7
    %v3567 = vsub.s32 4, %v3566
    %v3568 = vrot.slane %v3547, %v3567
    %v3569 = vlaneseq
    %v3570 = vshrl.u32 %v3569, 7
    %v3571 = vsub.s32 5, %v3570
    %v3572 = vrot.slane %v3547, %v3571
    %v3573 = vlaneseq
    %v3574 = vshrl.u32 %v3573, 7
    %v3575 = vsub.s32 6, %v3574
    %v3576 = vrot.slane %v3547, %v3575
    %v3577 = vlaneseq
    %v3578 = vshrl.u32 %v3577, 7
    %v3579 = vsub.s32 7, %v3578
    %v3580 = vrot.slane %v3547, %v3579
    %v3845 = vunpack.c.l.b16 %v3291
    %v3846 = vunpack.c.h.b16 %v3291
    %v3847 = vunpack.c.l.b16 %v3292
    %v3848 = vunpack.c.h.b16 %v3292
    %v3849 = vunpack.c.l.b16 %v3293
    %v3850 = vunpack.c.h.b16 %v3293
    %v3851 = vunpack.c.l.b16 %v3294
    %v3852 = vunpack.c.h.b16 %v3294
    %v3853 = vunpack.c.l.b16 %v3295
    %v3854 = vunpack.c.h.b16 %v3295
    %v3855 = vunpack.c.l.b16 %v3296
    %v3856 = vunpack.c.h.b16 %v3296
    %v3857 = vunpack.c.l.b16 %v3297
    %v3858 = vunpack.c.h.b16 %v3297
    %v3859 = vunpack.c.l.b16 %v3298
    %v3860 = vunpack.c.h.b16 %v3298
    %v3861 = vunpack.c.l.b16 %v3299
    %v3862 = vunpack.c.h.b16 %v3299
    %v3863 = vunpack.c.l.b16 %v3300
    %v3864 = vunpack.c.h.b16 %v3300
    %v3865 = vunpack.c.l.b16 %v3301
    %v3866 = vunpack.c.h.b16 %v3301
    %v3867 = vunpack.c.l.b16 %v3302
    %v3868 = vunpack.c.h.b16 %v3302
    %v3869 = vunpack.c.l.b16 %v3303
    %v3870 = vunpack.c.h.b16 %v3303
    %v3871 = vunpack.c.l.b16 %v3304
    %v3872 = vunpack.c.h.b16 %v3304
    %v3873 = vunpack.c.l.b16 %v3305
    %v3874 = vunpack.c.h.b16 %v3305
    %v3875 = vunpack.c.l.b16 %v3306
    %v3876 = vunpack.c.h.b16 %v3306
    %v3877 = vunpack.c.l.b16 %v3307
    %v3878 = vunpack.c.h.b16 %v3307
    %v3879 = vunpack.c.l.b16 %v3308
    %v3880 = vunpack.c.h.b16 %v3308
    %v3881 = vunpack.c.l.b16 %v3309
    %v3882 = vunpack.c.h.b16 %v3309
    %v3883 = vunpack.c.l.b16 %v3310
    %v3884 = vunpack.c.h.b16 %v3310
    %v3885 = vunpack.c.l.b16 %v3311
    %v3886 = vunpack.c.h.b16 %v3311
    %v3887 = vunpack.c.l.b16 %v3312
    %v3888 = vunpack.c.h.b16 %v3312
    %v3889 = vunpack.c.l.b16 %v3313
    %v3890 = vunpack.c.h.b16 %v3313
    %v3891 = vunpack.c.l.b16 %v3314
    %v3892 = vunpack.c.h.b16 %v3314
    %v3893 = vunpack.c.l.b16 %v3315
    %v3894 = vunpack.c.h.b16 %v3315
    %v3895 = vunpack.c.l.b16 %v3316
    %v3896 = vunpack.c.h.b16 %v3316
    %v3897 = vunpack.c.l.b16 %v3317
    %v3898 = vunpack.c.h.b16 %v3317
    %v3899 = vunpack.c.l.b16 %v3318
    %v3900 = vunpack.c.h.b16 %v3318
    %v3901 = vunpack.c.l.b16 %v3319
    %v3902 = vunpack.c.h.b16 %v3319
    %v3903 = vunpack.c.l.b16 %v3320
    %v3904 = vunpack.c.h.b16 %v3320
    %v3905 = vunpack.c.l.b16 %v3321
    %v3906 = vunpack.c.h.b16 %v3321
    %v3907 = vunpack.c.l.b16 %v3322
    %v3908 = vunpack.c.h.b16 %v3322
    %v3909 = vunpack.c.l.b16 %v3323
    %v3910 = vunpack.c.h.b16 %v3323
    %v3911 = vunpack.c.l.b16 %v3324
    %v3912 = vunpack.c.h.b16 %v3324
    %v3913 = vunpack.c.l.b16 %v3325
    %v3914 = vunpack.c.h.b16 %v3325
    %v3915 = vunpack.c.l.b16 %v3326
    %v3916 = vunpack.c.h.b16 %v3326
    %v3917 = vunpack.c.l.b16 %v3327
    %v3918 = vunpack.c.h.b16 %v3327
    %v3919 = vunpack.c.l.b16 %v3328
    %v3920 = vunpack.c.h.b16 %v3328
    %v3921 = vunpack.c.l.b16 %v3329
    %v3922 = vunpack.c.h.b16 %v3329
    %v3923 = vunpack.c.l.b16 %v3330
    %v3924 = vunpack.c.h.b16 %v3330
    %v3925 = vunpack.c.l.b16 %v3331
    %v3926 = vunpack.c.h.b16 %v3331
    %v3927 = vunpack.c.l.b16 %v3332
    %v3928 = vunpack.c.h.b16 %v3332
    %v3929 = vunpack.c.l.b16 %v3333
    %v3930 = vunpack.c.h.b16 %v3333
    %v3931 = vunpack.c.l.b16 %v3334
    %v3932 = vunpack.c.h.b16 %v3334
    %v3933 = vunpack.c.l.b16 %v3335
    %v3934 = vunpack.c.h.b16 %v3335
    %v3935 = vunpack.c.l.b16 %v3336
    %v3936 = vunpack.c.h.b16 %v3336
    %v3937 = vunpack.c.l.b16 %v3337
    %v3938 = vunpack.c.h.b16 %v3337
    %v3939 = vunpack.c.l.b16 %v3338
    %v3940 = vunpack.c.h.b16 %v3338
    %v3941 = vunpack.c.l.b16 %v3339
    %v3942 = vunpack.c.h.b16 %v3339
    %v3943 = vunpack.c.l.b16 %v3340
    %v3944 = vunpack.c.h.b16 %v3340
    %v3945 = vunpack.c.l.b16 %v3341
    %v3946 = vunpack.c.h.b16 %v3341
    %v3947 = vunpack.c.l.b16 %v3342
    %v3948 = vunpack.c.h.b16 %v3342
    %v3949 = vunpack.c.l.b16 %v3343
    %v3950 = vunpack.c.h.b16 %v3343
    %v3951 = vunpack.c.l.b16 %v3344
    %v3952 = vunpack.c.h.b16 %v3344
    %v3953 = vunpack.c.l.b16 %v3345
    %v3954 = vunpack.c.h.b16 %v3345
    %v3955 = vunpack.c.l.b16 %v3346
    %v3956 = vunpack.c.h.b16 %v3346
    %v3957 = vunpack.c.l.b16 %v3347
    %v3958 = vunpack.c.h.b16 %v3347
    %v3959 = vunpack.c.l.b16 %v3348
    %v3960 = vunpack.c.h.b16 %v3348
    %v3961 = vunpack.c.l.b16 %v3349
    %v3962 = vunpack.c.h.b16 %v3349
    %v3963 = vunpack.c.l.b16 %v3350
    %v3964 = vunpack.c.h.b16 %v3350
    %v3965 = vunpack.c.l.b16 %v3351
    %v3966 = vunpack.c.h.b16 %v3351
    %v3967 = vunpack.c.l.b16 %v3352
    %v3968 = vunpack.c.h.b16 %v3352
    %v3969 = vunpack.c.l.b16 %v3353
    %v3970 = vunpack.c.h.b16 %v3353
    %v3971 = vunpack.c.l.b16 %v3354
    %v3972 = vunpack.c.h.b16 %v3354
    %v3973 = vunpack.c.l.b16 %v3355
    %v3974 = vunpack.c.h.b16 %v3355
    %v3975 = vunpack.c.l.b16 %v3356
    %v3976 = vunpack.c.h.b16 %v3356
    %v3977 = vunpack.c.l.b16 %v3357
    %v3978 = vunpack.c.h.b16 %v3357
    %v3979 = vunpack.c.l.b16 %v3358
    %v3980 = vunpack.c.h.b16 %v3358
    %v3981 = vunpack.c.l.b16 %v3359
    %v3982 = vunpack.c.h.b16 %v3359
    %v3983 = vunpack.c.l.b16 %v3360
    %v3984 = vunpack.c.h.b16 %v3360
    %v3985 = vunpack.c.l.b16 %v3361
    %v3986 = vunpack.c.h.b16 %v3361
    %v3987 = vunpack.c.l.b16 %v3362
    %v3988 = vunpack.c.h.b16 %v3362
    %v3989 = vunpack.c.l.b16 %v3363
    %v3990 = vunpack.c.h.b16 %v3363
    %v3991 = vunpack.c.l.b16 %v3364
    %v3992 = vunpack.c.h.b16 %v3364
    %v3993 = vunpack.c.l.b16 %v3365
    %v3994 = vunpack.c.h.b16 %v3365
    %v3995 = vunpack.c.l.b16 %v3366
    %v3996 = vunpack.c.h.b16 %v3366
    %v3997 = vunpack.c.l.b16 %v3367
    %v3998 = vunpack.c.h.b16 %v3367
    %v3999 = vunpack.c.l.b16 %v3368
    %v4000 = vunpack.c.h.b16 %v3368
    %v4001 = vunpack.c.l.b16 %v3369
    %v4002 = vunpack.c.h.b16 %v3369
    %v4003 = vunpack.c.l.b16 %v3370
    %v4004 = vunpack.c.h.b16 %v3370
    %v4005 = vunpack.c.l.b16 %v3371
    %v4006 = vunpack.c.h.b16 %v3371
    %v4007 = vunpack.c.l.b16 %v3372
    %v4008 = vunpack.c.h.b16 %v3372
    %v4009 = vunpack.c.l.b16 %v3373
    %v4010 = vunpack.c.h.b16 %v3373
    %v4011 = vunpack.c.l.b16 %v3374
    %v4012 = vunpack.c.h.b16 %v3374
    %v4013 = vunpack.c.l.b16 %v3375
    %v4014 = vunpack.c.h.b16 %v3375
    %v4015 = vunpack.c.l.b16 %v3376
    %v4016 = vunpack.c.h.b16 %v3376
    %v4017 = vunpack.c.l.b16 %v3377
    %v4018 = vunpack.c.h.b16 %v3377
    %v4019 = vunpack.c.l.b16 %v3378
    %v4020 = vunpack.c.h.b16 %v3378
    %v4021 = vunpack.c.l.b16 %v3379
    %v4022 = vunpack.c.h.b16 %v3379
    %v4023 = vunpack.c.l.b16 %v3380
    %v4024 = vunpack.c.h.b16 %v3380
    %v4025 = vunpack.c.l.b16 %v3381
    %v4026 = vunpack.c.h.b16 %v3381
    %v4027 = vunpack.c.l.b16 %v3382
    %v4028 = vunpack.c.h.b16 %v3382
    %v4029 = vunpack.c.l.b16 %v3383
    %v4030 = vunpack.c.h.b16 %v3383
    %v4031 = vunpack.c.l.b16 %v3384
    %v4032 = vunpack.c.h.b16 %v3384
    %v4033 = vunpack.c.l.b16 %v3385
    %v4034 = vunpack.c.h.b16 %v3385
    %v4035 = vunpack.c.l.b16 %v3386
    %v4036 = vunpack.c.h.b16 %v3386
    %v4037 = vunpack.c.l.b16 %v3387
    %v4038 = vunpack.c.h.b16 %v3387
    %v4039 = vunpack.c.l.b16 %v3388
    %v4040 = vunpack.c.h.b16 %v3388
    %v4041 = vunpack.c.l.b16 %v3389
    %v4042 = vunpack.c.h.b16 %v3389
    %v4043 = vunpack.c.l.b16 %v3390
    %v4044 = vunpack.c.h.b16 %v3390
    %v4045 = vunpack.c.l.b16 %v3391
    %v4046 = vunpack.c.h.b16 %v3391
    %v4047 = vunpack.c.l.b16 %v3392
    %v4048 = vunpack.c.h.b16 %v3392
    %v4049 = vunpack.c.l.b16 %v3393
    %v4050 = vunpack.c.h.b16 %v3393
    %v4051 = vunpack.c.l.b16 %v3394
    %v4052 = vunpack.c.h.b16 %v3394
    %v4053 = vunpack.c.l.b16 %v3395
    %v4054 = vunpack.c.h.b16 %v3395
    %v4055 = vunpack.c.l.b16 %v3396
    %v4056 = vunpack.c.h.b16 %v3396
    %v4057 = vunpack.c.l.b16 %v3397
    %v4058 = vunpack.c.h.b16 %v3397
    %v4059 = vunpack.c.l.b16 %v3398
    %v4060 = vunpack.c.h.b16 %v3398
    %v4061 = vunpack.c.l.b16 %v3399
    %v4062 = vunpack.c.h.b16 %v3399
    %v4063 = vunpack.c.l.b16 %v3400
    %v4064 = vunpack.c.h.b16 %v3400
    %v4065 = vunpack.c.l.b16 %v3401
    %v4066 = vunpack.c.h.b16 %v3401
    %v4067 = vunpack.c.l.b16 %v3402
    %v4068 = vunpack.c.h.b16 %v3402
    %v4069 = vunpack.c.l.b16 %v3403
    %v4070 = vunpack.c.h.b16 %v3403
    %v4071 = vunpack.c.l.b16 %v3404
    %v4072 = vunpack.c.h.b16 %v3404
    %v4073 = vunpack.c.l.b16 %v3405
    %v4074 = vunpack.c.h.b16 %v3405
    %v4075 = vunpack.c.l.b16 %v3406
    %v4076 = vunpack.c.h.b16 %v3406
    %v4077 = vunpack.c.l.b16 %v3407
    %v4078 = vunpack.c.h.b16 %v3407
    %v4079 = vunpack.c.l.b16 %v3408
    %v4080 = vunpack.c.h.b16 %v3408
    %v4081 = vunpack.c.l.b16 %v3409
    %v4082 = vunpack.c.h.b16 %v3409
    %v4083 = vunpack.c.l.b16 %v3410
    %v4084 = vunpack.c.h.b16 %v3410
    %v4085 = vunpack.c.l.b16 %v3411
    %v4086 = vunpack.c.h.b16 %v3411
    %v4087 = vunpack.c.l.b16 %v3412
    %v4088 = vunpack.c.h.b16 %v3412
    %v4089 = vunpack.c.l.b16 %v3413
    %v4090 = vunpack.c.h.b16 %v3413
    %v4091 = vunpack.c.l.b16 %v3414
    %v4092 = vunpack.c.h.b16 %v3414
    %v4093 = vunpack.c.l.b16 %v3415
    %v4094 = vunpack.c.h.b16 %v3415
    %v4095 = vunpack.c.l.b16 %v3416
    %v4096 = vunpack.c.h.b16 %v3416
    %v4097 = vunpack.c.l.b16 %v3417
    %v4098 = vunpack.c.h.b16 %v3417
    %v4099 = vunpack.c.l.b16 %v3418
    %v4100 = vunpack.c.h.b16 %v3418
    %v4101 = vunpack.c.l.b16 %v3419
    %v4102 = vunpack.c.h.b16 %v3419
    %v4103 = vunpack.c.l.b16 %v3420
    %v4104 = vunpack.c.h.b16 %v3420
    %v4105 = vunpack.c.l.b16 %v3421
    %v4106 = vunpack.c.h.b16 %v3421
    %v4107 = vunpack.c.l.b16 %v3422
    %v4108 = vunpack.c.h.b16 %v3422
    %v4109 = vunpack.c.l.b16 %v3423
    %v4110 = vunpack.c.h.b16 %v3423
    %v4111 = vunpack.c.l.b16 %v3424
    %v4112 = vunpack.c.h.b16 %v3424
    %v4113 = vunpack.c.l.b16 %v3425
    %v4114 = vunpack.c.h.b16 %v3425
    %v4115 = vunpack.c.l.b16 %v3426
    %v4116 = vunpack.c.h.b16 %v3426
    %v4117 = vunpack.c.l.b16 %v3427
    %v4118 = vunpack.c.h.b16 %v3427
    %v4119 = vunpack.c.l.b16 %v3428
    %v4120 = vunpack.c.h.b16 %v3428
    %v4121 = vunpack.c.l.b16 %v3429
    %v4122 = vunpack.c.h.b16 %v3429
    %v4123 = vunpack.c.l.b16 %v3430
    %v4124 = vunpack.c.h.b16 %v3430
    %v4125 = vunpack.c.l.b16 %v3431
    %v4126 = vunpack.c.h.b16 %v3431
    %v4127 = vunpack.c.l.b16 %v3432
    %v4128 = vunpack.c.h.b16 %v3432
    %v4129 = vunpack.c.l.b16 %v3433
    %v4130 = vunpack.c.h.b16 %v3433
    %v4131 = vunpack.c.l.b16 %v3434
    %v4132 = vunpack.c.h.b16 %v3434
    %v4133 = vunpack.c.l.b16 %v3435
    %v4134 = vunpack.c.h.b16 %v3435
    %v4135 = vunpack.c.l.b16 %v3436
    %v4136 = vunpack.c.h.b16 %v3436
    %v4137 = vunpack.c.l.b16 %v3437
    %v4138 = vunpack.c.h.b16 %v3437
    %v4139 = vunpack.c.l.b16 %v3438
    %v4140 = vunpack.c.h.b16 %v3438
    %v4141 = vunpack.c.l.b16 %v3439
    %v4142 = vunpack.c.h.b16 %v3439
    %v4143 = vunpack.c.l.b16 %v3440
    %v4144 = vunpack.c.h.b16 %v3440
    %v4145 = vunpack.c.l.b16 %v3441
    %v4146 = vunpack.c.h.b16 %v3441
    %v4147 = vunpack.c.l.b16 %v3442
    %v4148 = vunpack.c.h.b16 %v3442
    %v4149 = vunpack.c.l.b16 %v3443
    %v4150 = vunpack.c.h.b16 %v3443
    %v4151 = vunpack.c.l.b16 %v3444
    %v4152 = vunpack.c.h.b16 %v3444
    %v4153 = vunpack.c.l.b16 %v3445
    %v4154 = vunpack.c.h.b16 %v3445
    %v4155 = vunpack.c.l.b16 %v3446
    %v4156 = vunpack.c.h.b16 %v3446
    %v4157 = vunpack.c.l.b16 %v3447
    %v4158 = vunpack.c.h.b16 %v3447
    %v4159 = vunpack.c.l.b16 %v3448
    %v4160 = vunpack.c.h.b16 %v3448
    %v4161 = vunpack.c.l.b16 %v3449
    %v4162 = vunpack.c.h.b16 %v3449
    %v4163 = vunpack.c.l.b16 %v3450
    %v4164 = vunpack.c.h.b16 %v3450
    %v4165 = vunpack.c.l.b16 %v3451
    %v4166 = vunpack.c.h.b16 %v3451
    %v4167 = vunpack.c.l.b16 %v3452
    %v4168 = vunpack.c.h.b16 %v3452
    %v4169 = vunpack.c.l.b16 %v3453
    %v4170 = vunpack.c.h.b16 %v3453
    %v4171 = vunpack.c.l.b16 %v3454
    %v4172 = vunpack.c.h.b16 %v3454
    %v4173 = vunpack.c.l.b16 %v3455
    %v4174 = vunpack.c.h.b16 %v3455
    %v4175 = vunpack.c.l.b16 %v3456
    %v4176 = vunpack.c.h.b16 %v3456
    %v4177 = vunpack.c.l.b16 %v3457
    %v4178 = vunpack.c.h.b16 %v3457
    %v4179 = vunpack.c.l.b16 %v3458
    %v4180 = vunpack.c.h.b16 %v3458
    %v4181 = vunpack.c.l.b16 %v3459
    %v4182 = vunpack.c.h.b16 %v3459
    %v4183 = vunpack.c.l.b16 %v3460
    %v4184 = vunpack.c.h.b16 %v3460
    %v4185 = vunpack.c.l.b16 %v3461
    %v4186 = vunpack.c.h.b16 %v3461
    %v4187 = vunpack.c.l.b16 %v3462
    %v4188 = vunpack.c.h.b16 %v3462
    %v4189 = vunpack.c.l.b16 %v3463
    %v4190 = vunpack.c.h.b16 %v3463
    %v4191 = vunpack.c.l.b16 %v3464
    %v4192 = vunpack.c.h.b16 %v3464
    %v4193 = vunpack.c.l.b16 %v3465
    %v4194 = vunpack.c.h.b16 %v3465
    %v4195 = vunpack.c.l.b16 %v3466
    %v4196 = vunpack.c.h.b16 %v3466
    %v4197 = vunpack.c.l.b16 %v3467
    %v4198 = vunpack.c.h.b16 %v3467
    %v4199 = vunpack.c.l.b16 %v3468
    %v4200 = vunpack.c.h.b16 %v3468
    %v4201 = vunpack.c.l.b16 %v3469
    %v4202 = vunpack.c.h.b16 %v3469
    %v4203 = vunpack.c.l.b16 %v3470
    %v4204 = vunpack.c.h.b16 %v3470
    %v4205 = vunpack.c.l.b16 %v3471
    %v4206 = vunpack.c.h.b16 %v3471
    %v4207 = vunpack.c.l.b16 %v3472
    %v4208 = vunpack.c.h.b16 %v3472
    %v4209 = vunpack.c.l.b16 %v3473
    %v4210 = vunpack.c.h.b16 %v3473
    %v4211 = vunpack.c.l.b16 %v3474
    %v4212 = vunpack.c.h.b16 %v3474
    %v4213 = vunpack.c.l.b16 %v3475
    %v4214 = vunpack.c.h.b16 %v3475
    %v4215 = vunpack.c.l.b16 %v3476
    %v4216 = vunpack.c.h.b16 %v3476
    %v4217 = vunpack.c.l.b16 %v3477
    %v4218 = vunpack.c.h.b16 %v3477
    %v4219 = vunpack.c.l.b16 %v3478
    %v4220 = vunpack.c.h.b16 %v3478
    %v4221 = vunpack.c.l.b16 %v3479
    %v4222 = vunpack.c.h.b16 %v3479
    %v4223 = vunpack.c.l.b16 %v3480
    %v4224 = vunpack.c.h.b16 %v3480
    %v4225 = vunpack.c.l.b16 %v3481
    %v4226 = vunpack.c.h.b16 %v3481
    %v4227 = vunpack.c.l.b16 %v3482
    %v4228 = vunpack.c.h.b16 %v3482
    %v4229 = vunpack.c.l.b16 %v3483
    %v4230 = vunpack.c.h.b16 %v3483
    %v4231 = vunpack.c.l.b16 %v3484
    %v4232 = vunpack.c.h.b16 %v3484
    %v4233 = vunpack.c.l.b16 %v3485
    %v4234 = vunpack.c.h.b16 %v3485
    %v4235 = vunpack.c.l.b16 %v3486
    %v4236 = vunpack.c.h.b16 %v3486
    %v4237 = vunpack.c.l.b16 %v3487
    %v4238 = vunpack.c.h.b16 %v3487
    %v4239 = vunpack.c.l.b16 %v3488
    %v4240 = vunpack.c.h.b16 %v3488
    %v4241 = vunpack.c.l.b16 %v3489
    %v4242 = vunpack.c.h.b16 %v3489
    %v4243 = vunpack.c.l.b16 %v3490
    %v4244 = vunpack.c.h.b16 %v3490
    %v4245 = vunpack.c.l.b16 %v3491
    %v4246 = vunpack.c.h.b16 %v3491
    %v4247 = vunpack.c.l.b16 %v3492
    %v4248 = vunpack.c.h.b16 %v3492
    %v4249 = vunpack.c.l.b16 %v3493
    %v4250 = vunpack.c.h.b16 %v3493
    %v4251 = vunpack.c.l.b16 %v3494
    %v4252 = vunpack.c.h.b16 %v3494
    %v4253 = vunpack.c.l.b16 %v3495
    %v4254 = vunpack.c.h.b16 %v3495
    %v4255 = vunpack.c.l.b16 %v3496
    %v4256 = vunpack.c.h.b16 %v3496
    %v4257 = vunpack.c.l.b16 %v3497
    %v4258 = vunpack.c.h.b16 %v3497
    %v4259 = vunpack.c.l.b16 %v3498
    %v4260 = vunpack.c.h.b16 %v3498
    %v4261 = vunpack.c.l.b16 %v3499
    %v4262 = vunpack.c.h.b16 %v3499
    %v4263 = vunpack.c.l.b16 %v3500
    %v4264 = vunpack.c.h.b16 %v3500
    %v4265 = vunpack.c.l.b16 %v3501
    %v4266 = vunpack.c.h.b16 %v3501
    %v4267 = vunpack.c.l.b16 %v3502
    %v4268 = vunpack.c.h.b16 %v3502
    %v4269 = vunpack.c.l.b16 %v3503
    %v4270 = vunpack.c.h.b16 %v3503
    %v4271 = vunpack.c.l.b16 %v3504
    %v4272 = vunpack.c.h.b16 %v3504
    %v4273 = vunpack.c.l.b16 %v3505
    %v4274 = vunpack.c.h.b16 %v3505
    %v4275 = vunpack.c.l.b16 %v3506
    %v4276 = vunpack.c.h.b16 %v3506
    %v4277 = vunpack.c.l.b16 %v3507
    %v4278 = vunpack.c.h.b16 %v3507
    %v4279 = vunpack.c.l.b16 %v3508
    %v4280 = vunpack.c.h.b16 %v3508
    %v4281 = vunpack.c.l.b16 %v3509
    %v4282 = vunpack.c.h.b16 %v3509
    %v4283 = vunpack.c.l.b16 %v3510
    %v4284 = vunpack.c.h.b16 %v3510
    %v4285 = vunpack.c.l.b16 %v3511
    %v4286 = vunpack.c.h.b16 %v3511
    %v4287 = vunpack.c.l.b16 %v3512
    %v4288 = vunpack.c.h.b16 %v3512
    %v4289 = vunpack.c.l.b16 %v3513
    %v4290 = vunpack.c.h.b16 %v3513
    %v4291 = vunpack.c.l.b16 %v3514
    %v4292 = vunpack.c.h.b16 %v3514
    %v4293 = vunpack.c.l.b16 %v3515
    %v4294 = vunpack.c.h.b16 %v3515
    %v4295 = vunpack.c.l.b16 %v3516
    %v4296 = vunpack.c.h.b16 %v3516
    %v4297 = vunpack.c.l.b16 %v3517
    %v4298 = vunpack.c.h.b16 %v3517
    %v4299 = vunpack.c.l.b16 %v3518
    %v4300 = vunpack.c.h.b16 %v3518
    %v4301 = vunpack.c.l.b16 %v3519
    %v4302 = vunpack.c.h.b16 %v3519
    %v4303 = vunpack.c.l.b16 %v3520
    %v4304 = vunpack.c.h.b16 %v3520
    %v4305 = vunpack.c.l.b16 %v3521
    %v4306 = vunpack.c.h.b16 %v3521
    %v4307 = vunpack.c.l.b16 %v3522
    %v4308 = vunpack.c.h.b16 %v3522
    %v4309 = vunpack.c.l.b16 %v3523
    %v4310 = vunpack.c.h.b16 %v3523
    %v4311 = vunpack.c.l.b16 %v3524
    %v4312 = vunpack.c.h.b16 %v3524
    %v4313 = vunpack.c.l.b16 %v3525
    %v4314 = vunpack.c.h.b16 %v3525
    %v4315 = vunpack.c.l.b16 %v3526
    %v4316 = vunpack.c.h.b16 %v3526
    %v4317 = vunpack.c.l.b16 %v3527
    %v4318 = vunpack.c.h.b16 %v3527
    %v4319 = vunpack.c.l.b16 %v3528
    %v4320 = vunpack.c.h.b16 %v3528
    %v4321 = vunpack.c.l.b16 %v3529
    %v4322 = vunpack.c.h.b16 %v3529
    %v4323 = vunpack.c.l.b16 %v3530
    %v4324 = vunpack.c.h.b16 %v3530
    %v4325 = vunpack.c.l.b16 %v3531
    %v4326 = vunpack.c.h.b16 %v3531
    %v4327 = vunpack.c.l.b16 %v3532
    %v4328 = vunpack.c.h.b16 %v3532
    %v4329 = vunpack.c.l.b16 %v3533
    %v4330 = vunpack.c.h.b16 %v3533
    %v4331 = vunpack.c.l.b16 %v3534
    %v4332 = vunpack.c.h.b16 %v3534
    %v4333 = vunpack.c.l.b16 %v3535
    %v4334 = vunpack.c.h.b16 %v3535
    %v4335 = vunpack.c.l.b16 %v3536
    %v4336 = vunpack.c.h.b16 %v3536
    %v4337 = vunpack.c.l.b16 %v3537
    %v4338 = vunpack.c.h.b16 %v3537
    %v4339 = vunpack.c.l.b16 %v3538
    %v4340 = vunpack.c.h.b16 %v3538
    %v4341 = vunpack.c.l.b16 %v3539
    %v4342 = vunpack.c.h.b16 %v3539
    %v4343 = vunpack.c.l.b16 %v3540
    %v4344 = vunpack.c.h.b16 %v3540
    %v4345 = vunpack.c.l.b16 %v3541
    %v4346 = vunpack.c.h.b16 %v3541
    %v4347 = vunpack.c.l.b16 %v3542
    %v4348 = vunpack.c.h.b16 %v3542
    %v4349 = vunpack.c.l.b16 %v3543
    %v4350 = vunpack.c.h.b16 %v3543
    %v4351 = vunpack.c.l.b16 %v3544
    %v4352 = vunpack.c.h.b16 %v3544
    %v4353 = vunpack.c.l.b16 %v3545
    %v4354 = vunpack.c.h.b16 %v3545
    %v4355 = vunpack.c.l.b16 %v3546
    %v4356 = vunpack.c.h.b16 %v3546
    %v4357 = vpack.c.b16 %v3853, %v3845
    %v4358 = vpack.c.b16 %v3854, %v3846
    %v4359 = vpack.c.b16 %v3855, %v3847
    %v4360 = vpack.c.b16 %v3856, %v3848
    %v4361 = vpack.c.b16 %v3857, %v3849
    %v4362 = vpack.c.b16 %v3858, %v3850
    %v4363 = vpack.c.b16 %v3859, %v3851
    %v4364 = vpack.c.b16 %v3860, %v3852
    %v4365 = vpack.c.b16 %v3869, %v3861
    %v4366 = vpack.c.b16 %v3870, %v3862
    %v4367 = vpack.c.b16 %v3871, %v3863
    %v4368 = vpack.c.b16 %v3872, %v3864
    %v4369 = vpack.c.b16 %v3873, %v3865
    %v4370 = vpack.c.b16 %v3874, %v3866
    %v4371 = vpack.c.b16 %v3875, %v3867
    %v4372 = vpack.c.b16 %v3876, %v3868
    %v4373 = vpack.c.b16 %v3885, %v3877
    %v4374 = vpack.c.b16 %v3886, %v3878
    %v4375 = vpack.c.b16 %v3887, %v3879
    %v4376 = vpack.c.b16 %v3888, %v3880
    %v4377 = vpack.c.b16 %v3889, %v3881
    %v4378 = vpack.c.b16 %v3890, %v3882
    %v4379 = vpack.c.b16 %v3891, %v3883
    %v4380 = vpack.c.b16 %v3892, %v3884
    %v4381 = vpack.c.b16 %v3901, %v3893
    %v4382 = vpack.c.b16 %v3902, %v3894
    %v4383 = vpack.c.b16 %v3903, %v3895
    %v4384 = vpack.c.b16 %v3904, %v3896
    %v4385 = vpack.c.b16 %v3905, %v3897
    %v4386 = vpack.c.b16 %v3906, %v3898
    %v4387 = vpack.c.b16 %v3907, %v3899
    %v4388 = vpack.c.b16 %v3908, %v3900
    %v4389 = vpack.c.b16 %v3917, %v3909
    %v4390 = vpack.c.b16 %v3918, %v3910
    %v4391 = vpack.c.b16 %v3919, %v3911
    %v4392 = vpack.c.b16 %v3920, %v3912
    %v4393 = vpack.c.b16 %v3921, %v3913
    %v4394 = vpack.c.b16 %v3922, %v3914
    %v4395 = vpack.c.b16 %v3923, %v3915
    %v4396 = vpack.c.b16 %v3924, %v3916
    %v4397 = vpack.c.b16 %v3933, %v3925
    %v4398 = vpack.c.b16 %v3934, %v3926
    %v4399 = vpack.c.b16 %v3935, %v3927
    %v4400 = vpack.c.b16 %v3936, %v3928
    %v4401 = vpack.c.b16 %v3937, %v3929
    %v4402 = vpack.c.b16 %v3938, %v3930
    %v4403 = vpack.c.b16 %v3939, %v3931
    %v4404 = vpack.c.b16 %v3940, %v3932
    %v4405 = vpack.c.b16 %v3949, %v3941
    %v4406 = vpack.c.b16 %v3950, %v3942
    %v4407 = vpack.c.b16 %v3951, %v3943
    %v4408 = vpack.c.b16 %v3952, %v3944
    %v4409 = vpack.c.b16 %v3953, %v3945
    %v4410 = vpack.c.b16 %v3954, %v3946
    %v4411 = vpack.c.b16 %v3955, %v3947
    %v4412 = vpack.c.b16 %v3956, %v3948
    %v4413 = vpack.c.b16 %v3965, %v3957
    %v4414 = vpack.c.b16 %v3966, %v3958
    %v4415 = vpack.c.b16 %v3967, %v3959
    %v4416 = vpack.c.b16 %v3968, %v3960
    %v4417 = vpack.c.b16 %v3969, %v3961
    %v4418 = vpack.c.b16 %v3970, %v3962
    %v4419 = vpack.c.b16 %v3971, %v3963
    %v4420 = vpack.c.b16 %v3972, %v3964
    %v4421 = vpack.c.b16 %v3981, %v3973
    %v4422 = vpack.c.b16 %v3982, %v3974
    %v4423 = vpack.c.b16 %v3983, %v3975
    %v4424 = vpack.c.b16 %v3984, %v3976
    %v4425 = vpack.c.b16 %v3985, %v3977
    %v4426 = vpack.c.b16 %v3986, %v3978
    %v4427 = vpack.c.b16 %v3987, %v3979
    %v4428 = vpack.c.b16 %v3988, %v3980
    %v4429 = vpack.c.b16 %v3997, %v3989
    %v4430 = vpack.c.b16 %v3998, %v3990
    %v4431 = vpack.c.b16 %v3999, %v3991
    %v4432 = vpack.c.b16 %v4000, %v3992
    %v4433 = vpack.c.b16 %v4001, %v3993
    %v4434 = vpack.c.b16 %v4002, %v3994
    %v4435 = vpack.c.b16 %v4003, %v3995
    %v4436 = vpack.c.b16 %v4004, %v3996
    %v4437 = vpack.c.b16 %v4013, %v4005
    %v4438 = vpack.c.b16 %v4014, %v4006
    %v4439 = vpack.c.b16 %v4015, %v4007
    %v4440 = vpack.c.b16 %v4016, %v4008
    %v4441 = vpack.c.b16 %v4017, %v4009
    %v4442 = vpack.c.b16 %v4018, %v4010
    %v4443 = vpack.c.b16 %v4019, %v4011
    %v4444 = vpack.c.b16 %v4020, %v4012
    %v4445 = vpack.c.b16 %v4029, %v4021
    %v4446 = vpack.c.b16 %v4030, %v4022
    %v4447 = vpack.c.b16 %v4031, %v4023
    %v4448 = vpack.c.b16 %v4032, %v4024
    %v4449 = vpack.c.b16 %v4033, %v4025
    %v4450 = vpack.c.b16 %v4034, %v4026
    %v4451 = vpack.c.b16 %v4035, %v4027
    %v4452 = vpack.c.b16 %v4036, %v4028
    %v4453 = vpack.c.b16 %v4045, %v4037
    %v4454 = vpack.c.b16 %v4046, %v4038
    %v4455 = vpack.c.b16 %v4047, %v4039
    %v4456 = vpack.c.b16 %v4048, %v4040
    %v4457 = vpack.c.b16 %v4049, %v4041
    %v4458 = vpack.c.b16 %v4050, %v4042
    %v4459 = vpack.c.b16 %v4051, %v4043
    %v4460 = vpack.c.b16 %v4052, %v4044
    %v4461 = vpack.c.b16 %v4061, %v4053
    %v4462 = vpack.c.b16 %v4062, %v4054
    %v4463 = vpack.c.b16 %v4063, %v4055
    %v4464 = vpack.c.b16 %v4064, %v4056
    %v4465 = vpack.c.b16 %v4065, %v4057
    %v4466 = vpack.c.b16 %v4066, %v4058
    %v4467 = vpack.c.b16 %v4067, %v4059
    %v4468 = vpack.c.b16 %v4068, %v4060
    %v4469 = vpack.c.b16 %v4077, %v4069
    %v4470 = vpack.c.b16 %v4078, %v4070
    %v4471 = vpack.c.b16 %v4079, %v4071
    %v4472 = vpack.c.b16 %v4080, %v4072
    %v4473 = vpack.c.b16 %v4081, %v4073
    %v4474 = vpack.c.b16 %v4082, %v4074
    %v4475 = vpack.c.b16 %v4083, %v4075
    %v4476 = vpack.c.b16 %v4084, %v4076
    %v4477 = vpack.c.b16 %v4093, %v4085
    %v4478 = vpack.c.b16 %v4094, %v4086
    %v4479 = vpack.c.b16 %v4095, %v4087
    %v4480 = vpack.c.b16 %v4096, %v4088
    %v4481 = vpack.c.b16 %v4097, %v4089
    %v4482 = vpack.c.b16 %v4098, %v4090
    %v4483 = vpack.c.b16 %v4099, %v4091
    %v4484 = vpack.c.b16 %v4100, %v4092
    %v4485 = vpack.c.b16 %v4109, %v4101
    %v4486 = vpack.c.b16 %v4110, %v4102
    %v4487 = vpack.c.b16 %v4111, %v4103
    %v4488 = vpack.c.b16 %v4112, %v4104
    %v4489 = vpack.c.b16 %v4113, %v4105
    %v4490 = vpack.c.b16 %v4114, %v4106
    %v4491 = vpack.c.b16 %v4115, %v4107
    %v4492 = vpack.c.b16 %v4116, %v4108
    %v4493 = vpack.c.b16 %v4125, %v4117
    %v4494 = vpack.c.b16 %v4126, %v4118
    %v4495 = vpack.c.b16 %v4127, %v4119
    %v4496 = vpack.c.b16 %v4128, %v4120
    %v4497 = vpack.c.b16 %v4129, %v4121
    %v4498 = vpack.c.b16 %v4130, %v4122
    %v4499 = vpack.c.b16 %v4131, %v4123
    %v4500 = vpack.c.b16 %v4132, %v4124
    %v4501 = vpack.c.b16 %v4141, %v4133
    %v4502 = vpack.c.b16 %v4142, %v4134
    %v4503 = vpack.c.b16 %v4143, %v4135
    %v4504 = vpack.c.b16 %v4144, %v4136
    %v4505 = vpack.c.b16 %v4145, %v4137
    %v4506 = vpack.c.b16 %v4146, %v4138
    %v4507 = vpack.c.b16 %v4147, %v4139
    %v4508 = vpack.c.b16 %v4148, %v4140
    %v4509 = vpack.c.b16 %v4157, %v4149
    %v4510 = vpack.c.b16 %v4158, %v4150
    %v4511 = vpack.c.b16 %v4159, %v4151
    %v4512 = vpack.c.b16 %v4160, %v4152
    %v4513 = vpack.c.b16 %v4161, %v4153
    %v4514 = vpack.c.b16 %v4162, %v4154
    %v4515 = vpack.c.b16 %v4163, %v4155
    %v4516 = vpack.c.b16 %v4164, %v4156
    %v4517 = vpack.c.b16 %v4173, %v4165
    %v4518 = vpack.c.b16 %v4174, %v4166
    %v4519 = vpack.c.b16 %v4175, %v4167
    %v4520 = vpack.c.b16 %v4176, %v4168
    %v4521 = vpack.c.b16 %v4177, %v4169
    %v4522 = vpack.c.b16 %v4178, %v4170
    %v4523 = vpack.c.b16 %v4179, %v4171
    %v4524 = vpack.c.b16 %v4180, %v4172
    %v4525 = vpack.c.b16 %v4189, %v4181
    %v4526 = vpack.c.b16 %v4190, %v4182
    %v4527 = vpack.c.b16 %v4191, %v4183
    %v4528 = vpack.c.b16 %v4192, %v4184
    %v4529 = vpack.c.b16 %v4193, %v4185
    %v4530 = vpack.c.b16 %v4194, %v4186
    %v4531 = vpack.c.b16 %v4195, %v4187
    %v4532 = vpack.c.b16 %v4196, %v4188
    %v4533 = vpack.c.b16 %v4205, %v4197
    %v4534 = vpack.c.b16 %v4206, %v4198
    %v4535 = vpack.c.b16 %v4207, %v4199
    %v4536 = vpack.c.b16 %v4208, %v4200
    %v4537 = vpack.c.b16 %v4209, %v4201
    %v4538 = vpack.c.b16 %v4210, %v4202
    %v4539 = vpack.c.b16 %v4211, %v4203
    %v4540 = vpack.c.b16 %v4212, %v4204
    %v4541 = vpack.c.b16 %v4221, %v4213
    %v4542 = vpack.c.b16 %v4222, %v4214
    %v4543 = vpack.c.b16 %v4223, %v4215
    %v4544 = vpack.c.b16 %v4224, %v4216
    %v4545 = vpack.c.b16 %v4225, %v4217
    %v4546 = vpack.c.b16 %v4226, %v4218
    %v4547 = vpack.c.b16 %v4227, %v4219
    %v4548 = vpack.c.b16 %v4228, %v4220
    %v4549 = vpack.c.b16 %v4237, %v4229
    %v4550 = vpack.c.b16 %v4238, %v4230
    %v4551 = vpack.c.b16 %v4239, %v4231
    %v4552 = vpack.c.b16 %v4240, %v4232
    %v4553 = vpack.c.b16 %v4241, %v4233
    %v4554 = vpack.c.b16 %v4242, %v4234
    %v4555 = vpack.c.b16 %v4243, %v4235
    %v4556 = vpack.c.b16 %v4244, %v4236
    %v4557 = vpack.c.b16 %v4253, %v4245
    %v4558 = vpack.c.b16 %v4254, %v4246
    %v4559 = vpack.c.b16 %v4255, %v4247
    %v4560 = vpack.c.b16 %v4256, %v4248
    %v4561 = vpack.c.b16 %v4257, %v4249
    %v4562 = vpack.c.b16 %v4258, %v4250
    %v4563 = vpack.c.b16 %v4259, %v4251
    %v4564 = vpack.c.b16 %v4260, %v4252
    %v4565 = vpack.c.b16 %v4269, %v4261
    %v4566 = vpack.c.b16 %v4270, %v4262
    %v4567 = vpack.c.b16 %v4271, %v4263
    %v4568 = vpack.c.b16 %v4272, %v4264
    %v4569 = vpack.c.b16 %v4273, %v4265
    %v4570 = vpack.c.b16 %v4274, %v4266
    %v4571 = vpack.c.b16 %v4275, %v4267
    %v4572 = vpack.c.b16 %v4276, %v4268
    %v4573 = vpack.c.b16 %v4285, %v4277
    %v4574 = vpack.c.b16 %v4286, %v4278
    %v4575 = vpack.c.b16 %v4287, %v4279
    %v4576 = vpack.c.b16 %v4288, %v4280
    %v4577 = vpack.c.b16 %v4289, %v4281
    %v4578 = vpack.c.b16 %v4290, %v4282
    %v4579 = vpack.c.b16 %v4291, %v4283
    %v4580 = vpack.c.b16 %v4292, %v4284
    %v4581 = vpack.c.b16 %v4301, %v4293
    %v4582 = vpack.c.b16 %v4302, %v4294
    %v4583 = vpack.c.b16 %v4303, %v4295
    %v4584 = vpack.c.b16 %v4304, %v4296
    %v4585 = vpack.c.b16 %v4305, %v4297
    %v4586 = vpack.c.b16 %v4306, %v4298
    %v4587 = vpack.c.b16 %v4307, %v4299
    %v4588 = vpack.c.b16 %v4308, %v4300
    %v4589 = vpack.c.b16 %v4317, %v4309
    %v4590 = vpack.c.b16 %v4318, %v4310
    %v4591 = vpack.c.b16 %v4319, %v4311
    %v4592 = vpack.c.b16 %v4320, %v4312
    %v4593 = vpack.c.b16 %v4321, %v4313
    %v4594 = vpack.c.b16 %v4322, %v4314
    %v4595 = vpack.c.b16 %v4323, %v4315
    %v4596 = vpack.c.b16 %v4324, %v4316
    %v4597 = vpack.c.b16 %v4333, %v4325
    %v4598 = vpack.c.b16 %v4334, %v4326
    %v4599 = vpack.c.b16 %v4335, %v4327
    %v4600 = vpack.c.b16 %v4336, %v4328
    %v4601 = vpack.c.b16 %v4337, %v4329
    %v4602 = vpack.c.b16 %v4338, %v4330
    %v4603 = vpack.c.b16 %v4339, %v4331
    %v4604 = vpack.c.b16 %v4340, %v4332
    %v4605 = vpack.c.b16 %v4349, %v4341
    %v4606 = vpack.c.b16 %v4350, %v4342
    %v4607 = vpack.c.b16 %v4351, %v4343
    %v4608 = vpack.c.b16 %v4352, %v4344
    %v4609 = vpack.c.b16 %v4353, %v4345
    %v4610 = vpack.c.b16 %v4354, %v4346
    %v4611 = vpack.c.b16 %v4355, %v4347
    %v4612 = vpack.c.b16 %v4356, %v4348
    %4869 = vmatprep.subr.bf16.mxu0 %v4358
    %4870 = vmatpush1.bf16.msra.mxu0 %v4357
    %4871 = vmatprep.subr.bf16.mxu0 %v4366
    %4872 = vmatpush1.bf16.msra.mxu0 %v4365
    %4873 = vmatprep.subr.bf16.mxu0 %v4374
    %4874 = vmatpush1.bf16.msra.mxu0 %v4373
    %4875 = vmatprep.subr.bf16.mxu0 %v4382
    %4876 = vmatpush1.bf16.msra.mxu0 %v4381
    %4877 = vmatprep.subr.bf16.mxu0 %v4390
    %4878 = vmatpush1.bf16.msra.mxu0 %v4389
    %4879 = vmatprep.subr.bf16.mxu0 %v4398
    %4880 = vmatpush1.bf16.msra.mxu0 %v4397
    %4881 = vmatprep.subr.bf16.mxu0 %v4406
    %4882 = vmatpush1.bf16.msra.mxu0 %v4405
    %4883 = vmatprep.subr.bf16.mxu0 %v4414
    %4884 = vmatpush1.bf16.msra.mxu0 %v4413
    %4885 = vmatprep.subr.bf16.mxu0 %v4422
    %4886 = vmatpush1.bf16.msra.mxu0 %v4421
    %4887 = vmatprep.subr.bf16.mxu0 %v4430
    %4888 = vmatpush1.bf16.msra.mxu0 %v4429
    %4889 = vmatprep.subr.bf16.mxu0 %v4438
    %4890 = vmatpush1.bf16.msra.mxu0 %v4437
    %4891 = vmatprep.subr.bf16.mxu0 %v4446
    %4892 = vmatpush1.bf16.msra.mxu0 %v4445
    %4893 = vmatprep.subr.bf16.mxu0 %v4454
    %4894 = vmatpush1.bf16.msra.mxu0 %v4453
    %4895 = vmatprep.subr.bf16.mxu0 %v4462
    %4896 = vmatpush1.bf16.msra.mxu0 %v4461
    %4897 = vmatprep.subr.bf16.mxu0 %v4470
    %4898 = vmatpush1.bf16.msra.mxu0 %v4469
    %4899 = vmatprep.subr.bf16.mxu0 %v4478
    %4900 = vmatpush1.bf16.msra.mxu0 %v4477
    %4901 = vmatprep.mubr.bf16.mxu0 %v3288
    %4902 = vmatmul.mubr.bf16.gmra.mrb[0].mxu0 %v3287
    %v4903 = vpop.f32.mrb[0].mxu0
    %v4904 = vadd.f32 %v3552, %v4903
    %v4905 = vpop.f32.mrb[0].mxu0
    %v4906 = vadd.f32 %v3556, %v4905
    %v4907 = vpop.f32.mrb[0].mxu0
    %v4908 = vpop.f32.mrb[0].mxu0
    %4909 = vdwg.mxu0
    %4910 = vmatprep.subr.bf16.mxu0 %v4486
    %4911 = vmatpush1.bf16.msra.mxu0 %v4485
    %4912 = vmatprep.subr.bf16.mxu0 %v4494
    %4913 = vmatpush1.bf16.msra.mxu0 %v4493
    %4914 = vmatprep.subr.bf16.mxu0 %v4502
    %4915 = vmatpush1.bf16.msra.mxu0 %v4501
    %4916 = vmatprep.subr.bf16.mxu0 %v4510
    %4917 = vmatpush1.bf16.msra.mxu0 %v4509
    %4918 = vmatprep.subr.bf16.mxu0 %v4518
    %4919 = vmatpush1.bf16.msra.mxu0 %v4517
    %4920 = vmatprep.subr.bf16.mxu0 %v4526
    %4921 = vmatpush1.bf16.msra.mxu0 %v4525
    %4922 = vmatprep.subr.bf16.mxu0 %v4534
    %4923 = vmatpush1.bf16.msra.mxu0 %v4533
    %4924 = vmatprep.subr.bf16.mxu0 %v4542
    %4925 = vmatpush1.bf16.msra.mxu0 %v4541
    %4926 = vmatprep.subr.bf16.mxu0 %v4550
    %4927 = vmatpush1.bf16.msra.mxu0 %v4549
    %4928 = vmatprep.subr.bf16.mxu0 %v4558
    %4929 = vmatpush1.bf16.msra.mxu0 %v4557
    %4930 = vmatprep.subr.bf16.mxu0 %v4566
    %4931 = vmatpush1.bf16.msra.mxu0 %v4565
    %4932 = vmatprep.subr.bf16.mxu0 %v4574
    %4933 = vmatpush1.bf16.msra.mxu0 %v4573
    %4934 = vmatprep.subr.bf16.mxu0 %v4582
    %4935 = vmatpush1.bf16.msra.mxu0 %v4581
    %4936 = vmatprep.subr.bf16.mxu0 %v4590
    %4937 = vmatpush1.bf16.msra.mxu0 %v4589
    %4938 = vmatprep.subr.bf16.mxu0 %v4598
    %4939 = vmatpush1.bf16.msra.mxu0 %v4597
    %4940 = vmatprep.subr.bf16.mxu0 %v4606
    %4941 = vmatpush1.bf16.msra.mxu0 %v4605
    %4942 = vmatprep.mubr.bf16.mxu0 %v3290
    %4943 = vmatmul.mubr.bf16.gmra.mrb[0].mxu0 %v3289
    %v4944 = vpop.f32.mrb[0].mxu0
    %v4945 = vadd.f32 %v4904, %v4944
    %v4946 = vpop.f32.mrb[0].mxu0
    %v4947 = vadd.f32 %v4906, %v4946
    %v4948 = vpop.f32.mrb[0].mxu0
    %v4949 = vpop.f32.mrb[0].mxu0
    %4950 = vdwg.mxu0
    %4951 = vmatprep.subr.bf16.mxu0 %v4360
    %4952 = vmatpush1.bf16.msra.mxu0 %v4359
    %4953 = vmatprep.subr.bf16.mxu0 %v4368
    %4954 = vmatpush1.bf16.msra.mxu0 %v4367
    %4955 = vmatprep.subr.bf16.mxu0 %v4376
    %4956 = vmatpush1.bf16.msra.mxu0 %v4375
    %4957 = vmatprep.subr.bf16.mxu0 %v4384
    %4958 = vmatpush1.bf16.msra.mxu0 %v4383
    %4959 = vmatprep.subr.bf16.mxu0 %v4392
    %4960 = vmatpush1.bf16.msra.mxu0 %v4391
    %4961 = vmatprep.subr.bf16.mxu0 %v4400
    %4962 = vmatpush1.bf16.msra.mxu0 %v4399
    %4963 = vmatprep.subr.bf16.mxu0 %v4408
    %4964 = vmatpush1.bf16.msra.mxu0 %v4407
    %4965 = vmatprep.subr.bf16.mxu0 %v4416
    %4966 = vmatpush1.bf16.msra.mxu0 %v4415
    %4967 = vmatprep.subr.bf16.mxu0 %v4424
    %4968 = vmatpush1.bf16.msra.mxu0 %v4423
    %4969 = vmatprep.subr.bf16.mxu0 %v4432
    %4970 = vmatpush1.bf16.msra.mxu0 %v4431
    %4971 = vmatprep.subr.bf16.mxu0 %v4440
    %4972 = vmatpush1.bf16.msra.mxu0 %v4439
    %4973 = vmatprep.subr.bf16.mxu0 %v4448
    %4974 = vmatpush1.bf16.msra.mxu0 %v4447
    %4975 = vmatprep.subr.bf16.mxu0 %v4456
    %4976 = vmatpush1.bf16.msra.mxu0 %v4455
    %4977 = vmatprep.subr.bf16.mxu0 %v4464
    %4978 = vmatpush1.bf16.msra.mxu0 %v4463
    %4979 = vmatprep.subr.bf16.mxu0 %v4472
    %4980 = vmatpush1.bf16.msra.mxu0 %v4471
    %4981 = vmatprep.subr.bf16.mxu0 %v4480
    %4982 = vmatpush1.bf16.msra.mxu0 %v4479
    %4983 = vmatprep.mubr.bf16.mxu0 %v3288
    %4984 = vmatmul.mubr.bf16.gmra.mrb[0].mxu0 %v3287
    %v4985 = vpop.f32.mrb[0].mxu0
    %v4986 = vadd.f32 %v3560, %v4985
    %v4987 = vpop.f32.mrb[0].mxu0
    %v4988 = vadd.f32 %v3564, %v4987
    %v4989 = vpop.f32.mrb[0].mxu0
    %v4990 = vpop.f32.mrb[0].mxu0
    %4991 = vdwg.mxu0
    %4992 = vmatprep.subr.bf16.mxu0 %v4488
    %4993 = vmatpush1.bf16.msra.mxu0 %v4487
    %4994 = vmatprep.subr.bf16.mxu0 %v4496
    %4995 = vmatpush1.bf16.msra.mxu0 %v4495
    %4996 = vmatprep.subr.bf16.mxu0 %v4504
    %4997 = vmatpush1.bf16.msra.mxu0 %v4503
    %4998 = vmatprep.subr.bf16.mxu0 %v4512
    %4999 = vmatpush1.bf16.msra.mxu0 %v4511
    %5000 = vmatprep.subr.bf16.mxu0 %v4520
    %5001 = vmatpush1.bf16.msra.mxu0 %v4519
    %5002 = vmatprep.subr.bf16.mxu0 %v4528
    %5003 = vmatpush1.bf16.msra.mxu0 %v4527
    %5004 = vmatprep.subr.bf16.mxu0 %v4536
    %5005 = vmatpush1.bf16.msra.mxu0 %v4535
    %5006 = vmatprep.subr.bf16.mxu0 %v4544
    %5007 = vmatpush1.bf16.msra.mxu0 %v4543
    %5008 = vmatprep.subr.bf16.mxu0 %v4552
    %5009 = vmatpush1.bf16.msra.mxu0 %v4551
    %5010 = vmatprep.subr.bf16.mxu0 %v4560
    %5011 = vmatpush1.bf16.msra.mxu0 %v4559
    %5012 = vmatprep.subr.bf16.mxu0 %v4568
    %5013 = vmatpush1.bf16.msra.mxu0 %v4567
    %5014 = vmatprep.subr.bf16.mxu0 %v4576
    %5015 = vmatpush1.bf16.msra.mxu0 %v4575
    %5016 = vmatprep.subr.bf16.mxu0 %v4584
    %5017 = vmatpush1.bf16.msra.mxu0 %v4583
    %5018 = vmatprep.subr.bf16.mxu0 %v4592
    %5019 = vmatpush1.bf16.msra.mxu0 %v4591
    %5020 = vmatprep.subr.bf16.mxu0 %v4600
    %5021 = vmatpush1.bf16.msra.mxu0 %v4599
    %5022 = vmatprep.subr.bf16.mxu0 %v4608
    %5023 = vmatpush1.bf16.msra.mxu0 %v4607
    %5024 = vmatprep.mubr.bf16.mxu0 %v3290
    %5025 = vmatmul.mubr.bf16.gmra.mrb[0].mxu0 %v3289
    %v5026 = vpop.f32.mrb[0].mxu0
    %v5027 = vadd.f32 %v4986, %v5026
    %v5028 = vpop.f32.mrb[0].mxu0
    %v5029 = vadd.f32 %v4988, %v5028
    %v5030 = vpop.f32.mrb[0].mxu0
    %v5031 = vpop.f32.mrb[0].mxu0
    %5032 = vdwg.mxu0
    %5033 = vmatprep.subr.bf16.mxu0 %v4362
    %5034 = vmatpush1.bf16.msra.mxu0 %v4361
    %5035 = vmatprep.subr.bf16.mxu0 %v4370
    %5036 = vmatpush1.bf16.msra.mxu0 %v4369
    %5037 = vmatprep.subr.bf16.mxu0 %v4378
    %5038 = vmatpush1.bf16.msra.mxu0 %v4377
    %5039 = vmatprep.subr.bf16.mxu0 %v4386
    %5040 = vmatpush1.bf16.msra.mxu0 %v4385
    %5041 = vmatprep.subr.bf16.mxu0 %v4394
    %5042 = vmatpush1.bf16.msra.mxu0 %v4393
    %5043 = vmatprep.subr.bf16.mxu0 %v4402
    %5044 = vmatpush1.bf16.msra.mxu0 %v4401
    %5045 = vmatprep.subr.bf16.mxu0 %v4410
    %5046 = vmatpush1.bf16.msra.mxu0 %v4409
    %5047 = vmatprep.subr.bf16.mxu0 %v4418
    %5048 = vmatpush1.bf16.msra.mxu0 %v4417
    %5049 = vmatprep.subr.bf16.mxu0 %v4426
    %5050 = vmatpush1.bf16.msra.mxu0 %v4425
    %5051 = vmatprep.subr.bf16.mxu0 %v4434
    %5052 = vmatpush1.bf16.msra.mxu0 %v4433
    %5053 = vmatprep.subr.bf16.mxu0 %v4442
    %5054 = vmatpush1.bf16.msra.mxu0 %v4441
    %5055 = vmatprep.subr.bf16.mxu0 %v4450
    %5056 = vmatpush1.bf16.msra.mxu0 %v4449
    %5057 = vmatprep.subr.bf16.mxu0 %v4458
    %5058 = vmatpush1.bf16.msra.mxu0 %v4457
    %5059 = vmatprep.subr.bf16.mxu0 %v4466
    %5060 = vmatpush1.bf16.msra.mxu0 %v4465
    %5061 = vmatprep.subr.bf16.mxu0 %v4474
    %5062 = vmatpush1.bf16.msra.mxu0 %v4473
    %5063 = vmatprep.subr.bf16.mxu0 %v4482
    %5064 = vmatpush1.bf16.msra.mxu0 %v4481
    %5065 = vmatprep.mubr.bf16.mxu0 %v3288
    %5066 = vmatmul.mubr.bf16.gmra.mrb[0].mxu0 %v3287
    %v5067 = vpop.f32.mrb[0].mxu0
    %v5068 = vadd.f32 %v3568, %v5067
    %v5069 = vpop.f32.mrb[0].mxu0
    %v5070 = vadd.f32 %v3572, %v5069
    %v5071 = vpop.f32.mrb[0].mxu0
    %v5072 = vpop.f32.mrb[0].mxu0
    %5073 = vdwg.mxu0
    %5074 = vmatprep.subr.bf16.mxu0 %v4490
    %5075 = vmatpush1.bf16.msra.mxu0 %v4489
    %5076 = vmatprep.subr.bf16.mxu0 %v4498
    %5077 = vmatpush1.bf16.msra.mxu0 %v4497
    %5078 = vmatprep.subr.bf16.mxu0 %v4506
    %5079 = vmatpush1.bf16.msra.mxu0 %v4505
    %5080 = vmatprep.subr.bf16.mxu0 %v4514
    %5081 = vmatpush1.bf16.msra.mxu0 %v4513
    %5082 = vmatprep.subr.bf16.mxu0 %v4522
    %5083 = vmatpush1.bf16.msra.mxu0 %v4521
    %5084 = vmatprep.subr.bf16.mxu0 %v4530
    %5085 = vmatpush1.bf16.msra.mxu0 %v4529
    %5086 = vmatprep.subr.bf16.mxu0 %v4538
    %5087 = vmatpush1.bf16.msra.mxu0 %v4537
    %5088 = vmatprep.subr.bf16.mxu0 %v4546
    %5089 = vmatpush1.bf16.msra.mxu0 %v4545
    %5090 = vmatprep.subr.bf16.mxu0 %v4554
    %5091 = vmatpush1.bf16.msra.mxu0 %v4553
    %5092 = vmatprep.subr.bf16.mxu0 %v4562
    %5093 = vmatpush1.bf16.msra.mxu0 %v4561
    %5094 = vmatprep.subr.bf16.mxu0 %v4570
    %5095 = vmatpush1.bf16.msra.mxu0 %v4569
    %5096 = vmatprep.subr.bf16.mxu0 %v4578
    %5097 = vmatpush1.bf16.msra.mxu0 %v4577
    %5098 = vmatprep.subr.bf16.mxu0 %v4586
    %5099 = vmatpush1.bf16.msra.mxu0 %v4585
    %5100 = vmatprep.subr.bf16.mxu0 %v4594
    %5101 = vmatpush1.bf16.msra.mxu0 %v4593
    %5102 = vmatprep.subr.bf16.mxu0 %v4602
    %5103 = vmatpush1.bf16.msra.mxu0 %v4601
    %5104 = vmatprep.subr.bf16.mxu0 %v4610
    %5105 = vmatpush1.bf16.msra.mxu0 %v4609
    %5106 = vmatprep.mubr.bf16.mxu0 %v3290
    %5107 = vmatmul.mubr.bf16.gmra.mrb[0].mxu0 %v3289
    %v5108 = vpop.f32.mrb[0].mxu0
    %v5109 = vadd.f32 %v5068, %v5108
    %v5110 = vpop.f32.mrb[0].mxu0
    %v5111 = vadd.f32 %v5070, %v5110
    %v5112 = vpop.f32.mrb[0].mxu0
    %v5113 = vpop.f32.mrb[0].mxu0
    %5114 = vdwg.mxu0
    %5115 = vmatprep.subr.bf16.mxu0 %v4364
    %5116 = vmatpush1.bf16.msra.mxu0 %v4363
    %5117 = vmatprep.subr.bf16.mxu0 %v4372
    %5118 = vmatpush1.bf16.msra.mxu0 %v4371
    %5119 = vmatprep.subr.bf16.mxu0 %v4380
    %5120 = vmatpush1.bf16.msra.mxu0 %v4379
    %5121 = vmatprep.subr.bf16.mxu0 %v4388
    %5122 = vmatpush1.bf16.msra.mxu0 %v4387
    %5123 = vmatprep.subr.bf16.mxu0 %v4396
    %5124 = vmatpush1.bf16.msra.mxu0 %v4395
    %5125 = vmatprep.subr.bf16.mxu0 %v4404
    %5126 = vmatpush1.bf16.msra.mxu0 %v4403
    %5127 = vmatprep.subr.bf16.mxu0 %v4412
    %5128 = vmatpush1.bf16.msra.mxu0 %v4411
    %5129 = vmatprep.subr.bf16.mxu0 %v4420
    %5130 = vmatpush1.bf16.msra.mxu0 %v4419
    %5131 = vmatprep.subr.bf16.mxu0 %v4428
    %5132 = vmatpush1.bf16.msra.mxu0 %v4427
    %5133 = vmatprep.subr.bf16.mxu0 %v4436
    %5134 = vmatpush1.bf16.msra.mxu0 %v4435
    %5135 = vmatprep.subr.bf16.mxu0 %v4444
    %5136 = vmatpush1.bf16.msra.mxu0 %v4443
    %5137 = vmatprep.subr.bf16.mxu0 %v4452
    %5138 = vmatpush1.bf16.msra.mxu0 %v4451
    %5139 = vmatprep.subr.bf16.mxu0 %v4460
    %5140 = vmatpush1.bf16.msra.mxu0 %v4459
    %5141 = vmatprep.subr.bf16.mxu0 %v4468
    %5142 = vmatpush1.bf16.msra.mxu0 %v4467
    %5143 = vmatprep.subr.bf16.mxu0 %v4476
    %5144 = vmatpush1.bf16.msra.mxu0 %v4475
    %5145 = vmatprep.subr.bf16.mxu0 %v4484
    %5146 = vmatpush1.bf16.msra.mxu0 %v4483
    %5147 = vmatprep.mubr.bf16.mxu0 %v3288
    %5148 = vmatmul.mubr.bf16.gmra.mrb[0].mxu0 %v3287
    %v5149 = vpop.f32.mrb[0].mxu0
    %v5150 = vadd.f32 %v3576, %v5149
    %v5151 = vpop.f32.mrb[0].mxu0
    %v5152 = vadd.f32 %v3580, %v5151
    %v5153 = vpop.f32.mrb[0].mxu0
    %v5154 = vpop.f32.mrb[0].mxu0
    %5155 = vdwg.mxu0
    %5156 = vmatprep.subr.bf16.mxu0 %v4492
    %5157 = vmatpush1.bf16.msra.mxu0 %v4491
    %5158 = vmatprep.subr.bf16.mxu0 %v4500
    %5159 = vmatpush1.bf16.msra.mxu0 %v4499
    %5160 = vmatprep.subr.bf16.mxu0 %v4508
    %5161 = vmatpush1.bf16.msra.mxu0 %v4507
    %5162 = vmatprep.subr.bf16.mxu0 %v4516
    %5163 = vmatpush1.bf16.msra.mxu0 %v4515
    %5164 = vmatprep.subr.bf16.mxu0 %v4524
    %5165 = vmatpush1.bf16.msra.mxu0 %v4523
    %5166 = vmatprep.subr.bf16.mxu0 %v4532
    %5167 = vmatpush1.bf16.msra.mxu0 %v4531
    %5168 = vmatprep.subr.bf16.mxu0 %v4540
    %5169 = vmatpush1.bf16.msra.mxu0 %v4539
    %5170 = vmatprep.subr.bf16.mxu0 %v4548
    %5171 = vmatpush1.bf16.msra.mxu0 %v4547
    %5172 = vmatprep.subr.bf16.mxu0 %v4556
    %5173 = vmatpush1.bf16.msra.mxu0 %v4555
    %5174 = vmatprep.subr.bf16.mxu0 %v4564
    %5175 = vmatpush1.bf16.msra.mxu0 %v4563
    %5176 = vmatprep.subr.bf16.mxu0 %v4572
    %5177 = vmatpush1.bf16.msra.mxu0 %v4571
    %5178 = vmatprep.subr.bf16.mxu0 %v4580
    %5179 = vmatpush1.bf16.msra.mxu0 %v4579
    %5180 = vmatprep.subr.bf16.mxu0 %v4588
    %5181 = vmatpush1.bf16.msra.mxu0 %v4587
    %5182 = vmatprep.subr.bf16.mxu0 %v4596
    %5183 = vmatpush1.bf16.msra.mxu0 %v4595
    %5184 = vmatprep.subr.bf16.mxu0 %v4604
    %5185 = vmatpush1.bf16.msra.mxu0 %v4603
    %5186 = vmatprep.subr.bf16.mxu0 %v4612
    %5187 = vmatpush1.bf16.msra.mxu0 %v4611
    %5188 = vmatprep.mubr.bf16.mxu0 %v3290
    %5189 = vmatmul.mubr.bf16.gmra.mrb[0].mxu0 %v3289
    %v5190 = vpop.f32.mrb[0].mxu0
    %v5191 = vadd.f32 %v5150, %v5190
    %v5192 = vpop.f32.mrb[0].mxu0
    %v5193 = vadd.f32 %v5152, %v5192
    %v5194 = vpop.f32.mrb[0].mxu0
    %v5195 = vpop.f32.mrb[0].mxu0
    %5196 = vdwg.mxu0
    %v5197 = vadd.f32 %v4945, %v101
    %v5198 = vadd.f32 %v4947, %v102
    %v5199 = vadd.f32 %v5027, %v103
    %v5200 = vadd.f32 %v5029, %v104
    %v5201 = vadd.f32 %v5109, %v105
    %v5202 = vadd.f32 %v5111, %v106
    %v5203 = vadd.f32 %v5191, %v107
    %v5204 = vadd.f32 %v5193, %v108
    %5205 = vst [vmem:[#allocation10] sm:$0xff] %v5197
    %5206 = vst [vmem:[#allocation10 + $0x8] sm:$0xff] %v5198
    %5207 = vst [vmem:[#allocation10 + $0x10] sm:$0xff] %v5199
    %5208 = vst [vmem:[#allocation10 + $0x18] sm:$0xff] %v5200
    %5209 = vst [vmem:[#allocation10 + $0x20] sm:$0xff] %v5201
    %5210 = vst [vmem:[#allocation10 + $0x28] sm:$0xff] %v5202
    %5211 = vst [vmem:[#allocation10 + $0x30] sm:$0xff] %v5203
    %5212 = vst [vmem:[#allocation10 + $0x38] sm:$0xff] %v5204
    // Predicated region
    $region70: #{tpu_custom_call.1} parent=1 // pred_check
      _
    $region71: #{tpu_custom_call.1} parent=1 // pred_check_branch
      %5214 = sbr.rel (0) target = $region73
    $region72: #{tpu_custom_call.1} parent=1 // pred_region
      %s5216 = ssub.s32 1024, 1024
      %5217 = vsyncadd [#allocation4], %s5216
      %s5219 = sshll.u32 [#allocation10], 4
      %s5220 = int_to_ptr.vmem [resolvable:$true] %s5219
      %5222 = dma.vmem_to_hbm [thread:$0]  %s5220, 1024, %s13, [#allocation4]
    $region73: #{tpu_custom_call.1} parent=1 // pred_fallthru
      _
    // Predicated region
    $region74: #{tpu_custom_call.1} parent=1 // pred_check
      _
    $region75: #{tpu_custom_call.1} parent=1 // pred_check_branch
      %5224 = sbr.rel (0) target = $region77
    $region76: #{tpu_custom_call.1} parent=1 // pred_region
      %5225 = dma.done [#allocation4], 1024
    $region77: #{tpu_custom_call.1} parent=1 // pred_fallthru
      _
    %5226 = vsyncpa [#allocation3], 1
    %5227 = vsyncpa [#allocation6], 1
    %5228 = vsyncpa [#allocation9], 1
    %5229 = vsyncpa [#allocation4], 1

</llo_original>
